<compile_context>
chip_gen: v6e
topology: v6e:2x2x1
jax: 0.10.0
libtpu: 0.0.40
codegen_flags: <defaults>
</compile_context>

<pallas_src>
import math
import functools

import jax
import jax.numpy as jnp
from jax import lax
from jax.experimental import pallas as pl
from jax.experimental.pallas import tpu as pltpu

BN_EPS = 1e-5


# ------------------------------- Pallas kernel -------------------------------

def _bottleneck_kernel(x_ref, w1_ref, b1_ref, w2_ref, b2_ref, w3_ref, b3_ref,
                       *rest, stride, h_in, w_in, h_out, w_out, has_downsample):
    """Fused Bottleneck for one image of the batch (grid axis 0)."""
    if has_downsample:
        wd_ref, bd_ref, o_ref, a1pad_ref = rest
    else:
        o_ref, a1pad_ref = rest

    cin_p = x_ref.shape[-1]
    planes_p = w1_ref.shape[-1]
    c4p = w3_ref.shape[-1]

    # Zero the padding halo ONCE.  The interior is fully rewritten every grid
    # step and the halo is never written again.  Safe because the grid axis is
    # "arbitrary" (sequential on one core); scratch persists across steps.
    @pl.when(pl.program_id(0) == 0)
    def _():
        a1pad_ref[...] = jnp.zeros_like(a1pad_ref)

    x = x_ref[0]                                            # (H, W, Cin_p) bf16

    # ---- conv1 (1x1) + bn1 + relu  (BN scale/shift folded into w1/b1) -------
    a1 = jnp.dot(x.reshape(h_in * w_in, cin_p), w1_ref[...],
                 preferred_element_type=jnp.float32)
    a1 = jnp.maximum(a1 + b1_ref[...], 0.0)
    a1pad_ref[1:h_in + 1, 1:w_in + 1, :] = (
        a1.reshape(h_in, w_in, planes_p).astype(a1pad_ref.dtype))

    # ---- conv2 (3x3, stride, pad=1) + bn2 + relu -----------------------------
    # 3 matmuls (one per kernel row ky); for each ky the 3 kx taps are
    # concatenated along channels -> K = 3*planes_p, filling the MXU
    # contraction depth and cutting accumulator passes from 9 to 3.
    acc = None
    for ky in range(3):
        if stride == 1:
            rows = a1pad_ref[ky:ky + h_out, :, :]           # (h_out, W+2, P)
        else:
            rows = a1pad_ref[pl.ds(ky, h_out, stride=stride), :, :]
        taps = []
        for kx in range(3):
            if stride == 1:
                taps.append(rows[:, kx:kx + w_out, :])
            else:
                taps.append(rows[:, kx:kx + (w_out - 1) * stride + 1:stride, :])
        win = jnp.concatenate(taps, axis=-1).reshape(h_out * w_out, 3 * planes_p)
        part = jnp.dot(win, w2_ref[ky], preferred_element_type=jnp.float32)
        acc = part if acc is None else acc + part
    a2 = jnp.maximum(acc + b2_ref[...], 0.0).astype(jnp.bfloat16)

    # ---- conv3 (1x1) + bn3 (relu deferred until after the residual add) -----
    y = jnp.dot(a2, w3_ref[...], preferred_element_type=jnp.float32) + b3_ref[...]

    # ---- residual ------------------------------------------------------------
    if has_downsample:
        if stride == 1:
            xs = x
        else:
            xs = x[::stride, ::stride, :]
        res = jnp.dot(xs.reshape(h_out * w_out, cin_p), wd_ref[...],
                      preferred_element_type=jnp.float32) + bd_ref[...]
    else:
        # identity residual: plain VPU add, no matmul, no extra weight in VMEM
        res = x.reshape(h_out * w_out, cin_p).astype(jnp.float32)

    out = jnp.maximum(y + res, 0.0)
    o_ref[0] = out.reshape(h_out, w_out, c4p).astype(o_ref.dtype)


# -------------------------- parameter preparation ----------------------------

def _round_up(x, m):
    return (x + m - 1) // m * m


def _fold_bn(gamma, beta, mean, var, eps=BN_EPS):
    scale = gamma / jnp.sqrt(var + eps)
    bias = beta - mean * scale
    return scale, bias


def prepare_bottleneck_params(raw, *, stride):
    """Fold eval-mode BN into matmul weights; pad channel dims to 128 lanes."""
    w1_t, w2_t, w3_t = raw['conv1_w'], raw['conv2_w'], raw['conv3_w']
    planes, cin = w1_t.shape[0], w1_t.shape[1]
    c4 = w3_t.shape[0]
    planes_p = _round_up(planes, 128)
    cin_p = _round_up(cin, 128)
    c4p = _round_up(c4, 128)
    has_downsample = 'down_w' in raw

    s1, b1 = _fold_bn(*raw['bn1'])
    w1 = jnp.transpose(w1_t[:, :, 0, 0], (1, 0)) * s1[None, :]           # (Cin, P)
    w1 = jnp.pad(w1, ((0, cin_p - cin), (0, planes_p - planes)))
    b1 = jnp.pad(b1, ((0, planes_p - planes),))

    s2, b2 = _fold_bn(*raw['bn2'])
    w2 = jnp.transpose(w2_t, (2, 3, 1, 0)) * s2[None, None, None, :]     # (ky,kx,ci,co)
    w2 = jnp.pad(w2, ((0, 0), (0, 0),
                      (0, planes_p - planes), (0, planes_p - planes)))
    w2 = w2.reshape(3, 3 * planes_p, planes_p)                           # (ky, kx*P+ci, co)
    b2 = jnp.pad(b2, ((0, planes_p - planes),))

    s3, b3 = _fold_bn(*raw['bn3'])
    w3 = jnp.transpose(w3_t[:, :, 0, 0], (1, 0)) * s3[None, :]           # (P, 4P)
    w3 = jnp.pad(w3, ((0, planes_p - planes), (0, c4p - c4)))
    b3 = jnp.pad(b3, ((0, c4p - c4),))

    fused = {
        'w1': w1.astype(jnp.bfloat16), 'b1': b1.reshape(1, planes_p).astype(jnp.float32),
        'w2': w2.astype(jnp.bfloat16), 'b2': b2.reshape(1, planes_p).astype(jnp.float32),
        'w3': w3.astype(jnp.bfloat16), 'b3': b3.reshape(1, c4p).astype(jnp.float32),
    }
    if has_downsample:
        sd, bd = _fold_bn(*raw['down_bn'])
        wd = jnp.transpose(raw['down_w'][:, :, 0, 0], (1, 0)) * sd[None, :]
        wd = jnp.pad(wd, ((0, cin_p - cin), (0, c4p - c4)))
        bd = jnp.pad(bd, ((0, c4p - c4),))
        fused['wd'] = wd.astype(jnp.bfloat16)
        fused['bd'] = bd.reshape(1, c4p).astype(jnp.float32)
    else:
        assert cin == c4 and stride == 1, \
            "identity residual requires cin == 4*planes and stride == 1"

    fused['meta'] = dict(cin=cin, cin_p=cin_p, planes=planes, planes_p=planes_p,
                         c4=c4, c4p=c4p, stride=stride, has_downsample=has_downsample)
    return fused


# ------------------------------- forward wrapper ------------------------------

def bottleneck_forward(x_nhwc, fused):
    """NHWC in -> NHWC out (bf16).  No layout transposes around the kernel."""
    meta = fused['meta']
    stride = meta['stride']
    cin, cin_p = meta['cin'], meta['cin_p']
    planes_p, c4, c4p = meta['planes_p'], meta['c4'], meta['c4p']
    has_downsample = meta['has_downsample']

    n, h, w, cin_x = x_nhwc.shape
    assert cin_x == cin
    h_out = (h + 2 - 3) // stride + 1
    w_out = (w + 2 - 3) // stride + 1

    x = x_nhwc.astype(jnp.bfloat16)
    if cin_p != cin:                     # lane-pad input channels (no-op when cin%128==0)
        x = jnp.pad(x, ((0, 0), (0, 0), (0, 0), (0, cin_p - cin)))

    kernel = functools.partial(_bottleneck_kernel, stride=stride, h_in=h, w_in=w,
                               h_out=h_out, w_out=w_out, has_downsample=has_downsample)

    in_specs = [
        pl.BlockSpec((1, h, w, cin_p), lambda i: (i, 0, 0, 0)),          # x (per image)
        pl.BlockSpec((cin_p, planes_p), lambda i: (0, 0)),               # w1 (resident)
        pl.BlockSpec((1, planes_p), lambda i: (0, 0)),                   # b1
        pl.BlockSpec((3, 3 * planes_p, planes_p), lambda i: (0, 0, 0)),  # w2 (per-row, K=3P)
        pl.BlockSpec((1, planes_p), lambda i: (0, 0)),                   # b2
        pl.BlockSpec((planes_p, c4p), lambda i: (0, 0)),                 # w3
        pl.BlockSpec((1, c4p), lambda i: (0, 0)),                        # b3
    ]
    args = [x, fused['w1'], fused['b1'], fused['w2'], fused['b2'],
            fused['w3'], fused['b3']]
    if has_downsample:
        in_specs += [pl.BlockSpec((cin_p, c4p), lambda i: (0, 0)),       # wd
                     pl.BlockSpec((1, c4p), lambda i: (0, 0))]           # bd
        args += [fused['wd'], fused['bd']]

    # VMEM budget from actual footprints; cap below v7x's 64 MiB physical.
    blk_bytes = 2 * h * w * cin_p * 2 + 2 * h_out * w_out * c4p * 2
    wgt_bytes = 2 * sum(int(v.size) * v.dtype.itemsize
                        for k, v in fused.items() if k != 'meta')
    scratch_bytes = (h + 2) * (w + 2) * planes_p * 2
    vmem_limit = int(min(max(2 * (blk_bytes + wgt_bytes + scratch_bytes), 16 << 20),
                         48 << 20))

    out = pl.pallas_call(
        kernel,
        out_shape=jax.ShapeDtypeStruct((n, h_out, w_out, c4p), jnp.bfloat16),
        grid_spec=pltpu.PrefetchScalarGridSpec(
            num_scalar_prefetch=0,
            grid=(n,),
            in_specs=in_specs,
            out_specs=pl.BlockSpec((1, h_out, w_out, c4p), lambda i: (i, 0, 0, 0)),
            scratch_shapes=[pltpu.VMEM((h + 2, w + 2, planes_p), jnp.bfloat16)],
        ),
        compiler_params=pltpu.CompilerParams(
            # "arbitrary": sequential grid -> the zero-once halo scratch is safe.
            dimension_semantics=("arbitrary",),
            vmem_limit_bytes=vmem_limit),
    )(*args)

    return out[..., :c4]          # no-op slice when c4 is a multiple of 128


# ------------------------------- pure-JAX reference ---------------------------

def bottleneck_reference(x_nhwc, fused):
    """Same math in plain JAX (f32), mirroring the kernel's bf16 roundings."""
    meta = fused['meta']
    stride = meta['stride']
    cin, cin_p = meta['cin'], meta['cin_p']
    planes_p, c4 = meta['planes_p'], meta['c4']
    hp = lax.Precision.HIGHEST
    f32 = lambda a: a.astype(jnp.float32)

    x = x_nhwc.astype(jnp.bfloat16)
    if cin_p != cin:
        x = jnp.pad(x, ((0, 0), (0, 0), (0, 0), (0, cin_p - cin)))
    x = f32(x)
    n, h, w, _ = x.shape
    h_out = (h - 1) // stride + 1
    w_out = (w - 1) // stride + 1

    a1 = jnp.maximum(jnp.einsum('nhwc,cp->nhwp', x, f32(fused['w1']), precision=hp)
                     + fused['b1'][0], 0.0)
    a1 = f32(a1.astype(jnp.bfloat16))
    a1p = jnp.pad(a1, ((0, 0), (1, 1), (1, 1), (0, 0)))

    w2 = f32(fused['w2']).reshape(3, 3, planes_p, planes_p)
    acc = jnp.zeros((n, h_out, w_out, planes_p), jnp.float32)
    for ky in range(3):
        for kx in range(3):
            win = a1p[:, ky:ky + (h_out - 1) * stride + 1:stride,
                         kx:kx + (w_out - 1) * stride + 1:stride, :]
            acc = acc + jnp.einsum('nhwc,cp->nhwp', win, w2[ky, kx], precision=hp)
    a2 = f32(jnp.maximum(acc + fused['b2'][0], 0.0).astype(jnp.bfloat16))

    y = jnp.einsum('nhwp,pc->nhwc', a2, f32(fused['w3']), precision=hp) + fused['b3'][0]
    if meta['has_downsample']:
        xs = x[:, ::stride, ::stride, :]
        res = jnp.einsum('nhwc,cd->nhwd', xs, f32(fused['wd']), precision=hp) + fused['bd'][0]
    else:
        res = x
    out = jnp.maximum(y + res, 0.0).astype(jnp.bfloat16)
    return f32(out)[..., :c4]


# ------------------------------------ main -------------------------------------

if __name__ == "__main__":
    key = jax.random.PRNGKey(0)

    def conv_w(k, cout, cin, ks):
        std = math.sqrt(2.0 / (ks * ks * cout))
        return std * jax.random.normal(k, (cout, cin, ks, ks), jnp.float32)

    def bn_stats(k, c):
        kg, kb, km, kv = jax.random.split(k, 4)
        gamma = jax.random.uniform(kg, (c,), jnp.float32, 0.5, 1.5)
        beta = 0.1 * jax.random.normal(kb, (c,), jnp.float32)
        mean = 0.1 * jax.random.normal(km, (c,), jnp.float32)
        var = jax.random.uniform(kv, (c,), jnp.float32, 0.5, 1.5)
        return gamma, beta, mean, var

    def run_case(k, *, batch, inplanes, planes, spatial, stride, with_downsample):
        keys = jax.random.split(k, 10)
        c4 = planes * 4
        raw = {
            'conv1_w': conv_w(keys[0], planes, inplanes, 1), 'bn1': bn_stats(keys[1], planes),
            'conv2_w': conv_w(keys[2], planes, planes, 3),   'bn2': bn_stats(keys[3], planes),
            'conv3_w': conv_w(keys[4], c4, planes, 1),       'bn3': bn_stats(keys[5], c4),
        }
        if with_downsample:
            raw['down_w'] = conv_w(keys[6], c4, inplanes, 1)
            raw['down_bn'] = bn_stats(keys[7], c4)
        fused = prepare_bottleneck_params(raw, stride=stride)

        x = jax.random.normal(keys[8], (batch, spatial, spatial, inplanes), jnp.float32)
        out = bottleneck_forward(x, fused)
        jax.block_until_ready(out)
        ref = bottleneck_reference(x, fused)

        h_out = (spatial - 1) // stride + 1
        err = float(jnp.max(jnp.abs(out.astype(jnp.float32) - ref)) /
                    (jnp.max(jnp.abs(ref)) + 1e-6))
        ok = (out.shape == (batch, h_out, h_out, c4)) and (err < 1e-2)
        return ok, err, out.shape

    k1, k2 = jax.random.split(key)
    # Bottleneck(16, 8, stride=1, downsample = 1x1 conv 16->32 + BN)
    ok1, err1, shape1 = run_case(k1, batch=2, inplanes=16, planes=8, spatial=16,
                                 stride=1, with_downsample=True)
    # Bottleneck(32, 8, stride=1, downsample=None): identity-residual fast path
    ok2, err2, shape2 = run_case(k2, batch=2, inplanes=32, planes=8, spatial=16,
                                 stride=1, with_downsample=False)

    if not (ok1 and ok2):
        raise SystemExit(f"mismatch: case1 err={err1:.3e} shape={shape1}; "
                         f"case2 err={err2:.3e} shape={shape2}")
    print("KERNEL_OK")
</pallas_src>

<mosaic_0001>
module attributes {stable_mosaic.version = 11 : i64} {
  func.func @_bottleneck_kernel(%arg0: i32, %arg1: memref<1x16x16x128xbf16, #tpu.memory_space<vmem>>, %arg2: memref<128x128xbf16, #tpu.memory_space<vmem>>, %arg3: memref<1x128xf32, #tpu.memory_space<vmem>>, %arg4: memref<3x384x128xbf16, #tpu.memory_space<vmem>>, %arg5: memref<1x128xf32, #tpu.memory_space<vmem>>, %arg6: memref<128x128xbf16, #tpu.memory_space<vmem>>, %arg7: memref<1x128xf32, #tpu.memory_space<vmem>>, %arg8: memref<128x128xbf16, #tpu.memory_space<vmem>>, %arg9: memref<1x128xf32, #tpu.memory_space<vmem>>, %arg10: memref<1x16x16x128xbf16, #tpu.memory_space<vmem>>, %arg11: memref<18x18x128xbf16, #tpu.memory_space<vmem>>) attributes {dimension_semantics = [#tpu.dimension_semantics<arbitrary>], iteration_bounds = array<i64: 2>, scalar_prefetch = 0 : i64, scratch_operands = 1 : i64, tpu.core_type = #tpu.core_type<tc>, window_params = [{transform_indices = @transform_0, window_bounds = array<i64: 1, 16, 16, 128>}, {pipeline_mode = #tpu.pipeline_mode<synchronous>, transform_indices = @transform_1, window_bounds = array<i64: 128, 128>}, {pipeline_mode = #tpu.pipeline_mode<synchronous>, transform_indices = @transform_2, window_bounds = array<i64: 1, 128>}, {pipeline_mode = #tpu.pipeline_mode<synchronous>, transform_indices = @transform_3, window_bounds = array<i64: 3, 384, 128>}, {pipeline_mode = #tpu.pipeline_mode<synchronous>, transform_indices = @transform_4, window_bounds = array<i64: 1, 128>}, {pipeline_mode = #tpu.pipeline_mode<synchronous>, transform_indices = @transform_5, window_bounds = array<i64: 128, 128>}, {pipeline_mode = #tpu.pipeline_mode<synchronous>, transform_indices = @transform_6, window_bounds = array<i64: 1, 128>}, {pipeline_mode = #tpu.pipeline_mode<synchronous>, transform_indices = @transform_7, window_bounds = array<i64: 128, 128>}, {pipeline_mode = #tpu.pipeline_mode<synchronous>, transform_indices = @transform_8, window_bounds = array<i64: 1, 128>}, {transform_indices = @transform_9, window_bounds = array<i64: 1, 16, 16, 128>}]} {
    %c0_i32 = arith.constant 0 : i32
    %0 = arith.cmpi eq, %arg0, %c0_i32 : i32
    %1 = arith.extui %0 : i1 to i32
    %c0_i32_0 = arith.constant 0 : i32
    %2 = arith.cmpi ne, %1, %c0_i32_0 : i32
    scf.if %2 {
      %cst_49 = arith.constant 0.000000e+00 : bf16
      %70 = vector.broadcast %cst_49 : bf16 to vector<18x18x128xbf16>
      %c0_50 = arith.constant 0 : index
      %c0_51 = arith.constant 0 : index
      %c0_52 = arith.constant 0 : index
      %71 = vector.load %arg11[%c0_50, %c0_51, %c0_52] : memref<18x18x128xbf16, #tpu.memory_space<vmem>>, vector<18x18x128xbf16>
      tpu.vector_store %arg11[%c0_50, %c0_51, %c0_52], %70 {strides = array<i32>} : memref<18x18x128xbf16, #tpu.memory_space<vmem>>, vector<18x18x128xbf16>,
    } else {
    }
    %c0 = arith.constant 0 : index
    %c0_1 = arith.constant 0 : index
    %c0_2 = arith.constant 0 : index
    %c0_3 = arith.constant 0 : index
    %3 = vector.load %arg1[%c0, %c0_1, %c0_2, %c0_3] : memref<1x16x16x128xbf16, #tpu.memory_space<vmem>>, vector<1x16x16x128xbf16>
    %4 = vector.shape_cast %3 : vector<1x16x16x128xbf16> to vector<16x16x128xbf16>
    %5 = vector.shape_cast %4 : vector<16x16x128xbf16> to vector<256x128xbf16>
    %c0_4 = arith.constant 0 : index
    %c0_5 = arith.constant 0 : index
    %6 = vector.load %arg2[%c0_4, %c0_5] : memref<128x128xbf16, #tpu.memory_space<vmem>>, vector<128x128xbf16>
    %cst = arith.constant dense<0.000000e+00> : vector<256x128xf32>
    %7 = tpu.matmul %5, %6, %cst {dimension_numbers = #tpu.dot_dimension_numbers<[1], [0], [0], [1], [0, 0, 1, 1], [], []>} : vector<256x128xbf16>, vector<128x128xbf16>, vector<256x128xf32> -> vector<256x128xf32>
    %c0_6 = arith.constant 0 : index
    %c0_7 = arith.constant 0 : index
    %8 = vector.load %arg3[%c0_6, %c0_7] : memref<1x128xf32, #tpu.memory_space<vmem>>, vector<1x128xf32>
    %9 = vector.broadcast %8 : vector<1x128xf32> to vector<256x128xf32>
    %10 = arith.addf %7, %9 : vector<256x128xf32>
    %cst_8 = arith.constant 0.000000e+00 : f32
    %11 = vector.broadcast %cst_8 : f32 to vector<256x128xf32>
    %12 = arith.maximumf %10, %11 : vector<256x128xf32>
    %13 = vector.shape_cast %12 : vector<256x128xf32> to vector<16x16x128xf32>
    %14 = arith.truncf %13 : vector<16x16x128xf32> to vector<16x16x128xbf16>
    %c1 = arith.constant 1 : index
    %c1_9 = arith.constant 1 : index
    %c0_10 = arith.constant 0 : index
    %15 = vector.load %arg11[%c1, %c1_9, %c0_10] : memref<18x18x128xbf16, #tpu.memory_space<vmem>>, vector<16x16x128xbf16>
    tpu.vector_store %arg11[%c1, %c1_9, %c0_10], %14 {strides = array<i32>} : memref<18x18x128xbf16, #tpu.memory_space<vmem>>, vector<16x16x128xbf16>,
    %c0_11 = arith.constant 0 : index
    %c0_12 = arith.constant 0 : index
    %c0_13 = arith.constant 0 : index
    %16 = vector.load %arg11[%c0_11, %c0_12, %c0_13] : memref<18x18x128xbf16, #tpu.memory_space<vmem>>, vector<16x18x128xbf16>
    %17 = vector.extract_strided_slice %16 {offsets = [0, 0, 0], sizes = [16, 16, 128], strides = [1, 1, 1]} : vector<16x18x128xbf16> to vector<16x16x128xbf16>
    %18 = vector.extract_strided_slice %16 {offsets = [0, 1, 0], sizes = [16, 16, 128], strides = [1, 1, 1]} : vector<16x18x128xbf16> to vector<16x16x128xbf16>
    %19 = vector.extract_strided_slice %16 {offsets = [0, 2, 0], sizes = [16, 16, 128], strides = [1, 1, 1]} : vector<16x18x128xbf16> to vector<16x16x128xbf16>
    %20 = tpu.concatenate %17, %18, %19 in 2 : vector<16x16x128xbf16>, vector<16x16x128xbf16>, vector<16x16x128xbf16> -> vector<16x16x384xbf16>
    %21 = vector.shape_cast %20 : vector<16x16x384xbf16> to vector<256x384xbf16>
    %c0_14 = arith.constant 0 : index
    %c0_15 = arith.constant 0 : index
    %c0_16 = arith.constant 0 : index
    %22 = vector.load %arg4[%c0_14, %c0_15, %c0_16] : memref<3x384x128xbf16, #tpu.memory_space<vmem>>, vector<1x384x128xbf16>
    %23 = vector.shape_cast %22 : vector<1x384x128xbf16> to vector<384x128xbf16>
    %cst_17 = arith.constant dense<0.000000e+00> : vector<256x128xf32>
    %24 = tpu.matmul %21, %23, %cst_17 {dimension_numbers = #tpu.dot_dimension_numbers<[1], [0], [0], [1], [0, 0, 1, 1], [], []>} : vector<256x384xbf16>, vector<384x128xbf16>, vector<256x128xf32> -> vector<256x128xf32>
    %c1_18 = arith.constant 1 : index
    %c0_19 = arith.constant 0 : index
    %c0_20 = arith.constant 0 : index
    %25 = vector.load %arg11[%c1_18, %c0_19, %c0_20] : memref<18x18x128xbf16, #tpu.memory_space<vmem>>, vector<16x18x128xbf16>
    %26 = vector.extract_strided_slice %25 {offsets = [0, 0, 0], sizes = [16, 16, 128], strides = [1, 1, 1]} : vector<16x18x128xbf16> to vector<16x16x128xbf16>
    %27 = vector.extract_strided_slice %25 {offsets = [0, 1, 0], sizes = [16, 16, 128], strides = [1, 1, 1]} : vector<16x18x128xbf16> to vector<16x16x128xbf16>
    %28 = vector.extract_strided_slice %25 {offsets = [0, 2, 0], sizes = [16, 16, 128], strides = [1, 1, 1]} : vector<16x18x128xbf16> to vector<16x16x128xbf16>
    %29 = tpu.concatenate %26, %27, %28 in 2 : vector<16x16x128xbf16>, vector<16x16x128xbf16>, vector<16x16x128xbf16> -> vector<16x16x384xbf16>
    %30 = vector.shape_cast %29 : vector<16x16x384xbf16> to vector<256x384xbf16>
    %c1_21 = arith.constant 1 : index
    %c0_22 = arith.constant 0 : index
    %c0_23 = arith.constant 0 : index
    %31 = vector.load %arg4[%c1_21, %c0_22, %c0_23] : memref<3x384x128xbf16, #tpu.memory_space<vmem>>, vector<1x384x128xbf16>
    %32 = vector.shape_cast %31 : vector<1x384x128xbf16> to vector<384x128xbf16>
    %cst_24 = arith.constant dense<0.000000e+00> : vector<256x128xf32>
    %33 = tpu.matmul %30, %32, %cst_24 {dimension_numbers = #tpu.dot_dimension_numbers<[1], [0], [0], [1], [0, 0, 1, 1], [], []>} : vector<256x384xbf16>, vector<384x128xbf16>, vector<256x128xf32> -> vector<256x128xf32>
    %34 = arith.addf %24, %33 : vector<256x128xf32>
    %c2 = arith.constant 2 : index
    %c0_25 = arith.constant 0 : index
    %c0_26 = arith.constant 0 : index
    %35 = vector.load %arg11[%c2, %c0_25, %c0_26] : memref<18x18x128xbf16, #tpu.memory_space<vmem>>, vector<16x18x128xbf16>
    %36 = vector.extract_strided_slice %35 {offsets = [0, 0, 0], sizes = [16, 16, 128], strides = [1, 1, 1]} : vector<16x18x128xbf16> to vector<16x16x128xbf16>
    %37 = vector.extract_strided_slice %35 {offsets = [0, 1, 0], sizes = [16, 16, 128], strides = [1, 1, 1]} : vector<16x18x128xbf16> to vector<16x16x128xbf16>
    %38 = vector.extract_strided_slice %35 {offsets = [0, 2, 0], sizes = [16, 16, 128], strides = [1, 1, 1]} : vector<16x18x128xbf16> to vector<16x16x128xbf16>
    %39 = tpu.concatenate %36, %37, %38 in 2 : vector<16x16x128xbf16>, vector<16x16x128xbf16>, vector<16x16x128xbf16> -> vector<16x16x384xbf16>
    %40 = vector.shape_cast %39 : vector<16x16x384xbf16> to vector<256x384xbf16>
    %c2_27 = arith.constant 2 : index
    %c0_28 = arith.constant 0 : index
    %c0_29 = arith.constant 0 : index
    %41 = vector.load %arg4[%c2_27, %c0_28, %c0_29] : memref<3x384x128xbf16, #tpu.memory_space<vmem>>, vector<1x384x128xbf16>
    %42 = vector.shape_cast %41 : vector<1x384x128xbf16> to vector<384x128xbf16>
    %cst_30 = arith.constant dense<0.000000e+00> : vector<256x128xf32>
    %43 = tpu.matmul %40, %42, %cst_30 {dimension_numbers = #tpu.dot_dimension_numbers<[1], [0], [0], [1], [0, 0, 1, 1], [], []>} : vector<256x384xbf16>, vector<384x128xbf16>, vector<256x128xf32> -> vector<256x128xf32>
    %44 = arith.addf %34, %43 : vector<256x128xf32>
    %c0_31 = arith.constant 0 : index
    %c0_32 = arith.constant 0 : index
    %45 = vector.load %arg5[%c0_31, %c0_32] : memref<1x128xf32, #tpu.memory_space<vmem>>, vector<1x128xf32>
    %46 = vector.broadcast %45 : vector<1x128xf32> to vector<256x128xf32>
    %47 = arith.addf %44, %46 : vector<256x128xf32>
    %cst_33 = arith.constant 0.000000e+00 : f32
    %48 = vector.broadcast %cst_33 : f32 to vector<256x128xf32>
    %49 = arith.maximumf %47, %48 : vector<256x128xf32>
    %50 = arith.truncf %49 : vector<256x128xf32> to vector<256x128xbf16>
    %c0_34 = arith.constant 0 : index
    %c0_35 = arith.constant 0 : index
    %51 = vector.load %arg6[%c0_34, %c0_35] : memref<128x128xbf16, #tpu.memory_space<vmem>>, vector<128x128xbf16>
    %cst_36 = arith.constant dense<0.000000e+00> : vector<256x128xf32>
    %52 = tpu.matmul %50, %51, %cst_36 {dimension_numbers = #tpu.dot_dimension_numbers<[1], [0], [0], [1], [0, 0, 1, 1], [], []>} : vector<256x128xbf16>, vector<128x128xbf16>, vector<256x128xf32> -> vector<256x128xf32>
    %c0_37 = arith.constant 0 : index
    %c0_38 = arith.constant 0 : index
    %53 = vector.load %arg7[%c0_37, %c0_38] : memref<1x128xf32, #tpu.memory_space<vmem>>, vector<1x128xf32>
    %54 = vector.broadcast %53 : vector<1x128xf32> to vector<256x128xf32>
    %55 = arith.addf %52, %54 : vector<256x128xf32>
    %56 = vector.shape_cast %4 : vector<16x16x128xbf16> to vector<256x128xbf16>
    %c0_39 = arith.constant 0 : index
    %c0_40 = arith.constant 0 : index
    %57 = vector.load %arg8[%c0_39, %c0_40] : memref<128x128xbf16, #tpu.memory_space<vmem>>, vector<128x128xbf16>
    %cst_41 = arith.constant dense<0.000000e+00> : vector<256x128xf32>
    %58 = tpu.matmul %56, %57, %cst_41 {dimension_numbers = #tpu.dot_dimension_numbers<[1], [0], [0], [1], [0, 0, 1, 1], [], []>} : vector<256x128xbf16>, vector<128x128xbf16>, vector<256x128xf32> -> vector<256x128xf32>
    %c0_42 = arith.constant 0 : index
    %c0_43 = arith.constant 0 : index
    %59 = vector.load %arg9[%c0_42, %c0_43] : memref<1x128xf32, #tpu.memory_space<vmem>>, vector<1x128xf32>
    %60 = vector.broadcast %59 : vector<1x128xf32> to vector<256x128xf32>
    %61 = arith.addf %58, %60 : vector<256x128xf32>
    %62 = arith.addf %55, %61 : vector<256x128xf32>
    %cst_44 = arith.constant 0.000000e+00 : f32
    %63 = vector.broadcast %cst_44 : f32 to vector<256x128xf32>
    %64 = arith.maximumf %62, %63 : vector<256x128xf32>
    %65 = vector.shape_cast %64 : vector<256x128xf32> to vector<16x16x128xf32>
    %66 = arith.truncf %65 : vector<16x16x128xf32> to vector<16x16x128xbf16>
    %c0_45 = arith.constant 0 : index
    %c0_46 = arith.constant 0 : index
    %c0_47 = arith.constant 0 : index
    %c0_48 = arith.constant 0 : index
    %67 = vector.load %arg10[%c0_45, %c0_46, %c0_47, %c0_48] : memref<1x16x16x128xbf16, #tpu.memory_space<vmem>>, vector<1x16x16x128xbf16>
    %68 = vector.shape_cast %67 : vector<1x16x16x128xbf16> to vector<16x16x128xbf16>
    %69 = vector.shape_cast %66 : vector<16x16x128xbf16> to vector<1x16x16x128xbf16>
    tpu.vector_store %arg10[%c0_45, %c0_46, %c0_47, %c0_48], %69 {strides = array<i32>} : memref<1x16x16x128xbf16, #tpu.memory_space<vmem>>, vector<1x16x16x128xbf16>,
    return
  }
  func.func @transform_0(%arg0: i32) -> (i32, i32, i32, i32) {
    %c0_i32 = arith.constant 0 : i32
    %c0_i32_0 = arith.constant 0 : i32
    %c0_i32_1 = arith.constant 0 : i32
    %c0_i32_2 = arith.constant 0 : i32
    return %arg0, %c0_i32, %c0_i32_0, %c0_i32_1 : i32, i32, i32, i32
  }
  func.func @transform_1(%arg0: i32) -> (i32, i32) {
    %c0_i32 = arith.constant 0 : i32
    %c0_i32_0 = arith.constant 0 : i32
    %c0_i32_1 = arith.constant 0 : i32
    return %c0_i32, %c0_i32_0 : i32, i32
  }
  func.func @transform_2(%arg0: i32) -> (i32, i32) {
    %c0_i32 = arith.constant 0 : i32
    %c0_i32_0 = arith.constant 0 : i32
    %c0_i32_1 = arith.constant 0 : i32
    return %c0_i32, %c0_i32_0 : i32, i32
  }
  func.func @transform_3(%arg0: i32) -> (i32, i32, i32) {
    %c0_i32 = arith.constant 0 : i32
    %c0_i32_0 = arith.constant 0 : i32
    %c0_i32_1 = arith.constant 0 : i32
    %c0_i32_2 = arith.constant 0 : i32
    return %c0_i32, %c0_i32_0, %c0_i32_1 : i32, i32, i32
  }
  func.func @transform_4(%arg0: i32) -> (i32, i32) {
    %c0_i32 = arith.constant 0 : i32
    %c0_i32_0 = arith.constant 0 : i32
    %c0_i32_1 = arith.constant 0 : i32
    return %c0_i32, %c0_i32_0 : i32, i32
  }
  func.func @transform_5(%arg0: i32) -> (i32, i32) {
    %c0_i32 = arith.constant 0 : i32
    %c0_i32_0 = arith.constant 0 : i32
    %c0_i32_1 = arith.constant 0 : i32
    return %c0_i32, %c0_i32_0 : i32, i32
  }
  func.func @transform_6(%arg0: i32) -> (i32, i32) {
    %c0_i32 = arith.constant 0 : i32
    %c0_i32_0 = arith.constant 0 : i32
    %c0_i32_1 = arith.constant 0 : i32
    return %c0_i32, %c0_i32_0 : i32, i32
  }
  func.func @transform_7(%arg0: i32) -> (i32, i32) {
    %c0_i32 = arith.constant 0 : i32
    %c0_i32_0 = arith.constant 0 : i32
    %c0_i32_1 = arith.constant 0 : i32
    return %c0_i32, %c0_i32_0 : i32, i32
  }
  func.func @transform_8(%arg0: i32) -> (i32, i32) {
    %c0_i32 = arith.constant 0 : i32
    %c0_i32_0 = arith.constant 0 : i32
    %c0_i32_1 = arith.constant 0 : i32
    return %c0_i32, %c0_i32_0 : i32, i32
  }
  func.func @transform_9(%arg0: i32) -> (i32, i32, i32, i32) {
    %c0_i32 = arith.constant 0 : i32
    %c0_i32_0 = arith.constant 0 : i32
    %c0_i32_1 = arith.constant 0 : i32
    %c0_i32_2 = arith.constant 0 : i32
    return %arg0, %c0_i32, %c0_i32_0, %c0_i32_1 : i32, i32, i32, i32
  }
}

</mosaic_0001>

<llo_original>
// kernel: tpu_custom_call.1
$region0: #{tpu_custom_call.1}
  #allocation0 [shape = 'u32[]', space=smem, size = 0x4, offset = 0x4, fixed_abs, tag = 'smem constant byte address 0x4 - core index']
  #allocation1 [shape = 'u32[144,128]{1,0:T(1,128)}', space=vmem, size = 0x12000, scoped, tag = 'internal scratch']
  #allocation2 [shape = 'bf16[18,18,128]{2,1,0:T(8,128)(2,1)}', space=vmem, size = 0x1b000, scoped, tag = 'scratch operand']
  %s0 = inlined_call_operand.hbm [shape: bf16[2,16,16,128], index: 0, kind: input, shape index: {}]
  %s1 = inlined_call_operand.hbm [shape: bf16[128,128], index: 1, kind: input, shape index: {}]
  %s2 = inlined_call_operand.vmem [shape: f32[1,128], index: 2, kind: input, shape index: {}]
  %s3 = inlined_call_operand.hbm [shape: bf16[3,384,128], index: 3, kind: input, shape index: {}]
  %s4 = inlined_call_operand.vmem [shape: f32[1,128], index: 4, kind: input, shape index: {}]
  %s5 = inlined_call_operand.hbm [shape: bf16[128,128], index: 5, kind: input, shape index: {}]
  %s6 = inlined_call_operand.vmem [shape: f32[1,128], index: 6, kind: input, shape index: {}]
  %s7 = inlined_call_operand.hbm [shape: bf16[128,128], index: 7, kind: input, shape index: {}]
  %s8 = inlined_call_operand.vmem [shape: f32[1,128], index: 8, kind: input, shape index: {}]
  %s9 = inlined_call_operand.hbm [shape: bf16[2,16,16,128], index: 9, kind: output, shape index: {}]
  %s10 = sld [smem:[#allocation0]]
  $region93: #{tpu_custom_call.1} parent=0
    _
  %s12 = ssub.s32 1, %s10
  %s13 = scalar_select 0, %s12, %s10
  $region1: #{tpu_custom_call.1} parent=0
    #allocation3 [shape = 'u8[131072]{0}', space=vmem, size = 0x20000, scoped, tag = 'input window, operand 0']
    #allocation4 [shape = 's32[2]{0}', space=sflag, size = 0x8, scoped, tag = 'scoped memory for tpu_custom_call.1']
    #allocation5 [shape = 's32[2]{0}', space=sflag, size = 0x8, scoped, tag = 'scoped memory for tpu_custom_call.1']
    #allocation6 [shape = 'u8[32768]{0}', space=vmem, size = 0x8000, scoped, tag = 'input window, operand 1, single buffered']
    #allocation7 [shape = 's32[1]{0}', space=sflag, size = 0x4, scoped, tag = 'scoped memory for tpu_custom_call.1']
    #allocation8 [shape = 'u8[294912]{0}', space=vmem, size = 0x48000, scoped, tag = 'input window, operand 3, single buffered']
    #allocation9 [shape = 'u8[32768]{0}', space=vmem, size = 0x8000, scoped, tag = 'input window, operand 5, single buffered']
    #allocation10 [shape = 's32[1]{0}', space=sflag, size = 0x4, scoped, tag = 'scoped memory for tpu_custom_call.1']
    #allocation11 [shape = 'u8[32768]{0}', space=vmem, size = 0x8000, scoped, tag = 'input window, operand 7, single buffered']
    #allocation12 [shape = 'u8[131072]{0}', space=vmem, size = 0x20000, scoped, tag = 'output window, operand 0']
    %14 = vsyncpa [#allocation4], 0
    %s15 = scalar_lea.sflag [#allocation4], 1
    %16 = vsyncpa %s15, 0
    %17 = vsyncpa [#allocation7], 0
    %18 = vsyncpa [#allocation10], 0
    %19 = vsyncpa [#allocation5], 0
    %s20 = scalar_lea.sflag [#allocation5], 1
    %21 = vsyncpa %s20, 0
    loop: start=0, step=1, limit=4
    $region2: #{tpu_custom_call.1} parent=1 // loop_pre_header
      _
    $region3: #{tpu_custom_call.1} parent=1 // loop_header
      %s23 = sphi 0, %s27
      %p24 = scmp.ge.s32.totalorder %s23, 4
      %s33 = sphi 0, %s35
      %s36 = sphi 0, %s33
      %s37 = sphi 0, %s36
      %s53 = sphi 0, %s37
      %s57 = sphi 0, %s57
      %s59 = sphi 0, %s57
      %s60 = sphi 0, %s59
      %s74 = sphi 0, %s60
      %s78 = sphi 0, %s78
      %s80 = sphi 0, %s78
      %s81 = sphi 0, %s80
      %s95 = sphi 0, %s81
      %s99 = sphi 0, %s99
      %s101 = sphi 0, %s99
      %s102 = sphi 0, %s101
      %s116 = sphi 0, %s102
      %s120 = sphi 0, %s120
      %s122 = sphi 0, %s120
      %s123 = sphi 0, %s122
      %s137 = sphi 0, %s123
      %s141 = sphi 0, %s141
      %s143 = sphi 0, %s141
      %s144 = sphi 0, %s143
      %s158 = sphi 0, %s144
      %s162 = sphi 0, %s162
      %s164 = sphi 0, %s162
      %s165 = sphi 0, %s164
      %s179 = sphi 0, %s165
      %s183 = sphi 0, %s183
      %s185 = sphi 0, %s183
      %s186 = sphi 0, %s185
      %s200 = sphi 0, %s186
      %s204 = sphi 0, %s204
      %s206 = sphi 0, %s204
      %s207 = sphi 0, %s206
      %s221 = sphi 0, %s207
      %s227 = sphi 0, %s229
      %s230 = sphi 0, %s227
      %s231 = sphi 0, %s230
      %s247 = sphi 0, %s231
    $region4: #{tpu_custom_call.1} parent=1 // loop_header_branch
      %26 = sbr.rel (%p24) target = $region8
    $region5: #{tpu_custom_call.1} parent=1 // loop_body
      %s28 = ssub.s32 %s23, 1
      %s29 = ssub.s32 %s23, 2
      %s30 = sadd.s32 %s23, 1
      %s31 = ssub.s32 %s23, %s30
      %p32 = scmp.eq.s32.totalorder %s31, 0
      %s34 = sadd.s32 %s33, 1
      %s35 = scalar_select %p32, %s33, %s34
      %p38 = pneg %p32
      %p39 = scmp.eq.s32.totalorder %s23, 1
      %p40 = por %p38, %p39
      %p41 = scmp.ne.s32.totalorder %s33, %s36
      %p42 = scmp.eq.s32.totalorder %s23, 0
      %p43 = por %p41, %p42
      %p44 = scmp.ne.s32.totalorder %s33, %s36
      %p45 = scmp.eq.s32.totalorder %s28, 1
      %p46 = por %p44, %p45
      %p47 = scmp.ne.s32.totalorder %s36, %s37
      %p48 = scmp.eq.s32.totalorder %s28, 0
      %p49 = por %p47, %p48
      %p50 = scmp.ne.s32.totalorder %s36, %s37
      %p51 = scmp.eq.s32.totalorder %s29, 1
      %p52 = por %p50, %p51
      %p54 = scmp.ne.s32.totalorder %s37, %s53
      %p55 = scmp.eq.s32.totalorder %s29, 0
      %p56 = por %p54, %p55
      %s58 = sadd.s32 %s57, 1
      %p61 = scmp.eq.s32.totalorder %s23, 1
      %p62 = scmp.ne.s32.totalorder %s57, %s59
      %p63 = scmp.eq.s32.totalorder %s23, 0
      %p64 = por %p62, %p63
      %p65 = scmp.ne.s32.totalorder %s57, %s59
      %p66 = scmp.eq.s32.totalorder %s28, 1
      %p67 = por %p65, %p66
      %p68 = scmp.ne.s32.totalorder %s59, %s60
      %p69 = scmp.eq.s32.totalorder %s28, 0
      %p70 = por %p68, %p69
      %p71 = scmp.ne.s32.totalorder %s59, %s60
      %p72 = scmp.eq.s32.totalorder %s29, 1
      %p73 = por %p71, %p72
      %p75 = scmp.ne.s32.totalorder %s60, %s74
      %p76 = scmp.eq.s32.totalorder %s29, 0
      %p77 = por %p75, %p76
      %s79 = sadd.s32 %s78, 1
      %p82 = scmp.eq.s32.totalorder %s23, 1
      %p83 = scmp.ne.s32.totalorder %s78, %s80
      %p84 = scmp.eq.s32.totalorder %s23, 0
      %p85 = por %p83, %p84
      %p86 = scmp.ne.s32.totalorder %s78, %s80
      %p87 = scmp.eq.s32.totalorder %s28, 1
      %p88 = por %p86, %p87
      %p89 = scmp.ne.s32.totalorder %s80, %s81
      %p90 = scmp.eq.s32.totalorder %s28, 0
      %p91 = por %p89, %p90
      %p92 = scmp.ne.s32.totalorder %s80, %s81
      %p93 = scmp.eq.s32.totalorder %s29, 1
      %p94 = por %p92, %p93
      %p96 = scmp.ne.s32.totalorder %s81, %s95
      %p97 = scmp.eq.s32.totalorder %s29, 0
      %p98 = por %p96, %p97
      %s100 = sadd.s32 %s99, 1
      %p103 = scmp.eq.s32.totalorder %s23, 1
      %p104 = scmp.ne.s32.totalorder %s99, %s101
      %p105 = scmp.eq.s32.totalorder %s23, 0
      %p106 = por %p104, %p105
      %p107 = scmp.ne.s32.totalorder %s99, %s101
      %p108 = scmp.eq.s32.totalorder %s28, 1
      %p109 = por %p107, %p108
      %p110 = scmp.ne.s32.totalorder %s101, %s102
      %p111 = scmp.eq.s32.totalorder %s28, 0
      %p112 = por %p110, %p111
      %p113 = scmp.ne.s32.totalorder %s101, %s102
      %p114 = scmp.eq.s32.totalorder %s29, 1
      %p115 = por %p113, %p114
      %p117 = scmp.ne.s32.totalorder %s102, %s116
      %p118 = scmp.eq.s32.totalorder %s29, 0
      %p119 = por %p117, %p118
      %s121 = sadd.s32 %s120, 1
      %p124 = scmp.eq.s32.totalorder %s23, 1
      %p125 = scmp.ne.s32.totalorder %s120, %s122
      %p126 = scmp.eq.s32.totalorder %s23, 0
      %p127 = por %p125, %p126
      %p128 = scmp.ne.s32.totalorder %s120, %s122
      %p129 = scmp.eq.s32.totalorder %s28, 1
      %p130 = por %p128, %p129
      %p131 = scmp.ne.s32.totalorder %s122, %s123
      %p132 = scmp.eq.s32.totalorder %s28, 0
      %p133 = por %p131, %p132
      %p134 = scmp.ne.s32.totalorder %s122, %s123
      %p135 = scmp.eq.s32.totalorder %s29, 1
      %p136 = por %p134, %p135
      %p138 = scmp.ne.s32.totalorder %s123, %s137
      %p139 = scmp.eq.s32.totalorder %s29, 0
      %p140 = por %p138, %p139
      %s142 = sadd.s32 %s141, 1
      %p145 = scmp.eq.s32.totalorder %s23, 1
      %p146 = scmp.ne.s32.totalorder %s141, %s143
      %p147 = scmp.eq.s32.totalorder %s23, 0
      %p148 = por %p146, %p147
      %p149 = scmp.ne.s32.totalorder %s141, %s143
      %p150 = scmp.eq.s32.totalorder %s28, 1
      %p151 = por %p149, %p150
      %p152 = scmp.ne.s32.totalorder %s143, %s144
      %p153 = scmp.eq.s32.totalorder %s28, 0
      %p154 = por %p152, %p153
      %p155 = scmp.ne.s32.totalorder %s143, %s144
      %p156 = scmp.eq.s32.totalorder %s29, 1
      %p157 = por %p155, %p156
      %p159 = scmp.ne.s32.totalorder %s144, %s158
      %p160 = scmp.eq.s32.totalorder %s29, 0
      %p161 = por %p159, %p160
      %s163 = sadd.s32 %s162, 1
      %p166 = scmp.eq.s32.totalorder %s23, 1
      %p167 = scmp.ne.s32.totalorder %s162, %s164
      %p168 = scmp.eq.s32.totalorder %s23, 0
      %p169 = por %p167, %p168
      %p170 = scmp.ne.s32.totalorder %s162, %s164
      %p171 = scmp.eq.s32.totalorder %s28, 1
      %p172 = por %p170, %p171
      %p173 = scmp.ne.s32.totalorder %s164, %s165
      %p174 = scmp.eq.s32.totalorder %s28, 0
      %p175 = por %p173, %p174
      %p176 = scmp.ne.s32.totalorder %s164, %s165
      %p177 = scmp.eq.s32.totalorder %s29, 1
      %p178 = por %p176, %p177
      %p180 = scmp.ne.s32.totalorder %s165, %s179
      %p181 = scmp.eq.s32.totalorder %s29, 0
      %p182 = por %p180, %p181
      %s184 = sadd.s32 %s183, 1
      %p187 = scmp.eq.s32.totalorder %s23, 1
      %p188 = scmp.ne.s32.totalorder %s183, %s185
      %p189 = scmp.eq.s32.totalorder %s23, 0
      %p190 = por %p188, %p189
      %p191 = scmp.ne.s32.totalorder %s183, %s185
      %p192 = scmp.eq.s32.totalorder %s28, 1
      %p193 = por %p191, %p192
      %p194 = scmp.ne.s32.totalorder %s185, %s186
      %p195 = scmp.eq.s32.totalorder %s28, 0
      %p196 = por %p194, %p195
      %p197 = scmp.ne.s32.totalorder %s185, %s186
      %p198 = scmp.eq.s32.totalorder %s29, 1
      %p199 = por %p197, %p198
      %p201 = scmp.ne.s32.totalorder %s186, %s200
      %p202 = scmp.eq.s32.totalorder %s29, 0
      %p203 = por %p201, %p202
      %s205 = sadd.s32 %s204, 1
      %p208 = scmp.eq.s32.totalorder %s23, 1
      %p209 = scmp.ne.s32.totalorder %s204, %s206
      %p210 = scmp.eq.s32.totalorder %s23, 0
      %p211 = por %p209, %p210
      %p212 = scmp.ne.s32.totalorder %s204, %s206
      %p213 = scmp.eq.s32.totalorder %s28, 1
      %p214 = por %p212, %p213
      %p215 = scmp.ne.s32.totalorder %s206, %s207
      %p216 = scmp.eq.s32.totalorder %s28, 0
      %p217 = por %p215, %p216
      %p218 = scmp.ne.s32.totalorder %s206, %s207
      %p219 = scmp.eq.s32.totalorder %s29, 1
      %p220 = por %p218, %p219
      %p222 = scmp.ne.s32.totalorder %s207, %s221
      %p223 = scmp.eq.s32.totalorder %s29, 0
      %p224 = por %p222, %p223
      %s225 = ssub.s32 %s23, %s30
      %p226 = scmp.eq.s32.totalorder %s225, 0
      %s228 = sadd.s32 %s227, 1
      %s229 = scalar_select %p226, %s227, %s228
      %p232 = pneg %p226
      %p233 = scmp.eq.s32.totalorder %s23, 1
      %p234 = por %p232, %p233
      %p235 = scmp.ne.s32.totalorder %s227, %s230
      %p236 = scmp.eq.s32.totalorder %s23, 0
      %p237 = por %p235, %p236
      %p238 = scmp.ne.s32.totalorder %s227, %s230
      %p239 = scmp.eq.s32.totalorder %s28, 1
      %p240 = por %p238, %p239
      %p241 = scmp.ne.s32.totalorder %s230, %s231
      %p242 = scmp.eq.s32.totalorder %s28, 0
      %p243 = por %p241, %p242
      %p244 = scmp.ne.s32.totalorder %s230, %s231
      %p245 = scmp.eq.s32.totalorder %s29, 1
      %p246 = por %p244, %p245
      %p248 = scmp.ne.s32.totalorder %s231, %s247
      %p249 = scmp.eq.s32.totalorder %s29, 0
      %p250 = por %p248, %p249
      %p251 = scmp.le.s32.totalorder 1, %s23
      %p252 = scmp.lt.s32.totalorder %s23, 3
      %p253 = pnand %p251, %p252
      %p254 = pneg %p253
      // Predicated region
      $region9: #{tpu_custom_call.1} parent=5 // pred_check
        _
      $region10: #{tpu_custom_call.1} parent=5 // pred_check_branch
        %256 = sbr.rel (%p253) target = $region12
      $region11: #{tpu_custom_call.1} parent=5 // pred_region
        %s257 = ssub.s32 %s23, 1
        // Predicated region
        $region13: #{tpu_custom_call.1} parent=11 // pred_check
          %p258 = pneg %p70
        $region14: #{tpu_custom_call.1} parent=11 // pred_check_branch
          %260 = sbr.rel (%p258) target = $region16
        $region15: #{tpu_custom_call.1} parent=11 // pred_region
          %s262 = ssub.s32 1024, 1024
          %263 = vsyncadd [#allocation7], %s262
          %s264 = sshll.u32 [#allocation6], 4
          %s265 = int_to_ptr.vmem [resolvable:$true] %s264
          %270 = dma.hbm_to_vmem [thread:$0]  %s1, 1024, %s265, [#allocation7], 64, 64, 4
        $region16: #{tpu_custom_call.1} parent=11 // pred_fallthru
          _
        // Predicated region
        $region17: #{tpu_custom_call.1} parent=11 // pred_check
          %p271 = pneg %p91
        $region18: #{tpu_custom_call.1} parent=11 // pred_check_branch
          %273 = sbr.rel (%p271) target = $region20
        $region19: #{tpu_custom_call.1} parent=11 // pred_region
          _
        $region20: #{tpu_custom_call.1} parent=11 // pred_fallthru
          _
        // Predicated region
        $region21: #{tpu_custom_call.1} parent=11 // pred_check
          %p274 = pneg %p112
        $region22: #{tpu_custom_call.1} parent=11 // pred_check_branch
          %276 = sbr.rel (%p274) target = $region24
        $region23: #{tpu_custom_call.1} parent=11 // pred_region
          %s278 = ssub.s32 9216, 9216
          %279 = vsyncadd [#allocation7], %s278
          %s280 = sshll.u32 [#allocation8], 4
          %s281 = int_to_ptr.vmem [resolvable:$true] %s280
          %286 = dma.hbm_to_vmem [thread:$0]  %s3, 9216, %s281, [#allocation7], 64, 64, 4
        $region24: #{tpu_custom_call.1} parent=11 // pred_fallthru
          _
        // Predicated region
        $region25: #{tpu_custom_call.1} parent=11 // pred_check
          %p287 = pneg %p133
        $region26: #{tpu_custom_call.1} parent=11 // pred_check_branch
          %289 = sbr.rel (%p287) target = $region28
        $region27: #{tpu_custom_call.1} parent=11 // pred_region
          _
        $region28: #{tpu_custom_call.1} parent=11 // pred_fallthru
          _
        // Predicated region
        $region29: #{tpu_custom_call.1} parent=11 // pred_check
          %p290 = pneg %p154
        $region30: #{tpu_custom_call.1} parent=11 // pred_check_branch
          %292 = sbr.rel (%p290) target = $region32
        $region31: #{tpu_custom_call.1} parent=11 // pred_region
          %s294 = ssub.s32 1024, 1024
          %295 = vsyncadd [#allocation10], %s294
          %s296 = sshll.u32 [#allocation9], 4
          %s297 = int_to_ptr.vmem [resolvable:$true] %s296
          %302 = dma.hbm_to_vmem [thread:$0]  %s5, 1024, %s297, [#allocation10], 64, 64, 4
        $region32: #{tpu_custom_call.1} parent=11 // pred_fallthru
          _
        // Predicated region
        $region33: #{tpu_custom_call.1} parent=11 // pred_check
          %p303 = pneg %p175
        $region34: #{tpu_custom_call.1} parent=11 // pred_check_branch
          %305 = sbr.rel (%p303) target = $region36
        $region35: #{tpu_custom_call.1} parent=11 // pred_region
          _
        $region36: #{tpu_custom_call.1} parent=11 // pred_fallthru
          _
        // Predicated region
        $region37: #{tpu_custom_call.1} parent=11 // pred_check
          %p306 = pneg %p196
        $region38: #{tpu_custom_call.1} parent=11 // pred_check_branch
          %308 = sbr.rel (%p306) target = $region40
        $region39: #{tpu_custom_call.1} parent=11 // pred_region
          %s310 = ssub.s32 1024, 1024
          %311 = vsyncadd [#allocation10], %s310
          %s312 = sshll.u32 [#allocation11], 4
          %s313 = int_to_ptr.vmem [resolvable:$true] %s312
          %318 = dma.hbm_to_vmem [thread:$0]  %s7, 1024, %s313, [#allocation10], 64, 64, 4
        $region40: #{tpu_custom_call.1} parent=11 // pred_fallthru
          _
        // Predicated region
        $region41: #{tpu_custom_call.1} parent=11 // pred_check
          %p319 = pneg %p217
        $region42: #{tpu_custom_call.1} parent=11 // pred_check_branch
          %321 = sbr.rel (%p319) target = $region44
        $region43: #{tpu_custom_call.1} parent=11 // pred_region
          _
        $region44: #{tpu_custom_call.1} parent=11 // pred_fallthru
          _
      $region12: #{tpu_custom_call.1} parent=5 // pred_fallthru
        _
      %p322 = scmp.lt.s32.totalorder %s23, 2
      // Predicated region
      $region45: #{tpu_custom_call.1} parent=5 // pred_check
        %p323 = pneg %p322
      $region46: #{tpu_custom_call.1} parent=5 // pred_check_branch
        %325 = sbr.rel (%p323) target = $region48
      $region47: #{tpu_custom_call.1} parent=5 // pred_region
        // Predicated region
        $region49: #{tpu_custom_call.1} parent=47 // pred_check
          %p326 = pneg %p43
        $region50: #{tpu_custom_call.1} parent=47 // pred_check_branch
          %328 = sbr.rel (%p326) target = $region52
        $region51: #{tpu_custom_call.1} parent=47 // pred_region
          %s329 = sand.u32 %s33, 1
          %s330 = scalar_lea.sflag [#allocation4], %s329
          %s331 = sand.u32 %s33, 1
          %s332 = smul.addr %s331, 128
          %s333 = scalar_lea.vmem [#allocation3], %s332
          %s335 = ssub.s32 2048, 2048
          %336 = vsyncadd %s330, %s335
          %s337 = smul.addr %s23, 32
          %s338 = smul.addr %s337, 64
          %s339 = scalar_lea.hbm %s0, %s338
          %s340 = sshll.u32 %s333, 4
          %s341 = int_to_ptr.vmem [resolvable:$true] %s340
          %346 = dma.hbm_to_vmem [thread:$0]  %s339, 2048, %s341, %s330, 64, 64, 4
        $region52: #{tpu_custom_call.1} parent=47 // pred_fallthru
          _
      $region48: #{tpu_custom_call.1} parent=5 // pred_fallthru
        _
      %p347 = scmp.le.s32.totalorder 1, %s23
      %p348 = scmp.lt.s32.totalorder %s23, 3
      %p349 = pnand %p347, %p348
      %p350 = pneg %p349
      // Predicated region
      $region53: #{tpu_custom_call.1} parent=5 // pred_check
        _
      $region54: #{tpu_custom_call.1} parent=5 // pred_check_branch
        %352 = sbr.rel (%p349) target = $region56
      $region55: #{tpu_custom_call.1} parent=5 // pred_region
        %s353 = ssub.s32 %s23, 1
        %s354 = sand.u32 %s36, 1
        %s355 = scalar_lea.sflag [#allocation4], %s354
        %s356 = sand.u32 %s36, 1
        %s357 = smul.addr %s356, 128
        %s358 = scalar_lea.vmem [#allocation3], %s357
        // Predicated region
        $region57: #{tpu_custom_call.1} parent=55 // pred_check
          %p359 = pneg %p49
        $region58: #{tpu_custom_call.1} parent=55 // pred_check_branch
          %361 = sbr.rel (%p359) target = $region60
        $region59: #{tpu_custom_call.1} parent=55 // pred_region
          %362 = dma.done %s355, 2048
        $region60: #{tpu_custom_call.1} parent=55 // pred_fallthru
          _
        // Predicated region
        $region61: #{tpu_custom_call.1} parent=55 // pred_check
          %p363 = pneg %p70
        $region62: #{tpu_custom_call.1} parent=55 // pred_check_branch
          %365 = sbr.rel (%p363) target = $region64
        $region63: #{tpu_custom_call.1} parent=55 // pred_region
          %366 = dma.done [#allocation7], 1024
        $region64: #{tpu_custom_call.1} parent=55 // pred_fallthru
          _
        // Predicated region
        $region65: #{tpu_custom_call.1} parent=55 // pred_check
          %p367 = pneg %p112
        $region66: #{tpu_custom_call.1} parent=55 // pred_check_branch
          %369 = sbr.rel (%p367) target = $region68
        $region67: #{tpu_custom_call.1} parent=55 // pred_region
          %370 = dma.done [#allocation7], 9216
        $region68: #{tpu_custom_call.1} parent=55 // pred_fallthru
          _
        // Predicated region
        $region69: #{tpu_custom_call.1} parent=55 // pred_check
          %p371 = pneg %p154
        $region70: #{tpu_custom_call.1} parent=55 // pred_check_branch
          %373 = sbr.rel (%p371) target = $region72
        $region71: #{tpu_custom_call.1} parent=55 // pred_region
          %374 = dma.done [#allocation10], 1024
        $region72: #{tpu_custom_call.1} parent=55 // pred_fallthru
          _
        // Predicated region
        $region73: #{tpu_custom_call.1} parent=55 // pred_check
          %p375 = pneg %p196
        $region74: #{tpu_custom_call.1} parent=55 // pred_check_branch
          %377 = sbr.rel (%p375) target = $region76
        $region75: #{tpu_custom_call.1} parent=55 // pred_region
          %378 = dma.done [#allocation10], 1024
        $region76: #{tpu_custom_call.1} parent=55 // pred_fallthru
          _
        %s379 = sand.u32 %s36, 1
        %s380 = scalar_lea.sflag [#allocation4], %s379
        %s381 = sand.u32 %s36, 1
        %s382 = smul.addr %s381, 128
        %s383 = scalar_lea.vmem [#allocation3], %s382
        %p384 = pneg %p49
        %p385 = pneg %p46
        %p386 = pneg %p70
        %p387 = pneg %p67
        %p388 = pneg %p91
        %p389 = pneg %p88
        %p390 = pneg %p112
        %p391 = pneg %p109
        %p392 = pneg %p133
        %p393 = pneg %p130
        %p394 = pneg %p154
        %p395 = pneg %p151
        %p396 = pneg %p175
        %p397 = pneg %p172
        %p398 = pneg %p196
        %p399 = pneg %p193
        %p400 = pneg %p217
        %p401 = pneg %p214
        %p402 = pneg %p243
        %p403 = pneg %p240
        %s404 = sand.u32 %s230, 1
        %s405 = scalar_lea.sflag [#allocation5], %s404
        %s406 = sand.u32 %s230, 1
        %s407 = smul.addr %s406, 128
        %s408 = scalar_lea.vmem [#allocation12], %s407
        %p410 = scmp.eq.s32.totalorder %s28, 0
        // Predicated region
        $region77: #{tpu_custom_call.1} parent=55 // pred_check
          %p411 = pneg %p410
        $region78: #{tpu_custom_call.1} parent=55 // pred_check_branch
          %413 = sbr.rel (%p411) target = $region80
        $region79: #{tpu_custom_call.1} parent=55 // pred_region
          %414 = vst [vmem:[#allocation2] sm:$0xf] 0
          %415 = vst [vmem:[#allocation2 + $0x4] sm:$0xf] 0
          %416 = vst [vmem:[#allocation2 + $0x8] sm:$0x1] 0
          %417 = vst [vmem:[#allocation2 + $0xc] sm:$0xf] 0
          %418 = vst [vmem:[#allocation2 + $0x10] sm:$0xf] 0
          %419 = vst [vmem:[#allocation2 + $0x14] sm:$0x1] 0
          %420 = vst [vmem:[#allocation2 + $0x18] sm:$0xf] 0
          %421 = vst [vmem:[#allocation2 + $0x1c] sm:$0xf] 0
          %422 = vst [vmem:[#allocation2 + $0x20] sm:$0x1] 0
          %423 = vst [vmem:[#allocation2 + $0x24] sm:$0xf] 0
          %424 = vst [vmem:[#allocation2 + $0x28] sm:$0xf] 0
          %425 = vst [vmem:[#allocation2 + $0x2c] sm:$0x1] 0
          %426 = vst [vmem:[#allocation2 + $0x30] sm:$0xf] 0
          %427 = vst [vmem:[#allocation2 + $0x34] sm:$0xf] 0
          %428 = vst [vmem:[#allocation2 + $0x38] sm:$0x1] 0
          %429 = vst [vmem:[#allocation2 + $0x3c] sm:$0xf] 0
          %430 = vst [vmem:[#allocation2 + $0x40] sm:$0xf] 0
          %431 = vst [vmem:[#allocation2 + $0x44] sm:$0x1] 0
          %432 = vst [vmem:[#allocation2 + $0x48] sm:$0xf] 0
          %433 = vst [vmem:[#allocation2 + $0x4c] sm:$0xf] 0
          %434 = vst [vmem:[#allocation2 + $0x50] sm:$0x1] 0
          %435 = vst [vmem:[#allocation2 + $0x54] sm:$0xf] 0
          %436 = vst [vmem:[#allocation2 + $0x58] sm:$0xf] 0
          %437 = vst [vmem:[#allocation2 + $0x5c] sm:$0x1] 0
          %438 = vst [vmem:[#allocation2 + $0x60] sm:$0xf] 0
          %439 = vst [vmem:[#allocation2 + $0x64] sm:$0xf] 0
          %440 = vst [vmem:[#allocation2 + $0x68] sm:$0x1] 0
          %441 = vst [vmem:[#allocation2 + $0x6c] sm:$0xf] 0
          %442 = vst [vmem:[#allocation2 + $0x70] sm:$0xf] 0
          %443 = vst [vmem:[#allocation2 + $0x74] sm:$0x1] 0
          %444 = vst [vmem:[#allocation2 + $0x78] sm:$0xf] 0
          %445 = vst [vmem:[#allocation2 + $0x7c] sm:$0xf] 0
          %446 = vst [vmem:[#allocation2 + $0x80] sm:$0x1] 0
          %447 = vst [vmem:[#allocation2 + $0x84] sm:$0xf] 0
          %448 = vst [vmem:[#allocation2 + $0x88] sm:$0xf] 0
          %449 = vst [vmem:[#allocation2 + $0x8c] sm:$0x1] 0
          %450 = vst [vmem:[#allocation2 + $0x90] sm:$0xf] 0
          %451 = vst [vmem:[#allocation2 + $0x94] sm:$0xf] 0
          %452 = vst [vmem:[#allocation2 + $0x98] sm:$0x1] 0
          %453 = vst [vmem:[#allocation2 + $0x9c] sm:$0xf] 0
          %454 = vst [vmem:[#allocation2 + $0xa0] sm:$0xf] 0
          %455 = vst [vmem:[#allocation2 + $0xa4] sm:$0x1] 0
          %456 = vst [vmem:[#allocation2 + $0xa8] sm:$0xf] 0
          %457 = vst [vmem:[#allocation2 + $0xac] sm:$0xf] 0
          %458 = vst [vmem:[#allocation2 + $0xb0] sm:$0x1] 0
          %459 = vst [vmem:[#allocation2 + $0xb4] sm:$0xf] 0
          %460 = vst [vmem:[#allocation2 + $0xb8] sm:$0xf] 0
          %461 = vst [vmem:[#allocation2 + $0xbc] sm:$0x1] 0
          %462 = vst [vmem:[#allocation2 + $0xc0] sm:$0xf] 0
          %463 = vst [vmem:[#allocation2 + $0xc4] sm:$0xf] 0
          %464 = vst [vmem:[#allocation2 + $0xc8] sm:$0x1] 0
          %465 = vst [vmem:[#allocation2 + $0xcc] sm:$0xf] 0
          %466 = vst [vmem:[#allocation2 + $0xd0] sm:$0xf] 0
          %467 = vst [vmem:[#allocation2 + $0xd4] sm:$0x1] 0
        $region80: #{tpu_custom_call.1} parent=55 // pred_fallthru
          _
        %v468 = vld [vmem:[%s358] sm:$0xf]
        %v469 = vld [vmem:[%s358 + $0x4] sm:$0xf]
        %v470 = vld [vmem:[%s358 + $0x8] sm:$0xf]
        %v471 = vld [vmem:[%s358 + $0xc] sm:$0xf]
        %v472 = vld [vmem:[%s358 + $0x10] sm:$0xf]
        %v473 = vld [vmem:[%s358 + $0x14] sm:$0xf]
        %v474 = vld [vmem:[%s358 + $0x18] sm:$0xf]
        %v475 = vld [vmem:[%s358 + $0x1c] sm:$0xf]
        %v476 = vld [vmem:[%s358 + $0x20] sm:$0xf]
        %v477 = vld [vmem:[%s358 + $0x24] sm:$0xf]
        %v478 = vld [vmem:[%s358 + $0x28] sm:$0xf]
        %v479 = vld [vmem:[%s358 + $0x2c] sm:$0xf]
        %v480 = vld [vmem:[%s358 + $0x30] sm:$0xf]
        %v481 = vld [vmem:[%s358 + $0x34] sm:$0xf]
        %v482 = vld [vmem:[%s358 + $0x38] sm:$0xf]
        %v483 = vld [vmem:[%s358 + $0x3c] sm:$0xf]
        %v484 = vld [vmem:[%s358 + $0x40] sm:$0xf]
        %v485 = vld [vmem:[%s358 + $0x44] sm:$0xf]
        %v486 = vld [vmem:[%s358 + $0x48] sm:$0xf]
        %v487 = vld [vmem:[%s358 + $0x4c] sm:$0xf]
        %v488 = vld [vmem:[%s358 + $0x50] sm:$0xf]
        %v489 = vld [vmem:[%s358 + $0x54] sm:$0xf]
        %v490 = vld [vmem:[%s358 + $0x58] sm:$0xf]
        %v491 = vld [vmem:[%s358 + $0x5c] sm:$0xf]
        %v492 = vld [vmem:[%s358 + $0x60] sm:$0xf]
        %v493 = vld [vmem:[%s358 + $0x64] sm:$0xf]
        %v494 = vld [vmem:[%s358 + $0x68] sm:$0xf]
        %v495 = vld [vmem:[%s358 + $0x6c] sm:$0xf]
        %v496 = vld [vmem:[%s358 + $0x70] sm:$0xf]
        %v497 = vld [vmem:[%s358 + $0x74] sm:$0xf]
        %v498 = vld [vmem:[%s358 + $0x78] sm:$0xf]
        %v499 = vld [vmem:[%s358 + $0x7c] sm:$0xf]
        %v500 = vld [vmem:[#allocation6] sm:$0xf]
        %v501 = vld [vmem:[#allocation6 + $0x4] sm:$0xf]
        %v502 = vld [vmem:[#allocation6 + $0x8] sm:$0xf]
        %v503 = vld [vmem:[#allocation6 + $0xc] sm:$0xf]
        %v504 = vld [vmem:[#allocation6 + $0x10] sm:$0xf]
        %v505 = vld [vmem:[#allocation6 + $0x14] sm:$0xf]
        %v506 = vld [vmem:[#allocation6 + $0x18] sm:$0xf]
        %v507 = vld [vmem:[#allocation6 + $0x1c] sm:$0xf]
        %v508 = vld [vmem:[#allocation6 + $0x20] sm:$0xf]
        %v509 = vld [vmem:[#allocation6 + $0x24] sm:$0xf]
        %v510 = vld [vmem:[#allocation6 + $0x28] sm:$0xf]
        %v511 = vld [vmem:[#allocation6 + $0x2c] sm:$0xf]
        %v512 = vld [vmem:[#allocation6 + $0x30] sm:$0xf]
        %v513 = vld [vmem:[#allocation6 + $0x34] sm:$0xf]
        %v514 = vld [vmem:[#allocation6 + $0x38] sm:$0xf]
        %v515 = vld [vmem:[#allocation6 + $0x3c] sm:$0xf]
        %v516 = vld [vmem:[%s2] sm:$0x1]
        %v518 = vlaneseq
        %v519 = vshrl.u32 %v518, 7
        %v520 = vsub.s32 0, %v519
        %v521 = vrot.slane %v516, %v520
        %v555 = vunpack.c.l.b16 %v468
        %v556 = vunpack.c.l.b16 %v469
        %v557 = vunpack.c.l.b16 %v470
        %v558 = vunpack.c.l.b16 %v471
        %v559 = vunpack.c.l.b16 %v472
        %v560 = vunpack.c.l.b16 %v473
        %v561 = vunpack.c.l.b16 %v474
        %v562 = vunpack.c.l.b16 %v475
        %v563 = vunpack.c.l.b16 %v476
        %v564 = vunpack.c.l.b16 %v477
        %v565 = vunpack.c.l.b16 %v478
        %v566 = vunpack.c.l.b16 %v479
        %v567 = vunpack.c.l.b16 %v480
        %v568 = vunpack.c.l.b16 %v481
        %v569 = vunpack.c.l.b16 %v482
        %v570 = vunpack.c.l.b16 %v483
        %v571 = vunpack.c.l.b16 %v484
        %v572 = vunpack.c.l.b16 %v485
        %v573 = vunpack.c.l.b16 %v486
        %v574 = vunpack.c.l.b16 %v487
        %v575 = vunpack.c.l.b16 %v488
        %v576 = vunpack.c.l.b16 %v489
        %v577 = vunpack.c.l.b16 %v490
        %v578 = vunpack.c.l.b16 %v491
        %v579 = vunpack.c.l.b16 %v492
        %v580 = vunpack.c.l.b16 %v493
        %v581 = vunpack.c.l.b16 %v494
        %v582 = vunpack.c.l.b16 %v495
        %v583 = vunpack.c.l.b16 %v496
        %v584 = vunpack.c.l.b16 %v497
        %v585 = vunpack.c.l.b16 %v498
        %v586 = vunpack.c.l.b16 %v499
        %v587 = vpack.c.b16 %v556, %v555
        %v588 = vpack.c.b16 %v558, %v557
        %v589 = vpack.c.b16 %v560, %v559
        %v590 = vpack.c.b16 %v562, %v561
        %v591 = vpack.c.b16 %v564, %v563
        %v592 = vpack.c.b16 %v566, %v565
        %v593 = vpack.c.b16 %v568, %v567
        %v594 = vpack.c.b16 %v570, %v569
        %v595 = vpack.c.b16 %v572, %v571
        %v596 = vpack.c.b16 %v574, %v573
        %v597 = vpack.c.b16 %v576, %v575
        %v598 = vpack.c.b16 %v578, %v577
        %v599 = vpack.c.b16 %v580, %v579
        %v600 = vpack.c.b16 %v582, %v581
        %v601 = vpack.c.b16 %v584, %v583
        %v602 = vpack.c.b16 %v586, %v585
        %v635 = vunpack.c.l.b16 %v500
        %v636 = vunpack.c.l.b16 %v501
        %v637 = vunpack.c.l.b16 %v502
        %v638 = vunpack.c.l.b16 %v503
        %v639 = vunpack.c.l.b16 %v504
        %v640 = vunpack.c.l.b16 %v505
        %v641 = vunpack.c.l.b16 %v506
        %v642 = vunpack.c.l.b16 %v507
        %v643 = vunpack.c.l.b16 %v508
        %v644 = vunpack.c.l.b16 %v509
        %v645 = vunpack.c.l.b16 %v510
        %v646 = vunpack.c.l.b16 %v511
        %v647 = vunpack.c.l.b16 %v512
        %v648 = vunpack.c.l.b16 %v513
        %v649 = vunpack.c.l.b16 %v514
        %v650 = vunpack.c.l.b16 %v515
        %v651 = vpack.c.b16 %v636, %v635
        %v652 = vpack.c.b16 %v638, %v637
        %v653 = vpack.c.b16 %v640, %v639
        %v654 = vpack.c.b16 %v642, %v641
        %v655 = vpack.c.b16 %v644, %v643
        %v656 = vpack.c.b16 %v646, %v645
        %v657 = vpack.c.b16 %v648, %v647
        %v658 = vpack.c.b16 %v650, %v649
        %667 = vmatprep.subr.bf16.mxu0 0
        %668 = vmatpush1.bf16.msra.mxu0 %v658
        %669 = vmatprep.subr.bf16.mxu0 0
        %670 = vmatpush1.bf16.msra.mxu0 %v657
        %671 = vmatprep.subr.bf16.mxu0 0
        %672 = vmatpush1.bf16.msra.mxu0 %v656
        %673 = vmatprep.subr.bf16.mxu0 0
        %674 = vmatpush1.bf16.msra.mxu0 %v655
        %675 = vmatprep.subr.bf16.mxu0 0
        %676 = vmatpush1.bf16.msra.mxu0 %v654
        %677 = vmatprep.subr.bf16.mxu0 0
        %678 = vmatpush1.bf16.msra.mxu0 %v653
        %679 = vmatprep.subr.bf16.mxu0 0
        %680 = vmatpush1.bf16.msra.mxu0 %v652
        %681 = vmatprep.subr.bf16.mxu0 0
        %682 = vmatpush1.bf16.msra.mxu0 %v651
        %683 = vmatprep.subr.bf16.mxu0 0
        %684 = vmatpush2.bf16.msra.mxu0 0
        %685 = vmatprep.subr.bf16.mxu0 0
        %686 = vmatpush2.bf16.msra.mxu0 0
        %687 = vmatprep.subr.bf16.mxu0 0
        %688 = vmatpush2.bf16.msra.mxu0 0
        %689 = vmatprep.subr.bf16.mxu0 0
        %690 = vmatpush2.bf16.msra.mxu0 0
        %691 = vmatprep.subr.bf16.mxu0 0
        %692 = vmatpush2.bf16.msra.mxu0 0
        %693 = vmatprep.subr.bf16.mxu0 0
        %694 = vmatpush2.bf16.msra.mxu0 0
        %695 = vmatprep.subr.bf16.mxu0 0
        %696 = vmatpush2.bf16.msra.mxu0 0
        %697 = vmatprep.subr.bf16.mxu0 0
        %698 = vmatpush2.bf16.msra.mxu0 0
        %699 = vmatprep.mubr.bf16.mxu0 0
        %700 = vmatmul.mubr.bf16.gmra.mxu0 %v587
        %v701 = vpop.f32.mrf.mxu0
        %v702 = vadd.f32 %v521, %v701
        %v703 = vpop.f32.mrf.mxu0
        %v704 = vpop.f32.mrf.mxu0
        %v705 = vadd.f32 %v521, %v704
        %v706 = vpop.f32.mrf.mxu0
        %707 = vmatprep.mubr.bf16.mxu0 0
        %708 = vmatmul.mubr.bf16.gmra.mxu0 %v588
        %v709 = vpop.f32.mrf.mxu0
        %v710 = vadd.f32 %v521, %v709
        %v711 = vpop.f32.mrf.mxu0
        %v712 = vpop.f32.mrf.mxu0
        %v713 = vadd.f32 %v521, %v712
        %v714 = vpop.f32.mrf.mxu0
        %715 = vmatprep.mubr.bf16.mxu0 0
        %716 = vmatmul.mubr.bf16.gmra.mxu0 %v589
        %v717 = vpop.f32.mrf.mxu0
        %v718 = vadd.f32 %v521, %v717
        %v719 = vpop.f32.mrf.mxu0
        %v720 = vpop.f32.mrf.mxu0
        %v721 = vadd.f32 %v521, %v720
        %v722 = vpop.f32.mrf.mxu0
        %723 = vmatprep.mubr.bf16.mxu0 0
        %724 = vmatmul.mubr.bf16.gmra.mxu0 %v590
        %v725 = vpop.f32.mrf.mxu0
        %v726 = vadd.f32 %v521, %v725
        %v727 = vpop.f32.mrf.mxu0
        %v728 = vpop.f32.mrf.mxu0
        %v729 = vadd.f32 %v521, %v728
        %v730 = vpop.f32.mrf.mxu0
        %731 = vmatprep.mubr.bf16.mxu0 0
        %732 = vmatmul.mubr.bf16.gmra.mxu0 %v591
        %v733 = vpop.f32.mrf.mxu0
        %v734 = vadd.f32 %v521, %v733
        %v735 = vpop.f32.mrf.mxu0
        %v736 = vpop.f32.mrf.mxu0
        %v737 = vadd.f32 %v521, %v736
        %v738 = vpop.f32.mrf.mxu0
        %739 = vmatprep.mubr.bf16.mxu0 0
        %740 = vmatmul.mubr.bf16.gmra.mxu0 %v592
        %v741 = vpop.f32.mrf.mxu0
        %v742 = vadd.f32 %v521, %v741
        %v743 = vpop.f32.mrf.mxu0
        %v744 = vpop.f32.mrf.mxu0
        %v745 = vadd.f32 %v521, %v744
        %v746 = vpop.f32.mrf.mxu0
        %747 = vmatprep.mubr.bf16.mxu0 0
        %748 = vmatmul.mubr.bf16.gmra.mxu0 %v593
        %v749 = vpop.f32.mrf.mxu0
        %v750 = vadd.f32 %v521, %v749
        %v751 = vpop.f32.mrf.mxu0
        %v752 = vpop.f32.mrf.mxu0
        %v753 = vadd.f32 %v521, %v752
        %v754 = vpop.f32.mrf.mxu0
        %755 = vmatprep.mubr.bf16.mxu0 0
        %756 = vmatmul.mubr.bf16.gmra.mxu0 %v594
        %v757 = vpop.f32.mrf.mxu0
        %v758 = vadd.f32 %v521, %v757
        %v759 = vpop.f32.mrf.mxu0
        %v760 = vpop.f32.mrf.mxu0
        %v761 = vadd.f32 %v521, %v760
        %v762 = vpop.f32.mrf.mxu0
        %763 = vmatprep.mubr.bf16.mxu0 0
        %764 = vmatmul.mubr.bf16.gmra.mxu0 %v595
        %v765 = vpop.f32.mrf.mxu0
        %v766 = vadd.f32 %v521, %v765
        %v767 = vpop.f32.mrf.mxu0
        %v768 = vpop.f32.mrf.mxu0
        %v769 = vadd.f32 %v521, %v768
        %v770 = vpop.f32.mrf.mxu0
        %771 = vmatprep.mubr.bf16.mxu0 0
        %772 = vmatmul.mubr.bf16.gmra.mxu0 %v596
        %v773 = vpop.f32.mrf.mxu0
        %v774 = vadd.f32 %v521, %v773
        %v775 = vpop.f32.mrf.mxu0
        %v776 = vpop.f32.mrf.mxu0
        %v777 = vadd.f32 %v521, %v776
        %v778 = vpop.f32.mrf.mxu0
        %779 = vmatprep.mubr.bf16.mxu0 0
        %780 = vmatmul.mubr.bf16.gmra.mxu0 %v597
        %v781 = vpop.f32.mrf.mxu0
        %v782 = vadd.f32 %v521, %v781
        %v783 = vpop.f32.mrf.mxu0
        %v784 = vpop.f32.mrf.mxu0
        %v785 = vadd.f32 %v521, %v784
        %v786 = vpop.f32.mrf.mxu0
        %787 = vmatprep.mubr.bf16.mxu0 0
        %788 = vmatmul.mubr.bf16.gmra.mxu0 %v598
        %v789 = vpop.f32.mrf.mxu0
        %v790 = vadd.f32 %v521, %v789
        %v791 = vpop.f32.mrf.mxu0
        %v792 = vpop.f32.mrf.mxu0
        %v793 = vadd.f32 %v521, %v792
        %v794 = vpop.f32.mrf.mxu0
        %795 = vmatprep.mubr.bf16.mxu0 0
        %796 = vmatmul.mubr.bf16.gmra.mxu0 %v599
        %v797 = vpop.f32.mrf.mxu0
        %v798 = vadd.f32 %v521, %v797
        %v799 = vpop.f32.mrf.mxu0
        %v800 = vpop.f32.mrf.mxu0
        %v801 = vadd.f32 %v521, %v800
        %v802 = vpop.f32.mrf.mxu0
        %803 = vmatprep.mubr.bf16.mxu0 0
        %804 = vmatmul.mubr.bf16.gmra.mxu0 %v600
        %v805 = vpop.f32.mrf.mxu0
        %v806 = vadd.f32 %v521, %v805
        %v807 = vpop.f32.mrf.mxu0
        %v808 = vpop.f32.mrf.mxu0
        %v809 = vadd.f32 %v521, %v808
        %v810 = vpop.f32.mrf.mxu0
        %811 = vmatprep.mubr.bf16.mxu0 0
        %812 = vmatmul.mubr.bf16.gmra.mxu0 %v601
        %v813 = vpop.f32.mrf.mxu0
        %v814 = vadd.f32 %v521, %v813
        %v815 = vpop.f32.mrf.mxu0
        %v816 = vpop.f32.mrf.mxu0
        %v817 = vadd.f32 %v521, %v816
        %v818 = vpop.f32.mrf.mxu0
        %819 = vmatprep.mubr.bf16.mxu0 0
        %820 = vmatmul.mubr.bf16.gmra.mxu0 %v602
        %v821 = vpop.f32.mrf.mxu0
        %v822 = vadd.f32 %v521, %v821
        %v823 = vpop.f32.mrf.mxu0
        %v824 = vpop.f32.mrf.mxu0
        %v825 = vadd.f32 %v521, %v824
        %v826 = vpop.f32.mrf.mxu0
        %827 = vdwg.mxu0
        %v828 = vmax.f32 %v702, 0.0
        %v829 = vmax.f32 %v705, 0.0
        %v830 = vmax.f32 %v710, 0.0
        %v831 = vmax.f32 %v713, 0.0
        %v832 = vmax.f32 %v718, 0.0
        %v833 = vmax.f32 %v721, 0.0
        %v834 = vmax.f32 %v726, 0.0
        %v835 = vmax.f32 %v729, 0.0
        %v836 = vmax.f32 %v734, 0.0
        %v837 = vmax.f32 %v737, 0.0
        %v838 = vmax.f32 %v742, 0.0
        %v839 = vmax.f32 %v745, 0.0
        %v840 = vmax.f32 %v750, 0.0
        %v841 = vmax.f32 %v753, 0.0
        %v842 = vmax.f32 %v758, 0.0
        %v843 = vmax.f32 %v761, 0.0
        %v844 = vmax.f32 %v766, 0.0
        %v845 = vmax.f32 %v769, 0.0
        %v846 = vmax.f32 %v774, 0.0
        %v847 = vmax.f32 %v777, 0.0
        %v848 = vmax.f32 %v782, 0.0
        %v849 = vmax.f32 %v785, 0.0
        %v850 = vmax.f32 %v790, 0.0
        %v851 = vmax.f32 %v793, 0.0
        %v852 = vmax.f32 %v798, 0.0
        %v853 = vmax.f32 %v801, 0.0
        %v854 = vmax.f32 %v806, 0.0
        %v855 = vmax.f32 %v809, 0.0
        %v856 = vmax.f32 %v814, 0.0
        %v857 = vmax.f32 %v817, 0.0
        %v858 = vmax.f32 %v822, 0.0
        %v859 = vmax.f32 %v825, 0.0
        %v860 = vpack.c.bf16 %v829, %v828
        %v861 = vpack.c.bf16 %v831, %v830
        %v862 = vpack.c.bf16 %v833, %v832
        %v863 = vpack.c.bf16 %v835, %v834
        %v864 = vpack.c.bf16 %v837, %v836
        %v865 = vpack.c.bf16 %v839, %v838
        %v866 = vpack.c.bf16 %v841, %v840
        %v867 = vpack.c.bf16 %v843, %v842
        %v868 = vpack.c.bf16 %v845, %v844
        %v869 = vpack.c.bf16 %v847, %v846
        %v870 = vpack.c.bf16 %v849, %v848
        %v871 = vpack.c.bf16 %v851, %v850
        %v872 = vpack.c.bf16 %v853, %v852
        %v873 = vpack.c.bf16 %v855, %v854
        %v874 = vpack.c.bf16 %v857, %v856
        %v875 = vpack.c.bf16 %v859, %v858
        %v892 = vunpack.c.l.b16 %v860
        %v893 = vunpack.c.h.b16 %v860
        %v894 = vunpack.c.l.b16 %v861
        %v895 = vunpack.c.h.b16 %v861
        %v896 = vunpack.c.l.b16 %v862
        %v897 = vunpack.c.h.b16 %v862
        %v898 = vunpack.c.l.b16 %v863
        %v899 = vunpack.c.h.b16 %v863
        %v900 = vunpack.c.l.b16 %v864
        %v901 = vunpack.c.h.b16 %v864
        %v902 = vunpack.c.l.b16 %v865
        %v903 = vunpack.c.h.b16 %v865
        %v904 = vunpack.c.l.b16 %v866
        %v905 = vunpack.c.h.b16 %v866
        %v906 = vunpack.c.l.b16 %v867
        %v907 = vunpack.c.h.b16 %v867
        %v908 = vunpack.c.l.b16 %v868
        %v909 = vunpack.c.h.b16 %v868
        %v910 = vunpack.c.l.b16 %v869
        %v911 = vunpack.c.h.b16 %v869
        %v912 = vunpack.c.l.b16 %v870
        %v913 = vunpack.c.h.b16 %v870
        %v914 = vunpack.c.l.b16 %v871
        %v915 = vunpack.c.h.b16 %v871
        %v916 = vunpack.c.l.b16 %v872
        %v917 = vunpack.c.h.b16 %v872
        %v918 = vunpack.c.l.b16 %v873
        %v919 = vunpack.c.h.b16 %v873
        %v920 = vunpack.c.l.b16 %v874
        %v921 = vunpack.c.h.b16 %v874
        %v922 = vunpack.c.l.b16 %v875
        %v923 = vunpack.c.h.b16 %v875
        %v924 = vpack.c.b16 %v892, %v892
        %v925 = vpack.c.b16 %v893, %v893
        %v926 = vpack.c.b16 %v894, %v894
        %v927 = vpack.c.b16 %v895, %v895
        %v928 = vpack.c.b16 %v896, %v896
        %v929 = vpack.c.b16 %v897, %v897
        %v930 = vpack.c.b16 %v898, %v898
        %v931 = vpack.c.b16 %v899, %v899
        %v932 = vpack.c.b16 %v900, %v900
        %v933 = vpack.c.b16 %v901, %v901
        %v934 = vpack.c.b16 %v902, %v902
        %v935 = vpack.c.b16 %v903, %v903
        %v936 = vpack.c.b16 %v904, %v904
        %v937 = vpack.c.b16 %v905, %v905
        %v938 = vpack.c.b16 %v906, %v906
        %v939 = vpack.c.b16 %v907, %v907
        %v940 = vpack.c.b16 %v908, %v908
        %v941 = vpack.c.b16 %v909, %v909
        %v942 = vpack.c.b16 %v910, %v910
        %v943 = vpack.c.b16 %v911, %v911
        %v944 = vpack.c.b16 %v912, %v912
        %v945 = vpack.c.b16 %v913, %v913
        %v946 = vpack.c.b16 %v914, %v914
        %v947 = vpack.c.b16 %v915, %v915
        %v948 = vpack.c.b16 %v916, %v916
        %v949 = vpack.c.b16 %v917, %v917
        %v950 = vpack.c.b16 %v918, %v918
        %v951 = vpack.c.b16 %v919, %v919
        %v952 = vpack.c.b16 %v920, %v920
        %v953 = vpack.c.b16 %v921, %v921
        %v954 = vpack.c.b16 %v922, %v922
        %v955 = vpack.c.b16 %v923, %v923
        %vm956 = vsmask.f32 256
        %vm957 = vsmask.f32 4368
        %vm958 = vmor %vm956, %vm957
        %v960 = vshrl.u32 %v924, 16
        %v962 = vrot.slane %v960, 7
        %v963 = vshll.u32 %v924, 16
        %v965 = vor.u32 %v962, %v963
        %v966 = vrot.slane %v962, 4
        %v968 = vshrl.u32 %v925, 16
        %v970 = vrot.slane %v968, 7
        %v971 = vshll.u32 %v925, 16
        %v973 = vor.u32 %v970, %v971
        %v974 = vsel %vm958, %v966, %v973
        %v975 = vrot.slane %v970, 4
        %v977 = vshrl.u32 %v926, 16
        %v979 = vrot.slane %v977, 7
        %v980 = vshll.u32 %v926, 16
        %v982 = vor.u32 %v979, %v980
        %v983 = vrot.slane %v979, 4
        %v985 = vshrl.u32 %v927, 16
        %v987 = vrot.slane %v985, 7
        %v988 = vshll.u32 %v927, 16
        %v990 = vor.u32 %v987, %v988
        %v991 = vsel %vm958, %v983, %v990
        %v992 = vrot.slane %v987, 4
        %v994 = vshrl.u32 %v928, 16
        %v996 = vrot.slane %v994, 7
        %v997 = vshll.u32 %v928, 16
        %v999 = vor.u32 %v996, %v997
        %v1000 = vrot.slane %v996, 4
        %v1002 = vshrl.u32 %v929, 16
        %v1004 = vrot.slane %v1002, 7
        %v1005 = vshll.u32 %v929, 16
        %v1007 = vor.u32 %v1004, %v1005
        %v1008 = vsel %vm958, %v1000, %v1007
        %v1009 = vrot.slane %v1004, 4
        %v1011 = vshrl.u32 %v930, 16
        %v1013 = vrot.slane %v1011, 7
        %v1014 = vshll.u32 %v930, 16
        %v1016 = vor.u32 %v1013, %v1014
        %v1017 = vrot.slane %v1013, 4
        %v1019 = vshrl.u32 %v931, 16
        %v1021 = vrot.slane %v1019, 7
        %v1022 = vshll.u32 %v931, 16
        %v1024 = vor.u32 %v1021, %v1022
        %v1025 = vsel %vm958, %v1017, %v1024
        %v1026 = vrot.slane %v1021, 4
        %v1028 = vshrl.u32 %v932, 16
        %v1030 = vrot.slane %v1028, 7
        %v1031 = vshll.u32 %v932, 16
        %v1033 = vor.u32 %v1030, %v1031
        %v1034 = vrot.slane %v1030, 4
        %v1036 = vshrl.u32 %v933, 16
        %v1038 = vrot.slane %v1036, 7
        %v1039 = vshll.u32 %v933, 16
        %v1041 = vor.u32 %v1038, %v1039
        %v1042 = vsel %vm958, %v1034, %v1041
        %v1043 = vrot.slane %v1038, 4
        %v1045 = vshrl.u32 %v934, 16
        %v1047 = vrot.slane %v1045, 7
        %v1048 = vshll.u32 %v934, 16
        %v1050 = vor.u32 %v1047, %v1048
        %v1051 = vrot.slane %v1047, 4
        %v1053 = vshrl.u32 %v935, 16
        %v1055 = vrot.slane %v1053, 7
        %v1056 = vshll.u32 %v935, 16
        %v1058 = vor.u32 %v1055, %v1056
        %v1059 = vsel %vm958, %v1051, %v1058
        %v1060 = vrot.slane %v1055, 4
        %v1062 = vshrl.u32 %v936, 16
        %v1064 = vrot.slane %v1062, 7
        %v1065 = vshll.u32 %v936, 16
        %v1067 = vor.u32 %v1064, %v1065
        %v1068 = vrot.slane %v1064, 4
        %v1070 = vshrl.u32 %v937, 16
        %v1072 = vrot.slane %v1070, 7
        %v1073 = vshll.u32 %v937, 16
        %v1075 = vor.u32 %v1072, %v1073
        %v1076 = vsel %vm958, %v1068, %v1075
        %v1077 = vrot.slane %v1072, 4
        %v1079 = vshrl.u32 %v938, 16
        %v1081 = vrot.slane %v1079, 7
        %v1082 = vshll.u32 %v938, 16
        %v1084 = vor.u32 %v1081, %v1082
        %v1085 = vrot.slane %v1081, 4
        %v1087 = vshrl.u32 %v939, 16
        %v1089 = vrot.slane %v1087, 7
        %v1090 = vshll.u32 %v939, 16
        %v1092 = vor.u32 %v1089, %v1090
        %v1093 = vsel %vm958, %v1085, %v1092
        %v1094 = vrot.slane %v1089, 4
        %v1096 = vshrl.u32 %v940, 16
        %v1098 = vrot.slane %v1096, 7
        %v1099 = vshll.u32 %v940, 16
        %v1101 = vor.u32 %v1098, %v1099
        %v1102 = vrot.slane %v1098, 4
        %v1104 = vshrl.u32 %v941, 16
        %v1106 = vrot.slane %v1104, 7
        %v1107 = vshll.u32 %v941, 16
        %v1109 = vor.u32 %v1106, %v1107
        %v1110 = vsel %vm958, %v1102, %v1109
        %v1111 = vrot.slane %v1106, 4
        %v1113 = vshrl.u32 %v942, 16
        %v1115 = vrot.slane %v1113, 7
        %v1116 = vshll.u32 %v942, 16
        %v1118 = vor.u32 %v1115, %v1116
        %v1119 = vrot.slane %v1115, 4
        %v1121 = vshrl.u32 %v943, 16
        %v1123 = vrot.slane %v1121, 7
        %v1124 = vshll.u32 %v943, 16
        %v1126 = vor.u32 %v1123, %v1124
        %v1127 = vsel %vm958, %v1119, %v1126
        %v1128 = vrot.slane %v1123, 4
        %v1130 = vshrl.u32 %v944, 16
        %v1132 = vrot.slane %v1130, 7
        %v1133 = vshll.u32 %v944, 16
        %v1135 = vor.u32 %v1132, %v1133
        %v1136 = vrot.slane %v1132, 4
        %v1138 = vshrl.u32 %v945, 16
        %v1140 = vrot.slane %v1138, 7
        %v1141 = vshll.u32 %v945, 16
        %v1143 = vor.u32 %v1140, %v1141
        %v1144 = vsel %vm958, %v1136, %v1143
        %v1145 = vrot.slane %v1140, 4
        %v1147 = vshrl.u32 %v946, 16
        %v1149 = vrot.slane %v1147, 7
        %v1150 = vshll.u32 %v946, 16
        %v1152 = vor.u32 %v1149, %v1150
        %v1153 = vrot.slane %v1149, 4
        %v1155 = vshrl.u32 %v947, 16
        %v1157 = vrot.slane %v1155, 7
        %v1158 = vshll.u32 %v947, 16
        %v1160 = vor.u32 %v1157, %v1158
        %v1161 = vsel %vm958, %v1153, %v1160
        %v1162 = vrot.slane %v1157, 4
        %v1164 = vshrl.u32 %v948, 16
        %v1166 = vrot.slane %v1164, 7
        %v1167 = vshll.u32 %v948, 16
        %v1169 = vor.u32 %v1166, %v1167
        %v1170 = vrot.slane %v1166, 4
        %v1172 = vshrl.u32 %v949, 16
        %v1174 = vrot.slane %v1172, 7
        %v1175 = vshll.u32 %v949, 16
        %v1177 = vor.u32 %v1174, %v1175
        %v1178 = vsel %vm958, %v1170, %v1177
        %v1179 = vrot.slane %v1174, 4
        %v1181 = vshrl.u32 %v950, 16
        %v1183 = vrot.slane %v1181, 7
        %v1184 = vshll.u32 %v950, 16
        %v1186 = vor.u32 %v1183, %v1184
        %v1187 = vrot.slane %v1183, 4
        %v1189 = vshrl.u32 %v951, 16
        %v1191 = vrot.slane %v1189, 7
        %v1192 = vshll.u32 %v951, 16
        %v1194 = vor.u32 %v1191, %v1192
        %v1195 = vsel %vm958, %v1187, %v1194
        %v1196 = vrot.slane %v1191, 4
        %v1198 = vshrl.u32 %v952, 16
        %v1200 = vrot.slane %v1198, 7
        %v1201 = vshll.u32 %v952, 16
        %v1203 = vor.u32 %v1200, %v1201
        %v1204 = vrot.slane %v1200, 4
        %v1206 = vshrl.u32 %v953, 16
        %v1208 = vrot.slane %v1206, 7
        %v1209 = vshll.u32 %v953, 16
        %v1211 = vor.u32 %v1208, %v1209
        %v1212 = vsel %vm958, %v1204, %v1211
        %v1213 = vrot.slane %v1208, 4
        %v1215 = vshrl.u32 %v954, 16
        %v1217 = vrot.slane %v1215, 7
        %v1218 = vshll.u32 %v954, 16
        %v1220 = vor.u32 %v1217, %v1218
        %v1221 = vrot.slane %v1217, 4
        %v1223 = vshrl.u32 %v955, 16
        %v1225 = vrot.slane %v1223, 7
        %v1226 = vshll.u32 %v955, 16
        %v1228 = vor.u32 %v1225, %v1226
        %v1229 = vsel %vm958, %v1221, %v1228
        %v1230 = vrot.slane %v1225, 4
        %s1279 = scalar_lea.vmem [#allocation2], 12
        %vm1280 = vcmask 1043456
        %vm1281 = vsmask.f32 7938
        %vm1282 = vmand %vm1280, %vm1281
        %v1283 = vld [vmem:[%s1279] sm:$0xf]
        %v1284 = vsel %vm1282, %v965, %v1283
        %1285 = vst [vmem:[%s1279] sm:$0xf] %v1284
        %1286 = vst [vmem:[%s1279 + $0x4] sm:$0xf] %v974
        %vm1287 = vcmask 1040384
        %vm1288 = vmand %vm1287, %vm956
        %v1289 = vld [vmem:[%s1279 + $0x8] sm:$0x1]
        %v1290 = vsel %vm1288, %v975, %v1289
        %1291 = vst [vmem:[%s1279 + $0x8] sm:$0x1] %v1290
        %v1292 = vld [vmem:[%s1279 + $0xc] sm:$0xf]
        %v1293 = vsel %vm1282, %v982, %v1292
        %1294 = vst [vmem:[%s1279 + $0xc] sm:$0xf] %v1293
        %1295 = vst [vmem:[%s1279 + $0x10] sm:$0xf] %v991
        %v1296 = vld [vmem:[%s1279 + $0x14] sm:$0x1]
        %v1297 = vsel %vm1288, %v992, %v1296
        %1298 = vst [vmem:[%s1279 + $0x14] sm:$0x1] %v1297
        %v1299 = vld [vmem:[%s1279 + $0x18] sm:$0xf]
        %v1300 = vsel %vm1282, %v999, %v1299
        %1301 = vst [vmem:[%s1279 + $0x18] sm:$0xf] %v1300
        %1302 = vst [vmem:[%s1279 + $0x1c] sm:$0xf] %v1008
        %v1303 = vld [vmem:[%s1279 + $0x20] sm:$0x1]
        %v1304 = vsel %vm1288, %v1009, %v1303
        %1305 = vst [vmem:[%s1279 + $0x20] sm:$0x1] %v1304
        %v1306 = vld [vmem:[%s1279 + $0x24] sm:$0xf]
        %v1307 = vsel %vm1282, %v1016, %v1306
        %1308 = vst [vmem:[%s1279 + $0x24] sm:$0xf] %v1307
        %1309 = vst [vmem:[%s1279 + $0x28] sm:$0xf] %v1025
        %v1310 = vld [vmem:[%s1279 + $0x2c] sm:$0x1]
        %v1311 = vsel %vm1288, %v1026, %v1310
        %1312 = vst [vmem:[%s1279 + $0x2c] sm:$0x1] %v1311
        %v1313 = vld [vmem:[%s1279 + $0x30] sm:$0xf]
        %v1314 = vsel %vm1282, %v1033, %v1313
        %1315 = vst [vmem:[%s1279 + $0x30] sm:$0xf] %v1314
        %1316 = vst [vmem:[%s1279 + $0x34] sm:$0xf] %v1042
        %v1317 = vld [vmem:[%s1279 + $0x38] sm:$0x1]
        %v1318 = vsel %vm1288, %v1043, %v1317
        %1319 = vst [vmem:[%s1279 + $0x38] sm:$0x1] %v1318
        %v1320 = vld [vmem:[%s1279 + $0x3c] sm:$0xf]
        %v1321 = vsel %vm1282, %v1050, %v1320
        %1322 = vst [vmem:[%s1279 + $0x3c] sm:$0xf] %v1321
        %1323 = vst [vmem:[%s1279 + $0x40] sm:$0xf] %v1059
        %v1324 = vld [vmem:[%s1279 + $0x44] sm:$0x1]
        %v1325 = vsel %vm1288, %v1060, %v1324
        %1326 = vst [vmem:[%s1279 + $0x44] sm:$0x1] %v1325
        %v1327 = vld [vmem:[%s1279 + $0x48] sm:$0xf]
        %v1328 = vsel %vm1282, %v1067, %v1327
        %1329 = vst [vmem:[%s1279 + $0x48] sm:$0xf] %v1328
        %1330 = vst [vmem:[%s1279 + $0x4c] sm:$0xf] %v1076
        %v1331 = vld [vmem:[%s1279 + $0x50] sm:$0x1]
        %v1332 = vsel %vm1288, %v1077, %v1331
        %1333 = vst [vmem:[%s1279 + $0x50] sm:$0x1] %v1332
        %v1334 = vld [vmem:[%s1279 + $0x54] sm:$0xf]
        %v1335 = vsel %vm1282, %v1084, %v1334
        %1336 = vst [vmem:[%s1279 + $0x54] sm:$0xf] %v1335
        %1337 = vst [vmem:[%s1279 + $0x58] sm:$0xf] %v1093
        %v1338 = vld [vmem:[%s1279 + $0x5c] sm:$0x1]
        %v1339 = vsel %vm1288, %v1094, %v1338
        %1340 = vst [vmem:[%s1279 + $0x5c] sm:$0x1] %v1339
        %v1341 = vld [vmem:[%s1279 + $0x60] sm:$0xf]
        %v1342 = vsel %vm1282, %v1101, %v1341
        %1343 = vst [vmem:[%s1279 + $0x60] sm:$0xf] %v1342
        %1344 = vst [vmem:[%s1279 + $0x64] sm:$0xf] %v1110
        %v1345 = vld [vmem:[%s1279 + $0x68] sm:$0x1]
        %v1346 = vsel %vm1288, %v1111, %v1345
        %1347 = vst [vmem:[%s1279 + $0x68] sm:$0x1] %v1346
        %v1348 = vld [vmem:[%s1279 + $0x6c] sm:$0xf]
        %v1349 = vsel %vm1282, %v1118, %v1348
        %1350 = vst [vmem:[%s1279 + $0x6c] sm:$0xf] %v1349
        %1351 = vst [vmem:[%s1279 + $0x70] sm:$0xf] %v1127
        %v1352 = vld [vmem:[%s1279 + $0x74] sm:$0x1]
        %v1353 = vsel %vm1288, %v1128, %v1352
        %1354 = vst [vmem:[%s1279 + $0x74] sm:$0x1] %v1353
        %v1355 = vld [vmem:[%s1279 + $0x78] sm:$0xf]
        %v1356 = vsel %vm1282, %v1135, %v1355
        %1357 = vst [vmem:[%s1279 + $0x78] sm:$0xf] %v1356
        %1358 = vst [vmem:[%s1279 + $0x7c] sm:$0xf] %v1144
        %v1359 = vld [vmem:[%s1279 + $0x80] sm:$0x1]
        %v1360 = vsel %vm1288, %v1145, %v1359
        %1361 = vst [vmem:[%s1279 + $0x80] sm:$0x1] %v1360
        %v1362 = vld [vmem:[%s1279 + $0x84] sm:$0xf]
        %v1363 = vsel %vm1282, %v1152, %v1362
        %1364 = vst [vmem:[%s1279 + $0x84] sm:$0xf] %v1363
        %1365 = vst [vmem:[%s1279 + $0x88] sm:$0xf] %v1161
        %v1366 = vld [vmem:[%s1279 + $0x8c] sm:$0x1]
        %v1367 = vsel %vm1288, %v1162, %v1366
        %1368 = vst [vmem:[%s1279 + $0x8c] sm:$0x1] %v1367
        %v1369 = vld [vmem:[%s1279 + $0x90] sm:$0xf]
        %v1370 = vsel %vm1282, %v1169, %v1369
        %1371 = vst [vmem:[%s1279 + $0x90] sm:$0xf] %v1370
        %1372 = vst [vmem:[%s1279 + $0x94] sm:$0xf] %v1178
        %v1373 = vld [vmem:[%s1279 + $0x98] sm:$0x1]
        %v1374 = vsel %vm1288, %v1179, %v1373
        %1375 = vst [vmem:[%s1279 + $0x98] sm:$0x1] %v1374
        %v1376 = vld [vmem:[%s1279 + $0x9c] sm:$0xf]
        %v1377 = vsel %vm1282, %v1186, %v1376
        %1378 = vst [vmem:[%s1279 + $0x9c] sm:$0xf] %v1377
        %1379 = vst [vmem:[%s1279 + $0xa0] sm:$0xf] %v1195
        %v1380 = vld [vmem:[%s1279 + $0xa4] sm:$0x1]
        %v1381 = vsel %vm1288, %v1196, %v1380
        %1382 = vst [vmem:[%s1279 + $0xa4] sm:$0x1] %v1381
        %v1383 = vld [vmem:[%s1279 + $0xa8] sm:$0xf]
        %v1384 = vsel %vm1282, %v1203, %v1383
        %1385 = vst [vmem:[%s1279 + $0xa8] sm:$0xf] %v1384
        %1386 = vst [vmem:[%s1279 + $0xac] sm:$0xf] %v1212
        %v1387 = vld [vmem:[%s1279 + $0xb0] sm:$0x1]
        %v1388 = vsel %vm1288, %v1213, %v1387
        %1389 = vst [vmem:[%s1279 + $0xb0] sm:$0x1] %v1388
        %v1390 = vld [vmem:[%s1279 + $0xb4] sm:$0xf]
        %v1391 = vsel %vm1282, %v1220, %v1390
        %1392 = vst [vmem:[%s1279 + $0xb4] sm:$0xf] %v1391
        %1393 = vst [vmem:[%s1279 + $0xb8] sm:$0xf] %v1229
        %v1394 = vld [vmem:[%s1279 + $0xbc] sm:$0x1]
        %v1395 = vsel %vm1288, %v1230, %v1394
        %1396 = vst [vmem:[%s1279 + $0xbc] sm:$0x1] %v1395
        %v1397 = vld [vmem:[#allocation2] sm:$0xf]
        %v1398 = vld [vmem:[#allocation2 + $0x4] sm:$0xf]
        %v1399 = vld [vmem:[#allocation2 + $0x8] sm:$0x1]
        %v1400 = vld [vmem:[#allocation2 + $0xc] sm:$0xf]
        %v1401 = vld [vmem:[#allocation2 + $0x10] sm:$0xf]
        %v1402 = vld [vmem:[#allocation2 + $0x14] sm:$0x1]
        %v1403 = vld [vmem:[#allocation2 + $0x18] sm:$0xf]
        %v1404 = vld [vmem:[#allocation2 + $0x1c] sm:$0xf]
        %v1405 = vld [vmem:[#allocation2 + $0x20] sm:$0x1]
        %v1406 = vld [vmem:[#allocation2 + $0x24] sm:$0xf]
        %v1407 = vld [vmem:[#allocation2 + $0x28] sm:$0xf]
        %v1408 = vld [vmem:[#allocation2 + $0x2c] sm:$0x1]
        %v1409 = vld [vmem:[#allocation2 + $0x30] sm:$0xf]
        %v1410 = vld [vmem:[#allocation2 + $0x34] sm:$0xf]
        %v1411 = vld [vmem:[#allocation2 + $0x38] sm:$0x1]
        %v1412 = vld [vmem:[#allocation2 + $0x3c] sm:$0xf]
        %v1413 = vld [vmem:[#allocation2 + $0x40] sm:$0xf]
        %v1414 = vld [vmem:[#allocation2 + $0x44] sm:$0x1]
        %v1415 = vld [vmem:[#allocation2 + $0x48] sm:$0xf]
        %v1416 = vld [vmem:[#allocation2 + $0x4c] sm:$0xf]
        %v1417 = vld [vmem:[#allocation2 + $0x50] sm:$0x1]
        %v1418 = vld [vmem:[#allocation2 + $0x54] sm:$0xf]
        %v1419 = vld [vmem:[#allocation2 + $0x58] sm:$0xf]
        %v1420 = vld [vmem:[#allocation2 + $0x5c] sm:$0x1]
        %v1421 = vld [vmem:[#allocation2 + $0x60] sm:$0xf]
        %v1422 = vld [vmem:[#allocation2 + $0x64] sm:$0xf]
        %v1423 = vld [vmem:[#allocation2 + $0x68] sm:$0x1]
        %v1424 = vld [vmem:[#allocation2 + $0x6c] sm:$0xf]
        %v1425 = vld [vmem:[#allocation2 + $0x70] sm:$0xf]
        %v1426 = vld [vmem:[#allocation2 + $0x74] sm:$0x1]
        %v1427 = vld [vmem:[#allocation2 + $0x78] sm:$0xf]
        %v1428 = vld [vmem:[#allocation2 + $0x7c] sm:$0xf]
        %v1429 = vld [vmem:[#allocation2 + $0x80] sm:$0x1]
        %v1430 = vld [vmem:[#allocation2 + $0x84] sm:$0xf]
        %v1431 = vld [vmem:[#allocation2 + $0x88] sm:$0xf]
        %v1432 = vld [vmem:[#allocation2 + $0x8c] sm:$0x1]
        %v1433 = vld [vmem:[#allocation2 + $0x90] sm:$0xf]
        %v1434 = vld [vmem:[#allocation2 + $0x94] sm:$0xf]
        %v1435 = vld [vmem:[#allocation2 + $0x98] sm:$0x1]
        %v1436 = vld [vmem:[#allocation2 + $0x9c] sm:$0xf]
        %v1437 = vld [vmem:[#allocation2 + $0xa0] sm:$0xf]
        %v1438 = vld [vmem:[#allocation2 + $0xa4] sm:$0x1]
        %v1439 = vld [vmem:[#allocation2 + $0xa8] sm:$0xf]
        %v1440 = vld [vmem:[#allocation2 + $0xac] sm:$0xf]
        %v1441 = vld [vmem:[#allocation2 + $0xb0] sm:$0x1]
        %v1442 = vld [vmem:[#allocation2 + $0xb4] sm:$0xf]
        %v1443 = vld [vmem:[#allocation2 + $0xb8] sm:$0xf]
        %v1444 = vld [vmem:[#allocation2 + $0xbc] sm:$0x1]
        %v1477 = vunpack.c.l.b16 %v1397
        %v1478 = vunpack.c.l.b16 %v1398
        %v1479 = vunpack.c.l.b16 %v1400
        %v1480 = vunpack.c.l.b16 %v1401
        %v1481 = vunpack.c.l.b16 %v1403
        %v1482 = vunpack.c.l.b16 %v1404
        %v1483 = vunpack.c.l.b16 %v1406
        %v1484 = vunpack.c.l.b16 %v1407
        %v1485 = vunpack.c.l.b16 %v1409
        %v1486 = vunpack.c.l.b16 %v1410
        %v1487 = vunpack.c.l.b16 %v1412
        %v1488 = vunpack.c.l.b16 %v1413
        %v1489 = vunpack.c.l.b16 %v1415
        %v1490 = vunpack.c.l.b16 %v1416
        %v1491 = vunpack.c.l.b16 %v1418
        %v1492 = vunpack.c.l.b16 %v1419
        %v1493 = vunpack.c.l.b16 %v1421
        %v1494 = vunpack.c.l.b16 %v1422
        %v1495 = vunpack.c.l.b16 %v1424
        %v1496 = vunpack.c.l.b16 %v1425
        %v1497 = vunpack.c.l.b16 %v1427
        %v1498 = vunpack.c.l.b16 %v1428
        %v1499 = vunpack.c.l.b16 %v1430
        %v1500 = vunpack.c.l.b16 %v1431
        %v1501 = vunpack.c.l.b16 %v1433
        %v1502 = vunpack.c.l.b16 %v1434
        %v1503 = vunpack.c.l.b16 %v1436
        %v1504 = vunpack.c.l.b16 %v1437
        %v1505 = vunpack.c.l.b16 %v1439
        %v1506 = vunpack.c.l.b16 %v1440
        %v1507 = vunpack.c.l.b16 %v1442
        %v1508 = vunpack.c.l.b16 %v1443
        %v1509 = vpack.c.b16 %v1478, %v1477
        %v1510 = vpack.c.b16 %v1480, %v1479
        %v1511 = vpack.c.b16 %v1482, %v1481
        %v1512 = vpack.c.b16 %v1484, %v1483
        %v1513 = vpack.c.b16 %v1486, %v1485
        %v1514 = vpack.c.b16 %v1488, %v1487
        %v1515 = vpack.c.b16 %v1490, %v1489
        %v1516 = vpack.c.b16 %v1492, %v1491
        %v1517 = vpack.c.b16 %v1494, %v1493
        %v1518 = vpack.c.b16 %v1496, %v1495
        %v1519 = vpack.c.b16 %v1498, %v1497
        %v1520 = vpack.c.b16 %v1500, %v1499
        %v1521 = vpack.c.b16 %v1502, %v1501
        %v1522 = vpack.c.b16 %v1504, %v1503
        %v1523 = vpack.c.b16 %v1506, %v1505
        %v1524 = vpack.c.b16 %v1508, %v1507
        %v1557 = vunpack.c.l.b16 %v1399
        %v1558 = vunpack.c.l.b16 %v1402
        %v1559 = vunpack.c.l.b16 %v1405
        %v1560 = vunpack.c.l.b16 %v1408
        %v1561 = vunpack.c.l.b16 %v1411
        %v1562 = vunpack.c.l.b16 %v1414
        %v1563 = vunpack.c.l.b16 %v1417
        %v1564 = vunpack.c.l.b16 %v1420
        %v1565 = vunpack.c.l.b16 %v1423
        %v1566 = vunpack.c.l.b16 %v1426
        %v1567 = vunpack.c.l.b16 %v1429
        %v1568 = vunpack.c.l.b16 %v1432
        %v1569 = vunpack.c.l.b16 %v1435
        %v1570 = vunpack.c.l.b16 %v1438
        %v1571 = vunpack.c.l.b16 %v1441
        %v1572 = vunpack.c.l.b16 %v1444
        %v1573 = vpack.c.b16 %v1557, %v1557
        %v1574 = vpack.c.b16 %v1558, %v1558
        %v1575 = vpack.c.b16 %v1559, %v1559
        %v1576 = vpack.c.b16 %v1560, %v1560
        %v1577 = vpack.c.b16 %v1561, %v1561
        %v1578 = vpack.c.b16 %v1562, %v1562
        %v1579 = vpack.c.b16 %v1563, %v1563
        %v1580 = vpack.c.b16 %v1564, %v1564
        %v1581 = vpack.c.b16 %v1565, %v1565
        %v1582 = vpack.c.b16 %v1566, %v1566
        %v1583 = vpack.c.b16 %v1567, %v1567
        %v1584 = vpack.c.b16 %v1568, %v1568
        %v1585 = vpack.c.b16 %v1569, %v1569
        %v1586 = vpack.c.b16 %v1570, %v1570
        %v1587 = vpack.c.b16 %v1571, %v1571
        %v1588 = vpack.c.b16 %v1572, %v1572
        %vm1589 = vsmask.f32 7424
        %v1591 = vshrl.u32 %v1509, 16
        %v1593 = vshll.u32 %v1509, 16
        %v1595 = vrot.slane %v1593, 1
        %v1596 = vor.u32 %v1591, %v1595
        %v1598 = vshll.u32 %v1573, 16
        %v1600 = vrot.slane %v1598, 1
        %v1601 = vsel %vm1589, %v1596, %v1600
        %v1603 = vshrl.u32 %v1510, 16
        %v1605 = vshll.u32 %v1510, 16
        %v1607 = vrot.slane %v1605, 1
        %v1608 = vor.u32 %v1603, %v1607
        %v1610 = vshll.u32 %v1574, 16
        %v1612 = vrot.slane %v1610, 1
        %v1613 = vsel %vm1589, %v1608, %v1612
        %v1615 = vshrl.u32 %v1511, 16
        %v1617 = vshll.u32 %v1511, 16
        %v1619 = vrot.slane %v1617, 1
        %v1620 = vor.u32 %v1615, %v1619
        %v1622 = vshll.u32 %v1575, 16
        %v1624 = vrot.slane %v1622, 1
        %v1625 = vsel %vm1589, %v1620, %v1624
        %v1627 = vshrl.u32 %v1512, 16
        %v1629 = vshll.u32 %v1512, 16
        %v1631 = vrot.slane %v1629, 1
        %v1632 = vor.u32 %v1627, %v1631
        %v1634 = vshll.u32 %v1576, 16
        %v1636 = vrot.slane %v1634, 1
        %v1637 = vsel %vm1589, %v1632, %v1636
        %v1639 = vshrl.u32 %v1513, 16
        %v1641 = vshll.u32 %v1513, 16
        %v1643 = vrot.slane %v1641, 1
        %v1644 = vor.u32 %v1639, %v1643
        %v1646 = vshll.u32 %v1577, 16
        %v1648 = vrot.slane %v1646, 1
        %v1649 = vsel %vm1589, %v1644, %v1648
        %v1651 = vshrl.u32 %v1514, 16
        %v1653 = vshll.u32 %v1514, 16
        %v1655 = vrot.slane %v1653, 1
        %v1656 = vor.u32 %v1651, %v1655
        %v1658 = vshll.u32 %v1578, 16
        %v1660 = vrot.slane %v1658, 1
        %v1661 = vsel %vm1589, %v1656, %v1660
        %v1663 = vshrl.u32 %v1515, 16
        %v1665 = vshll.u32 %v1515, 16
        %v1667 = vrot.slane %v1665, 1
        %v1668 = vor.u32 %v1663, %v1667
        %v1670 = vshll.u32 %v1579, 16
        %v1672 = vrot.slane %v1670, 1
        %v1673 = vsel %vm1589, %v1668, %v1672
        %v1675 = vshrl.u32 %v1516, 16
        %v1677 = vshll.u32 %v1516, 16
        %v1679 = vrot.slane %v1677, 1
        %v1680 = vor.u32 %v1675, %v1679
        %v1682 = vshll.u32 %v1580, 16
        %v1684 = vrot.slane %v1682, 1
        %v1685 = vsel %vm1589, %v1680, %v1684
        %v1687 = vshrl.u32 %v1517, 16
        %v1689 = vshll.u32 %v1517, 16
        %v1691 = vrot.slane %v1689, 1
        %v1692 = vor.u32 %v1687, %v1691
        %v1694 = vshll.u32 %v1581, 16
        %v1696 = vrot.slane %v1694, 1
        %v1697 = vsel %vm1589, %v1692, %v1696
        %v1699 = vshrl.u32 %v1518, 16
        %v1701 = vshll.u32 %v1518, 16
        %v1703 = vrot.slane %v1701, 1
        %v1704 = vor.u32 %v1699, %v1703
        %v1706 = vshll.u32 %v1582, 16
        %v1708 = vrot.slane %v1706, 1
        %v1709 = vsel %vm1589, %v1704, %v1708
        %v1711 = vshrl.u32 %v1519, 16
        %v1713 = vshll.u32 %v1519, 16
        %v1715 = vrot.slane %v1713, 1
        %v1716 = vor.u32 %v1711, %v1715
        %v1718 = vshll.u32 %v1583, 16
        %v1720 = vrot.slane %v1718, 1
        %v1721 = vsel %vm1589, %v1716, %v1720
        %v1723 = vshrl.u32 %v1520, 16
        %v1725 = vshll.u32 %v1520, 16
        %v1727 = vrot.slane %v1725, 1
        %v1728 = vor.u32 %v1723, %v1727
        %v1730 = vshll.u32 %v1584, 16
        %v1732 = vrot.slane %v1730, 1
        %v1733 = vsel %vm1589, %v1728, %v1732
        %v1735 = vshrl.u32 %v1521, 16
        %v1737 = vshll.u32 %v1521, 16
        %v1739 = vrot.slane %v1737, 1
        %v1740 = vor.u32 %v1735, %v1739
        %v1742 = vshll.u32 %v1585, 16
        %v1744 = vrot.slane %v1742, 1
        %v1745 = vsel %vm1589, %v1740, %v1744
        %v1747 = vshrl.u32 %v1522, 16
        %v1749 = vshll.u32 %v1522, 16
        %v1751 = vrot.slane %v1749, 1
        %v1752 = vor.u32 %v1747, %v1751
        %v1754 = vshll.u32 %v1586, 16
        %v1756 = vrot.slane %v1754, 1
        %v1757 = vsel %vm1589, %v1752, %v1756
        %v1759 = vshrl.u32 %v1523, 16
        %v1761 = vshll.u32 %v1523, 16
        %v1763 = vrot.slane %v1761, 1
        %v1764 = vor.u32 %v1759, %v1763
        %v1766 = vshll.u32 %v1587, 16
        %v1768 = vrot.slane %v1766, 1
        %v1769 = vsel %vm1589, %v1764, %v1768
        %v1771 = vshrl.u32 %v1524, 16
        %v1773 = vshll.u32 %v1524, 16
        %v1775 = vrot.slane %v1773, 1
        %v1776 = vor.u32 %v1771, %v1775
        %v1778 = vshll.u32 %v1588, 16
        %v1780 = vrot.slane %v1778, 1
        %v1781 = vsel %vm1589, %v1776, %v1780
        %vm1798 = vcmask 1046528
        %v1799 = vrot.slane %v1509, 1
        %v1800 = vrot.slane %v1573, 1
        %v1801 = vsel %vm1798, %v1799, %v1800
        %v1802 = vrot.slane %v1510, 1
        %v1803 = vrot.slane %v1574, 1
        %v1804 = vsel %vm1798, %v1802, %v1803
        %v1805 = vrot.slane %v1511, 1
        %v1806 = vrot.slane %v1575, 1
        %v1807 = vsel %vm1798, %v1805, %v1806
        %v1808 = vrot.slane %v1512, 1
        %v1809 = vrot.slane %v1576, 1
        %v1810 = vsel %vm1798, %v1808, %v1809
        %v1811 = vrot.slane %v1513, 1
        %v1812 = vrot.slane %v1577, 1
        %v1813 = vsel %vm1798, %v1811, %v1812
        %v1814 = vrot.slane %v1514, 1
        %v1815 = vrot.slane %v1578, 1
        %v1816 = vsel %vm1798, %v1814, %v1815
        %v1817 = vrot.slane %v1515, 1
        %v1818 = vrot.slane %v1579, 1
        %v1819 = vsel %vm1798, %v1817, %v1818
        %v1820 = vrot.slane %v1516, 1
        %v1821 = vrot.slane %v1580, 1
        %v1822 = vsel %vm1798, %v1820, %v1821
        %v1823 = vrot.slane %v1517, 1
        %v1824 = vrot.slane %v1581, 1
        %v1825 = vsel %vm1798, %v1823, %v1824
        %v1826 = vrot.slane %v1518, 1
        %v1827 = vrot.slane %v1582, 1
        %v1828 = vsel %vm1798, %v1826, %v1827
        %v1829 = vrot.slane %v1519, 1
        %v1830 = vrot.slane %v1583, 1
        %v1831 = vsel %vm1798, %v1829, %v1830
        %v1832 = vrot.slane %v1520, 1
        %v1833 = vrot.slane %v1584, 1
        %v1834 = vsel %vm1798, %v1832, %v1833
        %v1835 = vrot.slane %v1521, 1
        %v1836 = vrot.slane %v1585, 1
        %v1837 = vsel %vm1798, %v1835, %v1836
        %v1838 = vrot.slane %v1522, 1
        %v1839 = vrot.slane %v1586, 1
        %v1840 = vsel %vm1798, %v1838, %v1839
        %v1841 = vrot.slane %v1523, 1
        %v1842 = vrot.slane %v1587, 1
        %v1843 = vsel %vm1798, %v1841, %v1842
        %v1844 = vrot.slane %v1524, 1
        %v1845 = vrot.slane %v1588, 1
        %v1846 = vsel %vm1798, %v1844, %v1845
        %v1863 = vld [vmem:[#allocation8] sm:$0xf]
        %v1864 = vld [vmem:[#allocation8 + $0x4] sm:$0xf]
        %v1865 = vld [vmem:[#allocation8 + $0x8] sm:$0xf]
        %v1866 = vld [vmem:[#allocation8 + $0xc] sm:$0xf]
        %v1867 = vld [vmem:[#allocation8 + $0x10] sm:$0xf]
        %v1868 = vld [vmem:[#allocation8 + $0x14] sm:$0xf]
        %v1869 = vld [vmem:[#allocation8 + $0x18] sm:$0xf]
        %v1870 = vld [vmem:[#allocation8 + $0x1c] sm:$0xf]
        %v1871 = vld [vmem:[#allocation8 + $0x20] sm:$0xf]
        %v1872 = vld [vmem:[#allocation8 + $0x24] sm:$0xf]
        %v1873 = vld [vmem:[#allocation8 + $0x28] sm:$0xf]
        %v1874 = vld [vmem:[#allocation8 + $0x2c] sm:$0xf]
        %v1875 = vld [vmem:[#allocation8 + $0x30] sm:$0xf]
        %v1876 = vld [vmem:[#allocation8 + $0x34] sm:$0xf]
        %v1877 = vld [vmem:[#allocation8 + $0x38] sm:$0xf]
        %v1878 = vld [vmem:[#allocation8 + $0x3c] sm:$0xf]
        %v1879 = vld [vmem:[#allocation8 + $0x40] sm:$0xf]
        %v1880 = vld [vmem:[#allocation8 + $0x44] sm:$0xf]
        %v1881 = vld [vmem:[#allocation8 + $0x48] sm:$0xf]
        %v1882 = vld [vmem:[#allocation8 + $0x4c] sm:$0xf]
        %v1883 = vld [vmem:[#allocation8 + $0x50] sm:$0xf]
        %v1884 = vld [vmem:[#allocation8 + $0x54] sm:$0xf]
        %v1885 = vld [vmem:[#allocation8 + $0x58] sm:$0xf]
        %v1886 = vld [vmem:[#allocation8 + $0x5c] sm:$0xf]
        %v1887 = vld [vmem:[#allocation8 + $0x60] sm:$0xf]
        %v1888 = vld [vmem:[#allocation8 + $0x64] sm:$0xf]
        %v1889 = vld [vmem:[#allocation8 + $0x68] sm:$0xf]
        %v1890 = vld [vmem:[#allocation8 + $0x6c] sm:$0xf]
        %v1891 = vld [vmem:[#allocation8 + $0x70] sm:$0xf]
        %v1892 = vld [vmem:[#allocation8 + $0x74] sm:$0xf]
        %v1893 = vld [vmem:[#allocation8 + $0x78] sm:$0xf]
        %v1894 = vld [vmem:[#allocation8 + $0x7c] sm:$0xf]
        %v1895 = vld [vmem:[#allocation8 + $0x80] sm:$0xf]
        %v1896 = vld [vmem:[#allocation8 + $0x84] sm:$0xf]
        %v1897 = vld [vmem:[#allocation8 + $0x88] sm:$0xf]
        %v1898 = vld [vmem:[#allocation8 + $0x8c] sm:$0xf]
        %v1899 = vld [vmem:[#allocation8 + $0x90] sm:$0xf]
        %v1900 = vld [vmem:[#allocation8 + $0x94] sm:$0xf]
        %v1901 = vld [vmem:[#allocation8 + $0x98] sm:$0xf]
        %v1902 = vld [vmem:[#allocation8 + $0x9c] sm:$0xf]
        %v1903 = vld [vmem:[#allocation8 + $0xa0] sm:$0xf]
        %v1904 = vld [vmem:[#allocation8 + $0xa4] sm:$0xf]
        %v1905 = vld [vmem:[#allocation8 + $0xa8] sm:$0xf]
        %v1906 = vld [vmem:[#allocation8 + $0xac] sm:$0xf]
        %v1907 = vld [vmem:[#allocation8 + $0xb0] sm:$0xf]
        %v1908 = vld [vmem:[#allocation8 + $0xb4] sm:$0xf]
        %v1909 = vld [vmem:[#allocation8 + $0xb8] sm:$0xf]
        %v1910 = vld [vmem:[#allocation8 + $0xbc] sm:$0xf]
        %v1911 = vld [vmem:[%s1279] sm:$0xf]
        %v1912 = vld [vmem:[%s1279 + $0x4] sm:$0xf]
        %v1913 = vld [vmem:[%s1279 + $0x8] sm:$0x1]
        %v1914 = vld [vmem:[%s1279 + $0xc] sm:$0xf]
        %v1915 = vld [vmem:[%s1279 + $0x10] sm:$0xf]
        %v1916 = vld [vmem:[%s1279 + $0x14] sm:$0x1]
        %v1917 = vld [vmem:[%s1279 + $0x18] sm:$0xf]
        %v1918 = vld [vmem:[%s1279 + $0x1c] sm:$0xf]
        %v1919 = vld [vmem:[%s1279 + $0x20] sm:$0x1]
        %v1920 = vld [vmem:[%s1279 + $0x24] sm:$0xf]
        %v1921 = vld [vmem:[%s1279 + $0x28] sm:$0xf]
        %v1922 = vld [vmem:[%s1279 + $0x2c] sm:$0x1]
        %v1923 = vld [vmem:[%s1279 + $0x30] sm:$0xf]
        %v1924 = vld [vmem:[%s1279 + $0x34] sm:$0xf]
        %v1925 = vld [vmem:[%s1279 + $0x38] sm:$0x1]
        %v1926 = vld [vmem:[%s1279 + $0x3c] sm:$0xf]
        %v1927 = vld [vmem:[%s1279 + $0x40] sm:$0xf]
        %v1928 = vld [vmem:[%s1279 + $0x44] sm:$0x1]
        %v1929 = vld [vmem:[%s1279 + $0x48] sm:$0xf]
        %v1930 = vld [vmem:[%s1279 + $0x4c] sm:$0xf]
        %v1931 = vld [vmem:[%s1279 + $0x50] sm:$0x1]
        %v1932 = vld [vmem:[%s1279 + $0x54] sm:$0xf]
        %v1933 = vld [vmem:[%s1279 + $0x58] sm:$0xf]
        %v1934 = vld [vmem:[%s1279 + $0x5c] sm:$0x1]
        %v1935 = vld [vmem:[%s1279 + $0x60] sm:$0xf]
        %v1936 = vld [vmem:[%s1279 + $0x64] sm:$0xf]
        %v1937 = vld [vmem:[%s1279 + $0x68] sm:$0x1]
        %v1938 = vld [vmem:[%s1279 + $0x6c] sm:$0xf]
        %v1939 = vld [vmem:[%s1279 + $0x70] sm:$0xf]
        %v1940 = vld [vmem:[%s1279 + $0x74] sm:$0x1]
        %v1941 = vld [vmem:[%s1279 + $0x78] sm:$0xf]
        %v1942 = vld [vmem:[%s1279 + $0x7c] sm:$0xf]
        %v1943 = vld [vmem:[%s1279 + $0x80] sm:$0x1]
        %v1944 = vld [vmem:[%s1279 + $0x84] sm:$0xf]
        %v1945 = vld [vmem:[%s1279 + $0x88] sm:$0xf]
        %v1946 = vld [vmem:[%s1279 + $0x8c] sm:$0x1]
        %v1947 = vld [vmem:[%s1279 + $0x90] sm:$0xf]
        %v1948 = vld [vmem:[%s1279 + $0x94] sm:$0xf]
        %v1949 = vld [vmem:[%s1279 + $0x98] sm:$0x1]
        %v1950 = vld [vmem:[%s1279 + $0x9c] sm:$0xf]
        %v1951 = vld [vmem:[%s1279 + $0xa0] sm:$0xf]
        %v1952 = vld [vmem:[%s1279 + $0xa4] sm:$0x1]
        %v1953 = vld [vmem:[%s1279 + $0xa8] sm:$0xf]
        %v1954 = vld [vmem:[%s1279 + $0xac] sm:$0xf]
        %v1955 = vld [vmem:[%s1279 + $0xb0] sm:$0x1]
        %v1956 = vld [vmem:[%s1279 + $0xb4] sm:$0xf]
        %v1957 = vld [vmem:[%s1279 + $0xb8] sm:$0xf]
        %v1958 = vld [vmem:[%s1279 + $0xbc] sm:$0x1]
        %v1991 = vunpack.c.l.b16 %v1911
        %v1992 = vunpack.c.l.b16 %v1912
        %v1993 = vunpack.c.l.b16 %v1914
        %v1994 = vunpack.c.l.b16 %v1915
        %v1995 = vunpack.c.l.b16 %v1917
        %v1996 = vunpack.c.l.b16 %v1918
        %v1997 = vunpack.c.l.b16 %v1920
        %v1998 = vunpack.c.l.b16 %v1921
        %v1999 = vunpack.c.l.b16 %v1923
        %v2000 = vunpack.c.l.b16 %v1924
        %v2001 = vunpack.c.l.b16 %v1926
        %v2002 = vunpack.c.l.b16 %v1927
        %v2003 = vunpack.c.l.b16 %v1929
        %v2004 = vunpack.c.l.b16 %v1930
        %v2005 = vunpack.c.l.b16 %v1932
        %v2006 = vunpack.c.l.b16 %v1933
        %v2007 = vunpack.c.l.b16 %v1935
        %v2008 = vunpack.c.l.b16 %v1936
        %v2009 = vunpack.c.l.b16 %v1938
        %v2010 = vunpack.c.l.b16 %v1939
        %v2011 = vunpack.c.l.b16 %v1941
        %v2012 = vunpack.c.l.b16 %v1942
        %v2013 = vunpack.c.l.b16 %v1944
        %v2014 = vunpack.c.l.b16 %v1945
        %v2015 = vunpack.c.l.b16 %v1947
        %v2016 = vunpack.c.l.b16 %v1948
        %v2017 = vunpack.c.l.b16 %v1950
        %v2018 = vunpack.c.l.b16 %v1951
        %v2019 = vunpack.c.l.b16 %v1953
        %v2020 = vunpack.c.l.b16 %v1954
        %v2021 = vunpack.c.l.b16 %v1956
        %v2022 = vunpack.c.l.b16 %v1957
        %v2023 = vpack.c.b16 %v1992, %v1991
        %v2024 = vpack.c.b16 %v1994, %v1993
        %v2025 = vpack.c.b16 %v1996, %v1995
        %v2026 = vpack.c.b16 %v1998, %v1997
        %v2027 = vpack.c.b16 %v2000, %v1999
        %v2028 = vpack.c.b16 %v2002, %v2001
        %v2029 = vpack.c.b16 %v2004, %v2003
        %v2030 = vpack.c.b16 %v2006, %v2005
        %v2031 = vpack.c.b16 %v2008, %v2007
        %v2032 = vpack.c.b16 %v2010, %v2009
        %v2033 = vpack.c.b16 %v2012, %v2011
        %v2034 = vpack.c.b16 %v2014, %v2013
        %v2035 = vpack.c.b16 %v2016, %v2015
        %v2036 = vpack.c.b16 %v2018, %v2017
        %v2037 = vpack.c.b16 %v2020, %v2019
        %v2038 = vpack.c.b16 %v2022, %v2021
        %v2071 = vunpack.c.l.b16 %v1913
        %v2072 = vunpack.c.l.b16 %v1916
        %v2073 = vunpack.c.l.b16 %v1919
        %v2074 = vunpack.c.l.b16 %v1922
        %v2075 = vunpack.c.l.b16 %v1925
        %v2076 = vunpack.c.l.b16 %v1928
        %v2077 = vunpack.c.l.b16 %v1931
        %v2078 = vunpack.c.l.b16 %v1934
        %v2079 = vunpack.c.l.b16 %v1937
        %v2080 = vunpack.c.l.b16 %v1940
        %v2081 = vunpack.c.l.b16 %v1943
        %v2082 = vunpack.c.l.b16 %v1946
        %v2083 = vunpack.c.l.b16 %v1949
        %v2084 = vunpack.c.l.b16 %v1952
        %v2085 = vunpack.c.l.b16 %v1955
        %v2086 = vunpack.c.l.b16 %v1958
        %v2087 = vpack.c.b16 %v2071, %v2071
        %v2088 = vpack.c.b16 %v2072, %v2072
        %v2089 = vpack.c.b16 %v2073, %v2073
        %v2090 = vpack.c.b16 %v2074, %v2074
        %v2091 = vpack.c.b16 %v2075, %v2075
        %v2092 = vpack.c.b16 %v2076, %v2076
        %v2093 = vpack.c.b16 %v2077, %v2077
        %v2094 = vpack.c.b16 %v2078, %v2078
        %v2095 = vpack.c.b16 %v2079, %v2079
        %v2096 = vpack.c.b16 %v2080, %v2080
        %v2097 = vpack.c.b16 %v2081, %v2081
        %v2098 = vpack.c.b16 %v2082, %v2082
        %v2099 = vpack.c.b16 %v2083, %v2083
        %v2100 = vpack.c.b16 %v2084, %v2084
        %v2101 = vpack.c.b16 %v2085, %v2085
        %v2102 = vpack.c.b16 %v2086, %v2086
        %v2104 = vshrl.u32 %v2023, 16
        %v2106 = vshll.u32 %v2023, 16
        %v2108 = vrot.slane %v2106, 1
        %v2109 = vor.u32 %v2104, %v2108
        %v2111 = vshll.u32 %v2087, 16
        %v2113 = vrot.slane %v2111, 1
        %v2114 = vsel %vm1589, %v2109, %v2113
        %v2116 = vshrl.u32 %v2024, 16
        %v2118 = vshll.u32 %v2024, 16
        %v2120 = vrot.slane %v2118, 1
        %v2121 = vor.u32 %v2116, %v2120
        %v2123 = vshll.u32 %v2088, 16
        %v2125 = vrot.slane %v2123, 1
        %v2126 = vsel %vm1589, %v2121, %v2125
        %v2128 = vshrl.u32 %v2025, 16
        %v2130 = vshll.u32 %v2025, 16
        %v2132 = vrot.slane %v2130, 1
        %v2133 = vor.u32 %v2128, %v2132
        %v2135 = vshll.u32 %v2089, 16
        %v2137 = vrot.slane %v2135, 1
        %v2138 = vsel %vm1589, %v2133, %v2137
        %v2140 = vshrl.u32 %v2026, 16
        %v2142 = vshll.u32 %v2026, 16
        %v2144 = vrot.slane %v2142, 1
        %v2145 = vor.u32 %v2140, %v2144
        %v2147 = vshll.u32 %v2090, 16
        %v2149 = vrot.slane %v2147, 1
        %v2150 = vsel %vm1589, %v2145, %v2149
        %v2152 = vshrl.u32 %v2027, 16
        %v2154 = vshll.u32 %v2027, 16
        %v2156 = vrot.slane %v2154, 1
        %v2157 = vor.u32 %v2152, %v2156
        %v2159 = vshll.u32 %v2091, 16
        %v2161 = vrot.slane %v2159, 1
        %v2162 = vsel %vm1589, %v2157, %v2161
        %v2164 = vshrl.u32 %v2028, 16
        %v2166 = vshll.u32 %v2028, 16
        %v2168 = vrot.slane %v2166, 1
        %v2169 = vor.u32 %v2164, %v2168
        %v2171 = vshll.u32 %v2092, 16
        %v2173 = vrot.slane %v2171, 1
        %v2174 = vsel %vm1589, %v2169, %v2173
        %v2176 = vshrl.u32 %v2029, 16
        %v2178 = vshll.u32 %v2029, 16
        %v2180 = vrot.slane %v2178, 1
        %v2181 = vor.u32 %v2176, %v2180
        %v2183 = vshll.u32 %v2093, 16
        %v2185 = vrot.slane %v2183, 1
        %v2186 = vsel %vm1589, %v2181, %v2185
        %v2188 = vshrl.u32 %v2030, 16
        %v2190 = vshll.u32 %v2030, 16
        %v2192 = vrot.slane %v2190, 1
        %v2193 = vor.u32 %v2188, %v2192
        %v2195 = vshll.u32 %v2094, 16
        %v2197 = vrot.slane %v2195, 1
        %v2198 = vsel %vm1589, %v2193, %v2197
        %v2200 = vshrl.u32 %v2031, 16
        %v2202 = vshll.u32 %v2031, 16
        %v2204 = vrot.slane %v2202, 1
        %v2205 = vor.u32 %v2200, %v2204
        %v2207 = vshll.u32 %v2095, 16
        %v2209 = vrot.slane %v2207, 1
        %v2210 = vsel %vm1589, %v2205, %v2209
        %v2212 = vshrl.u32 %v2032, 16
        %v2214 = vshll.u32 %v2032, 16
        %v2216 = vrot.slane %v2214, 1
        %v2217 = vor.u32 %v2212, %v2216
        %v2219 = vshll.u32 %v2096, 16
        %v2221 = vrot.slane %v2219, 1
        %v2222 = vsel %vm1589, %v2217, %v2221
        %v2224 = vshrl.u32 %v2033, 16
        %v2226 = vshll.u32 %v2033, 16
        %v2228 = vrot.slane %v2226, 1
        %v2229 = vor.u32 %v2224, %v2228
        %v2231 = vshll.u32 %v2097, 16
        %v2233 = vrot.slane %v2231, 1
        %v2234 = vsel %vm1589, %v2229, %v2233
        %v2236 = vshrl.u32 %v2034, 16
        %v2238 = vshll.u32 %v2034, 16
        %v2240 = vrot.slane %v2238, 1
        %v2241 = vor.u32 %v2236, %v2240
        %v2243 = vshll.u32 %v2098, 16
        %v2245 = vrot.slane %v2243, 1
        %v2246 = vsel %vm1589, %v2241, %v2245
        %v2248 = vshrl.u32 %v2035, 16
        %v2250 = vshll.u32 %v2035, 16
        %v2252 = vrot.slane %v2250, 1
        %v2253 = vor.u32 %v2248, %v2252
        %v2255 = vshll.u32 %v2099, 16
        %v2257 = vrot.slane %v2255, 1
        %v2258 = vsel %vm1589, %v2253, %v2257
        %v2260 = vshrl.u32 %v2036, 16
        %v2262 = vshll.u32 %v2036, 16
        %v2264 = vrot.slane %v2262, 1
        %v2265 = vor.u32 %v2260, %v2264
        %v2267 = vshll.u32 %v2100, 16
        %v2269 = vrot.slane %v2267, 1
        %v2270 = vsel %vm1589, %v2265, %v2269
        %v2272 = vshrl.u32 %v2037, 16
        %v2274 = vshll.u32 %v2037, 16
        %v2276 = vrot.slane %v2274, 1
        %v2277 = vor.u32 %v2272, %v2276
        %v2279 = vshll.u32 %v2101, 16
        %v2281 = vrot.slane %v2279, 1
        %v2282 = vsel %vm1589, %v2277, %v2281
        %v2284 = vshrl.u32 %v2038, 16
        %v2286 = vshll.u32 %v2038, 16
        %v2288 = vrot.slane %v2286, 1
        %v2289 = vor.u32 %v2284, %v2288
        %v2291 = vshll.u32 %v2102, 16
        %v2293 = vrot.slane %v2291, 1
        %v2294 = vsel %vm1589, %v2289, %v2293
        %v2311 = vrot.slane %v2023, 1
        %v2312 = vrot.slane %v2087, 1
        %v2313 = vsel %vm1798, %v2311, %v2312
        %v2314 = vrot.slane %v2024, 1
        %v2315 = vrot.slane %v2088, 1
        %v2316 = vsel %vm1798, %v2314, %v2315
        %v2317 = vrot.slane %v2025, 1
        %v2318 = vrot.slane %v2089, 1
        %v2319 = vsel %vm1798, %v2317, %v2318
        %v2320 = vrot.slane %v2026, 1
        %v2321 = vrot.slane %v2090, 1
        %v2322 = vsel %vm1798, %v2320, %v2321
        %v2323 = vrot.slane %v2027, 1
        %v2324 = vrot.slane %v2091, 1
        %v2325 = vsel %vm1798, %v2323, %v2324
        %v2326 = vrot.slane %v2028, 1
        %v2327 = vrot.slane %v2092, 1
        %v2328 = vsel %vm1798, %v2326, %v2327
        %v2329 = vrot.slane %v2029, 1
        %v2330 = vrot.slane %v2093, 1
        %v2331 = vsel %vm1798, %v2329, %v2330
        %v2332 = vrot.slane %v2030, 1
        %v2333 = vrot.slane %v2094, 1
        %v2334 = vsel %vm1798, %v2332, %v2333
        %v2335 = vrot.slane %v2031, 1
        %v2336 = vrot.slane %v2095, 1
        %v2337 = vsel %vm1798, %v2335, %v2336
        %v2338 = vrot.slane %v2032, 1
        %v2339 = vrot.slane %v2096, 1
        %v2340 = vsel %vm1798, %v2338, %v2339
        %v2341 = vrot.slane %v2033, 1
        %v2342 = vrot.slane %v2097, 1
        %v2343 = vsel %vm1798, %v2341, %v2342
        %v2344 = vrot.slane %v2034, 1
        %v2345 = vrot.slane %v2098, 1
        %v2346 = vsel %vm1798, %v2344, %v2345
        %v2347 = vrot.slane %v2035, 1
        %v2348 = vrot.slane %v2099, 1
        %v2349 = vsel %vm1798, %v2347, %v2348
        %v2350 = vrot.slane %v2036, 1
        %v2351 = vrot.slane %v2100, 1
        %v2352 = vsel %vm1798, %v2350, %v2351
        %v2353 = vrot.slane %v2037, 1
        %v2354 = vrot.slane %v2101, 1
        %v2355 = vsel %vm1798, %v2353, %v2354
        %v2356 = vrot.slane %v2038, 1
        %v2357 = vrot.slane %v2102, 1
        %v2358 = vsel %vm1798, %v2356, %v2357
        %s2375 = scalar_lea.vmem [#allocation8], 192
        %v2376 = vld [vmem:[%s2375] sm:$0xf]
        %v2377 = vld [vmem:[%s2375 + $0x4] sm:$0xf]
        %v2378 = vld [vmem:[%s2375 + $0x8] sm:$0xf]
        %v2379 = vld [vmem:[%s2375 + $0xc] sm:$0xf]
        %v2380 = vld [vmem:[%s2375 + $0x10] sm:$0xf]
        %v2381 = vld [vmem:[%s2375 + $0x14] sm:$0xf]
        %v2382 = vld [vmem:[%s2375 + $0x18] sm:$0xf]
        %v2383 = vld [vmem:[%s2375 + $0x1c] sm:$0xf]
        %v2384 = vld [vmem:[%s2375 + $0x20] sm:$0xf]
        %v2385 = vld [vmem:[%s2375 + $0x24] sm:$0xf]
        %v2386 = vld [vmem:[%s2375 + $0x28] sm:$0xf]
        %v2387 = vld [vmem:[%s2375 + $0x2c] sm:$0xf]
        %v2388 = vld [vmem:[%s2375 + $0x30] sm:$0xf]
        %v2389 = vld [vmem:[%s2375 + $0x34] sm:$0xf]
        %v2390 = vld [vmem:[%s2375 + $0x38] sm:$0xf]
        %v2391 = vld [vmem:[%s2375 + $0x3c] sm:$0xf]
        %v2392 = vld [vmem:[%s2375 + $0x40] sm:$0xf]
        %v2393 = vld [vmem:[%s2375 + $0x44] sm:$0xf]
        %v2394 = vld [vmem:[%s2375 + $0x48] sm:$0xf]
        %v2395 = vld [vmem:[%s2375 + $0x4c] sm:$0xf]
        %v2396 = vld [vmem:[%s2375 + $0x50] sm:$0xf]
        %v2397 = vld [vmem:[%s2375 + $0x54] sm:$0xf]
        %v2398 = vld [vmem:[%s2375 + $0x58] sm:$0xf]
        %v2399 = vld [vmem:[%s2375 + $0x5c] sm:$0xf]
        %v2400 = vld [vmem:[%s2375 + $0x60] sm:$0xf]
        %v2401 = vld [vmem:[%s2375 + $0x64] sm:$0xf]
        %v2402 = vld [vmem:[%s2375 + $0x68] sm:$0xf]
        %v2403 = vld [vmem:[%s2375 + $0x6c] sm:$0xf]
        %v2404 = vld [vmem:[%s2375 + $0x70] sm:$0xf]
        %v2405 = vld [vmem:[%s2375 + $0x74] sm:$0xf]
        %v2406 = vld [vmem:[%s2375 + $0x78] sm:$0xf]
        %v2407 = vld [vmem:[%s2375 + $0x7c] sm:$0xf]
        %v2408 = vld [vmem:[%s2375 + $0x80] sm:$0xf]
        %v2409 = vld [vmem:[%s2375 + $0x84] sm:$0xf]
        %v2410 = vld [vmem:[%s2375 + $0x88] sm:$0xf]
        %v2411 = vld [vmem:[%s2375 + $0x8c] sm:$0xf]
        %v2412 = vld [vmem:[%s2375 + $0x90] sm:$0xf]
        %v2413 = vld [vmem:[%s2375 + $0x94] sm:$0xf]
        %v2414 = vld [vmem:[%s2375 + $0x98] sm:$0xf]
        %v2415 = vld [vmem:[%s2375 + $0x9c] sm:$0xf]
        %v2416 = vld [vmem:[%s2375 + $0xa0] sm:$0xf]
        %v2417 = vld [vmem:[%s2375 + $0xa4] sm:$0xf]
        %v2418 = vld [vmem:[%s2375 + $0xa8] sm:$0xf]
        %v2419 = vld [vmem:[%s2375 + $0xac] sm:$0xf]
        %v2420 = vld [vmem:[%s2375 + $0xb0] sm:$0xf]
        %v2421 = vld [vmem:[%s2375 + $0xb4] sm:$0xf]
        %v2422 = vld [vmem:[%s2375 + $0xb8] sm:$0xf]
        %v2423 = vld [vmem:[%s2375 + $0xbc] sm:$0xf]
        %v2472 = vunpack.c.l.b16 %v2376
        %v2473 = vunpack.c.l.b16 %v2377
        %v2474 = vunpack.c.l.b16 %v2378
        %v2475 = vunpack.c.l.b16 %v2379
        %v2476 = vunpack.c.l.b16 %v2380
        %v2477 = vunpack.c.l.b16 %v2381
        %v2478 = vunpack.c.l.b16 %v2382
        %v2479 = vunpack.c.l.b16 %v2383
        %v2480 = vunpack.c.l.b16 %v2384
        %v2481 = vunpack.c.l.b16 %v2385
        %v2482 = vunpack.c.l.b16 %v2386
        %v2483 = vunpack.c.l.b16 %v2387
        %v2484 = vunpack.c.l.b16 %v2388
        %v2485 = vunpack.c.l.b16 %v2389
        %v2486 = vunpack.c.l.b16 %v2390
        %v2487 = vunpack.c.l.b16 %v2391
        %v2488 = vunpack.c.l.b16 %v2392
        %v2489 = vunpack.c.l.b16 %v2393
        %v2490 = vunpack.c.l.b16 %v2394
        %v2491 = vunpack.c.l.b16 %v2395
        %v2492 = vunpack.c.l.b16 %v2396
        %v2493 = vunpack.c.l.b16 %v2397
        %v2494 = vunpack.c.l.b16 %v2398
        %v2495 = vunpack.c.l.b16 %v2399
        %v2496 = vunpack.c.l.b16 %v2400
        %v2497 = vunpack.c.l.b16 %v2401
        %v2498 = vunpack.c.l.b16 %v2402
        %v2499 = vunpack.c.l.b16 %v2403
        %v2500 = vunpack.c.l.b16 %v2404
        %v2501 = vunpack.c.l.b16 %v2405
        %v2502 = vunpack.c.l.b16 %v2406
        %v2503 = vunpack.c.l.b16 %v2407
        %v2504 = vunpack.c.l.b16 %v2408
        %v2505 = vunpack.c.l.b16 %v2409
        %v2506 = vunpack.c.l.b16 %v2410
        %v2507 = vunpack.c.l.b16 %v2411
        %v2508 = vunpack.c.l.b16 %v2412
        %v2509 = vunpack.c.l.b16 %v2413
        %v2510 = vunpack.c.l.b16 %v2414
        %v2511 = vunpack.c.l.b16 %v2415
        %v2512 = vunpack.c.l.b16 %v2416
        %v2513 = vunpack.c.l.b16 %v2417
        %v2514 = vunpack.c.l.b16 %v2418
        %v2515 = vunpack.c.l.b16 %v2419
        %v2516 = vunpack.c.l.b16 %v2420
        %v2517 = vunpack.c.l.b16 %v2421
        %v2518 = vunpack.c.l.b16 %v2422
        %v2519 = vunpack.c.l.b16 %v2423
        %v2520 = vpack.c.b16 %v2473, %v2472
        %v2521 = vpack.c.b16 %v2475, %v2474
        %v2522 = vpack.c.b16 %v2477, %v2476
        %v2523 = vpack.c.b16 %v2479, %v2478
        %v2524 = vpack.c.b16 %v2481, %v2480
        %v2525 = vpack.c.b16 %v2483, %v2482
        %v2526 = vpack.c.b16 %v2485, %v2484
        %v2527 = vpack.c.b16 %v2487, %v2486
        %v2528 = vpack.c.b16 %v2489, %v2488
        %v2529 = vpack.c.b16 %v2491, %v2490
        %v2530 = vpack.c.b16 %v2493, %v2492
        %v2531 = vpack.c.b16 %v2495, %v2494
        %v2532 = vpack.c.b16 %v2497, %v2496
        %v2533 = vpack.c.b16 %v2499, %v2498
        %v2534 = vpack.c.b16 %v2501, %v2500
        %v2535 = vpack.c.b16 %v2503, %v2502
        %v2536 = vpack.c.b16 %v2505, %v2504
        %v2537 = vpack.c.b16 %v2507, %v2506
        %v2538 = vpack.c.b16 %v2509, %v2508
        %v2539 = vpack.c.b16 %v2511, %v2510
        %v2540 = vpack.c.b16 %v2513, %v2512
        %v2541 = vpack.c.b16 %v2515, %v2514
        %v2542 = vpack.c.b16 %v2517, %v2516
        %v2543 = vpack.c.b16 %v2519, %v2518
        %2568 = vmatprep.subr.bf16.mxu0 0
        %2569 = vmatpush1.bf16.msra.mxu0 %v2527
        %2570 = vmatprep.subr.bf16.mxu0 0
        %2571 = vmatpush1.bf16.msra.mxu0 %v2526
        %2572 = vmatprep.subr.bf16.mxu0 0
        %2573 = vmatpush1.bf16.msra.mxu0 %v2525
        %2574 = vmatprep.subr.bf16.mxu0 0
        %2575 = vmatpush1.bf16.msra.mxu0 %v2524
        %2576 = vmatprep.subr.bf16.mxu0 0
        %2577 = vmatpush1.bf16.msra.mxu0 %v2523
        %2578 = vmatprep.subr.bf16.mxu0 0
        %2579 = vmatpush1.bf16.msra.mxu0 %v2522
        %2580 = vmatprep.subr.bf16.mxu0 0
        %2581 = vmatpush1.bf16.msra.mxu0 %v2521
        %2582 = vmatprep.subr.bf16.mxu0 0
        %2583 = vmatpush1.bf16.msra.mxu0 %v2520
        %2584 = vmatprep.subr.bf16.mxu0 0
        %2585 = vmatpush2.bf16.msra.mxu0 %v2535
        %2586 = vmatprep.subr.bf16.mxu0 0
        %2587 = vmatpush2.bf16.msra.mxu0 %v2534
        %2588 = vmatprep.subr.bf16.mxu0 0
        %2589 = vmatpush2.bf16.msra.mxu0 %v2533
        %2590 = vmatprep.subr.bf16.mxu0 0
        %2591 = vmatpush2.bf16.msra.mxu0 %v2532
        %2592 = vmatprep.subr.bf16.mxu0 0
        %2593 = vmatpush2.bf16.msra.mxu0 %v2531
        %2594 = vmatprep.subr.bf16.mxu0 0
        %2595 = vmatpush2.bf16.msra.mxu0 %v2530
        %2596 = vmatprep.subr.bf16.mxu0 0
        %2597 = vmatpush2.bf16.msra.mxu0 %v2529
        %2598 = vmatprep.subr.bf16.mxu0 0
        %2599 = vmatpush2.bf16.msra.mxu0 %v2528
        %2600 = vmatprep.mubr.bf16.mxu0 %v2114
        %2601 = vmatmul.mubr.bf16.gmra.mxu0 %v2023
        %v2602 = vpop.f32.mrf.mxu0
        %v2603 = vadd.f32 0.0, %v2602
        %v2604 = vpop.f32.mrf.mxu0
        %v2605 = vpop.f32.mrf.mxu0
        %v2606 = vadd.f32 0.0, %v2605
        %v2607 = vpop.f32.mrf.mxu0
        %2608 = vmatprep.mubr.bf16.mxu0 %v2126
        %2609 = vmatmul.mubr.bf16.gmra.mxu0 %v2024
        %v2610 = vpop.f32.mrf.mxu0
        %v2611 = vadd.f32 0.0, %v2610
        %v2612 = vpop.f32.mrf.mxu0
        %v2613 = vpop.f32.mrf.mxu0
        %v2614 = vadd.f32 0.0, %v2613
        %v2615 = vpop.f32.mrf.mxu0
        %2616 = vmatprep.mubr.bf16.mxu0 %v2138
        %2617 = vmatmul.mubr.bf16.gmra.mxu0 %v2025
        %v2618 = vpop.f32.mrf.mxu0
        %v2619 = vadd.f32 0.0, %v2618
        %v2620 = vpop.f32.mrf.mxu0
        %v2621 = vpop.f32.mrf.mxu0
        %v2622 = vadd.f32 0.0, %v2621
        %v2623 = vpop.f32.mrf.mxu0
        %2624 = vmatprep.mubr.bf16.mxu0 %v2150
        %2625 = vmatmul.mubr.bf16.gmra.mxu0 %v2026
        %v2626 = vpop.f32.mrf.mxu0
        %v2627 = vadd.f32 0.0, %v2626
        %v2628 = vpop.f32.mrf.mxu0
        %v2629 = vpop.f32.mrf.mxu0
        %v2630 = vadd.f32 0.0, %v2629
        %v2631 = vpop.f32.mrf.mxu0
        %2632 = vmatprep.mubr.bf16.mxu0 %v2162
        %2633 = vmatmul.mubr.bf16.gmra.mxu0 %v2027
        %v2634 = vpop.f32.mrf.mxu0
        %v2635 = vadd.f32 0.0, %v2634
        %v2636 = vpop.f32.mrf.mxu0
        %v2637 = vpop.f32.mrf.mxu0
        %v2638 = vadd.f32 0.0, %v2637
        %v2639 = vpop.f32.mrf.mxu0
        %2640 = vmatprep.mubr.bf16.mxu0 %v2174
        %2641 = vmatmul.mubr.bf16.gmra.mxu0 %v2028
        %v2642 = vpop.f32.mrf.mxu0
        %v2643 = vadd.f32 0.0, %v2642
        %v2644 = vpop.f32.mrf.mxu0
        %v2645 = vpop.f32.mrf.mxu0
        %v2646 = vadd.f32 0.0, %v2645
        %v2647 = vpop.f32.mrf.mxu0
        %2648 = vmatprep.mubr.bf16.mxu0 %v2186
        %2649 = vmatmul.mubr.bf16.gmra.mxu0 %v2029
        %v2650 = vpop.f32.mrf.mxu0
        %v2651 = vadd.f32 0.0, %v2650
        %v2652 = vpop.f32.mrf.mxu0
        %v2653 = vpop.f32.mrf.mxu0
        %v2654 = vadd.f32 0.0, %v2653
        %v2655 = vpop.f32.mrf.mxu0
        %2656 = vmatprep.mubr.bf16.mxu0 %v2198
        %2657 = vmatmul.mubr.bf16.gmra.mxu0 %v2030
        %v2658 = vpop.f32.mrf.mxu0
        %v2659 = vadd.f32 0.0, %v2658
        %v2660 = vpop.f32.mrf.mxu0
        %v2661 = vpop.f32.mrf.mxu0
        %v2662 = vadd.f32 0.0, %v2661
        %v2663 = vpop.f32.mrf.mxu0
        %2664 = vmatprep.mubr.bf16.mxu0 %v2210
        %2665 = vmatmul.mubr.bf16.gmra.mxu0 %v2031
        %v2666 = vpop.f32.mrf.mxu0
        %v2667 = vadd.f32 0.0, %v2666
        %v2668 = vpop.f32.mrf.mxu0
        %v2669 = vpop.f32.mrf.mxu0
        %v2670 = vadd.f32 0.0, %v2669
        %v2671 = vpop.f32.mrf.mxu0
        %2672 = vmatprep.mubr.bf16.mxu0 %v2222
        %2673 = vmatmul.mubr.bf16.gmra.mxu0 %v2032
        %v2674 = vpop.f32.mrf.mxu0
        %v2675 = vadd.f32 0.0, %v2674
        %v2676 = vpop.f32.mrf.mxu0
        %v2677 = vpop.f32.mrf.mxu0
        %v2678 = vadd.f32 0.0, %v2677
        %v2679 = vpop.f32.mrf.mxu0
        %2680 = vmatprep.mubr.bf16.mxu0 %v2234
        %2681 = vmatmul.mubr.bf16.gmra.mxu0 %v2033
        %v2682 = vpop.f32.mrf.mxu0
        %v2683 = vadd.f32 0.0, %v2682
        %v2684 = vpop.f32.mrf.mxu0
        %v2685 = vpop.f32.mrf.mxu0
        %v2686 = vadd.f32 0.0, %v2685
        %v2687 = vpop.f32.mrf.mxu0
        %2688 = vmatprep.mubr.bf16.mxu0 %v2246
        %2689 = vmatmul.mubr.bf16.gmra.mxu0 %v2034
        %v2690 = vpop.f32.mrf.mxu0
        %v2691 = vadd.f32 0.0, %v2690
        %v2692 = vpop.f32.mrf.mxu0
        %v2693 = vpop.f32.mrf.mxu0
        %v2694 = vadd.f32 0.0, %v2693
        %v2695 = vpop.f32.mrf.mxu0
        %2696 = vmatprep.mubr.bf16.mxu0 %v2258
        %2697 = vmatmul.mubr.bf16.gmra.mxu0 %v2035
        %v2698 = vpop.f32.mrf.mxu0
        %v2699 = vadd.f32 0.0, %v2698
        %v2700 = vpop.f32.mrf.mxu0
        %v2701 = vpop.f32.mrf.mxu0
        %v2702 = vadd.f32 0.0, %v2701
        %v2703 = vpop.f32.mrf.mxu0
        %2704 = vmatprep.mubr.bf16.mxu0 %v2270
        %2705 = vmatmul.mubr.bf16.gmra.mxu0 %v2036
        %v2706 = vpop.f32.mrf.mxu0
        %v2707 = vadd.f32 0.0, %v2706
        %v2708 = vpop.f32.mrf.mxu0
        %v2709 = vpop.f32.mrf.mxu0
        %v2710 = vadd.f32 0.0, %v2709
        %v2711 = vpop.f32.mrf.mxu0
        %2712 = vmatprep.mubr.bf16.mxu0 %v2282
        %2713 = vmatmul.mubr.bf16.gmra.mxu0 %v2037
        %v2714 = vpop.f32.mrf.mxu0
        %v2715 = vadd.f32 0.0, %v2714
        %v2716 = vpop.f32.mrf.mxu0
        %v2717 = vpop.f32.mrf.mxu0
        %v2718 = vadd.f32 0.0, %v2717
        %v2719 = vpop.f32.mrf.mxu0
        %2720 = vmatprep.mubr.bf16.mxu0 %v2294
        %2721 = vmatmul.mubr.bf16.gmra.mxu0 %v2038
        %v2722 = vpop.f32.mrf.mxu0
        %v2723 = vadd.f32 0.0, %v2722
        %v2724 = vpop.f32.mrf.mxu0
        %v2725 = vpop.f32.mrf.mxu0
        %v2726 = vadd.f32 0.0, %v2725
        %v2727 = vpop.f32.mrf.mxu0
        %2728 = vdwg.mxu0
        %2729 = vmatprep.subr.bf16.mxu0 0
        %2730 = vmatpush1.bf16.msra.mxu0 %v2543
        %2731 = vmatprep.subr.bf16.mxu0 0
        %2732 = vmatpush1.bf16.msra.mxu0 %v2542
        %2733 = vmatprep.subr.bf16.mxu0 0
        %2734 = vmatpush1.bf16.msra.mxu0 %v2541
        %2735 = vmatprep.subr.bf16.mxu0 0
        %2736 = vmatpush1.bf16.msra.mxu0 %v2540
        %2737 = vmatprep.subr.bf16.mxu0 0
        %2738 = vmatpush1.bf16.msra.mxu0 %v2539
        %2739 = vmatprep.subr.bf16.mxu0 0
        %2740 = vmatpush1.bf16.msra.mxu0 %v2538
        %2741 = vmatprep.subr.bf16.mxu0 0
        %2742 = vmatpush1.bf16.msra.mxu0 %v2537
        %2743 = vmatprep.subr.bf16.mxu0 0
        %2744 = vmatpush1.bf16.msra.mxu0 %v2536
        %2745 = vmatprep.subr.bf16.mxu0 0
        %2746 = vmatpush2.bf16.msra.mxu0 0
        %2747 = vmatprep.subr.bf16.mxu0 0
        %2748 = vmatpush2.bf16.msra.mxu0 0
        %2749 = vmatprep.subr.bf16.mxu0 0
        %2750 = vmatpush2.bf16.msra.mxu0 0
        %2751 = vmatprep.subr.bf16.mxu0 0
        %2752 = vmatpush2.bf16.msra.mxu0 0
        %2753 = vmatprep.subr.bf16.mxu0 0
        %2754 = vmatpush2.bf16.msra.mxu0 0
        %2755 = vmatprep.subr.bf16.mxu0 0
        %2756 = vmatpush2.bf16.msra.mxu0 0
        %2757 = vmatprep.subr.bf16.mxu0 0
        %2758 = vmatpush2.bf16.msra.mxu0 0
        %2759 = vmatprep.subr.bf16.mxu0 0
        %2760 = vmatpush2.bf16.msra.mxu0 0
        %2761 = vmatprep.mubr.bf16.mxu0 0
        %2762 = vmatmul.mubr.bf16.gmra.mxu0 %v2313
        %v2763 = vpop.f32.mrf.mxu0
        %v2764 = vadd.f32 %v2603, %v2763
        %v2765 = vpop.f32.mrf.mxu0
        %v2766 = vpop.f32.mrf.mxu0
        %v2767 = vadd.f32 %v2606, %v2766
        %v2768 = vpop.f32.mrf.mxu0
        %2769 = vmatprep.mubr.bf16.mxu0 0
        %2770 = vmatmul.mubr.bf16.gmra.mxu0 %v2316
        %v2771 = vpop.f32.mrf.mxu0
        %v2772 = vadd.f32 %v2611, %v2771
        %v2773 = vpop.f32.mrf.mxu0
        %v2774 = vpop.f32.mrf.mxu0
        %v2775 = vadd.f32 %v2614, %v2774
        %v2776 = vpop.f32.mrf.mxu0
        %2777 = vmatprep.mubr.bf16.mxu0 0
        %2778 = vmatmul.mubr.bf16.gmra.mxu0 %v2319
        %v2779 = vpop.f32.mrf.mxu0
        %v2780 = vadd.f32 %v2619, %v2779
        %v2781 = vpop.f32.mrf.mxu0
        %v2782 = vpop.f32.mrf.mxu0
        %v2783 = vadd.f32 %v2622, %v2782
        %v2784 = vpop.f32.mrf.mxu0
        %2785 = vmatprep.mubr.bf16.mxu0 0
        %2786 = vmatmul.mubr.bf16.gmra.mxu0 %v2322
        %v2787 = vpop.f32.mrf.mxu0
        %v2788 = vadd.f32 %v2627, %v2787
        %v2789 = vpop.f32.mrf.mxu0
        %v2790 = vpop.f32.mrf.mxu0
        %v2791 = vadd.f32 %v2630, %v2790
        %v2792 = vpop.f32.mrf.mxu0
        %2793 = vmatprep.mubr.bf16.mxu0 0
        %2794 = vmatmul.mubr.bf16.gmra.mxu0 %v2325
        %v2795 = vpop.f32.mrf.mxu0
        %v2796 = vadd.f32 %v2635, %v2795
        %v2797 = vpop.f32.mrf.mxu0
        %v2798 = vpop.f32.mrf.mxu0
        %v2799 = vadd.f32 %v2638, %v2798
        %v2800 = vpop.f32.mrf.mxu0
        %2801 = vmatprep.mubr.bf16.mxu0 0
        %2802 = vmatmul.mubr.bf16.gmra.mxu0 %v2328
        %v2803 = vpop.f32.mrf.mxu0
        %v2804 = vadd.f32 %v2643, %v2803
        %v2805 = vpop.f32.mrf.mxu0
        %v2806 = vpop.f32.mrf.mxu0
        %v2807 = vadd.f32 %v2646, %v2806
        %v2808 = vpop.f32.mrf.mxu0
        %2809 = vmatprep.mubr.bf16.mxu0 0
        %2810 = vmatmul.mubr.bf16.gmra.mxu0 %v2331
        %v2811 = vpop.f32.mrf.mxu0
        %v2812 = vadd.f32 %v2651, %v2811
        %v2813 = vpop.f32.mrf.mxu0
        %v2814 = vpop.f32.mrf.mxu0
        %v2815 = vadd.f32 %v2654, %v2814
        %v2816 = vpop.f32.mrf.mxu0
        %2817 = vmatprep.mubr.bf16.mxu0 0
        %2818 = vmatmul.mubr.bf16.gmra.mxu0 %v2334
        %v2819 = vpop.f32.mrf.mxu0
        %v2820 = vadd.f32 %v2659, %v2819
        %v2821 = vpop.f32.mrf.mxu0
        %v2822 = vpop.f32.mrf.mxu0
        %v2823 = vadd.f32 %v2662, %v2822
        %v2824 = vpop.f32.mrf.mxu0
        %2825 = vmatprep.mubr.bf16.mxu0 0
        %2826 = vmatmul.mubr.bf16.gmra.mxu0 %v2337
        %v2827 = vpop.f32.mrf.mxu0
        %v2828 = vadd.f32 %v2667, %v2827
        %v2829 = vpop.f32.mrf.mxu0
        %v2830 = vpop.f32.mrf.mxu0
        %v2831 = vadd.f32 %v2670, %v2830
        %v2832 = vpop.f32.mrf.mxu0
        %2833 = vmatprep.mubr.bf16.mxu0 0
        %2834 = vmatmul.mubr.bf16.gmra.mxu0 %v2340
        %v2835 = vpop.f32.mrf.mxu0
        %v2836 = vadd.f32 %v2675, %v2835
        %v2837 = vpop.f32.mrf.mxu0
        %v2838 = vpop.f32.mrf.mxu0
        %v2839 = vadd.f32 %v2678, %v2838
        %v2840 = vpop.f32.mrf.mxu0
        %2841 = vmatprep.mubr.bf16.mxu0 0
        %2842 = vmatmul.mubr.bf16.gmra.mxu0 %v2343
        %v2843 = vpop.f32.mrf.mxu0
        %v2844 = vadd.f32 %v2683, %v2843
        %v2845 = vpop.f32.mrf.mxu0
        %v2846 = vpop.f32.mrf.mxu0
        %v2847 = vadd.f32 %v2686, %v2846
        %v2848 = vpop.f32.mrf.mxu0
        %2849 = vmatprep.mubr.bf16.mxu0 0
        %2850 = vmatmul.mubr.bf16.gmra.mxu0 %v2346
        %v2851 = vpop.f32.mrf.mxu0
        %v2852 = vadd.f32 %v2691, %v2851
        %v2853 = vpop.f32.mrf.mxu0
        %v2854 = vpop.f32.mrf.mxu0
        %v2855 = vadd.f32 %v2694, %v2854
        %v2856 = vpop.f32.mrf.mxu0
        %2857 = vmatprep.mubr.bf16.mxu0 0
        %2858 = vmatmul.mubr.bf16.gmra.mxu0 %v2349
        %v2859 = vpop.f32.mrf.mxu0
        %v2860 = vadd.f32 %v2699, %v2859
        %v2861 = vpop.f32.mrf.mxu0
        %v2862 = vpop.f32.mrf.mxu0
        %v2863 = vadd.f32 %v2702, %v2862
        %v2864 = vpop.f32.mrf.mxu0
        %2865 = vmatprep.mubr.bf16.mxu0 0
        %2866 = vmatmul.mubr.bf16.gmra.mxu0 %v2352
        %v2867 = vpop.f32.mrf.mxu0
        %v2868 = vadd.f32 %v2707, %v2867
        %v2869 = vpop.f32.mrf.mxu0
        %v2870 = vpop.f32.mrf.mxu0
        %v2871 = vadd.f32 %v2710, %v2870
        %v2872 = vpop.f32.mrf.mxu0
        %2873 = vmatprep.mubr.bf16.mxu0 0
        %2874 = vmatmul.mubr.bf16.gmra.mxu0 %v2355
        %v2875 = vpop.f32.mrf.mxu0
        %v2876 = vadd.f32 %v2715, %v2875
        %v2877 = vpop.f32.mrf.mxu0
        %v2878 = vpop.f32.mrf.mxu0
        %v2879 = vadd.f32 %v2718, %v2878
        %v2880 = vpop.f32.mrf.mxu0
        %2881 = vmatprep.mubr.bf16.mxu0 0
        %2882 = vmatmul.mubr.bf16.gmra.mxu0 %v2358
        %v2883 = vpop.f32.mrf.mxu0
        %v2884 = vadd.f32 %v2723, %v2883
        %v2885 = vpop.f32.mrf.mxu0
        %v2886 = vpop.f32.mrf.mxu0
        %v2887 = vadd.f32 %v2726, %v2886
        %v2888 = vpop.f32.mrf.mxu0
        %2889 = vdwg.mxu0
        %v2938 = vunpack.c.l.b16 %v1863
        %v2939 = vunpack.c.l.b16 %v1864
        %v2940 = vunpack.c.l.b16 %v1865
        %v2941 = vunpack.c.l.b16 %v1866
        %v2942 = vunpack.c.l.b16 %v1867
        %v2943 = vunpack.c.l.b16 %v1868
        %v2944 = vunpack.c.l.b16 %v1869
        %v2945 = vunpack.c.l.b16 %v1870
        %v2946 = vunpack.c.l.b16 %v1871
        %v2947 = vunpack.c.l.b16 %v1872
        %v2948 = vunpack.c.l.b16 %v1873
        %v2949 = vunpack.c.l.b16 %v1874
        %v2950 = vunpack.c.l.b16 %v1875
        %v2951 = vunpack.c.l.b16 %v1876
        %v2952 = vunpack.c.l.b16 %v1877
        %v2953 = vunpack.c.l.b16 %v1878
        %v2954 = vunpack.c.l.b16 %v1879
        %v2955 = vunpack.c.l.b16 %v1880
        %v2956 = vunpack.c.l.b16 %v1881
        %v2957 = vunpack.c.l.b16 %v1882
        %v2958 = vunpack.c.l.b16 %v1883
        %v2959 = vunpack.c.l.b16 %v1884
        %v2960 = vunpack.c.l.b16 %v1885
        %v2961 = vunpack.c.l.b16 %v1886
        %v2962 = vunpack.c.l.b16 %v1887
        %v2963 = vunpack.c.l.b16 %v1888
        %v2964 = vunpack.c.l.b16 %v1889
        %v2965 = vunpack.c.l.b16 %v1890
        %v2966 = vunpack.c.l.b16 %v1891
        %v2967 = vunpack.c.l.b16 %v1892
        %v2968 = vunpack.c.l.b16 %v1893
        %v2969 = vunpack.c.l.b16 %v1894
        %v2970 = vunpack.c.l.b16 %v1895
        %v2971 = vunpack.c.l.b16 %v1896
        %v2972 = vunpack.c.l.b16 %v1897
        %v2973 = vunpack.c.l.b16 %v1898
        %v2974 = vunpack.c.l.b16 %v1899
        %v2975 = vunpack.c.l.b16 %v1900
        %v2976 = vunpack.c.l.b16 %v1901
        %v2977 = vunpack.c.l.b16 %v1902
        %v2978 = vunpack.c.l.b16 %v1903
        %v2979 = vunpack.c.l.b16 %v1904
        %v2980 = vunpack.c.l.b16 %v1905
        %v2981 = vunpack.c.l.b16 %v1906
        %v2982 = vunpack.c.l.b16 %v1907
        %v2983 = vunpack.c.l.b16 %v1908
        %v2984 = vunpack.c.l.b16 %v1909
        %v2985 = vunpack.c.l.b16 %v1910
        %v2986 = vpack.c.b16 %v2939, %v2938
        %v2987 = vpack.c.b16 %v2941, %v2940
        %v2988 = vpack.c.b16 %v2943, %v2942
        %v2989 = vpack.c.b16 %v2945, %v2944
        %v2990 = vpack.c.b16 %v2947, %v2946
        %v2991 = vpack.c.b16 %v2949, %v2948
        %v2992 = vpack.c.b16 %v2951, %v2950
        %v2993 = vpack.c.b16 %v2953, %v2952
        %v2994 = vpack.c.b16 %v2955, %v2954
        %v2995 = vpack.c.b16 %v2957, %v2956
        %v2996 = vpack.c.b16 %v2959, %v2958
        %v2997 = vpack.c.b16 %v2961, %v2960
        %v2998 = vpack.c.b16 %v2963, %v2962
        %v2999 = vpack.c.b16 %v2965, %v2964
        %v3000 = vpack.c.b16 %v2967, %v2966
        %v3001 = vpack.c.b16 %v2969, %v2968
        %v3002 = vpack.c.b16 %v2971, %v2970
        %v3003 = vpack.c.b16 %v2973, %v2972
        %v3004 = vpack.c.b16 %v2975, %v2974
        %v3005 = vpack.c.b16 %v2977, %v2976
        %v3006 = vpack.c.b16 %v2979, %v2978
        %v3007 = vpack.c.b16 %v2981, %v2980
        %v3008 = vpack.c.b16 %v2983, %v2982
        %v3009 = vpack.c.b16 %v2985, %v2984
        %3034 = vmatprep.subr.bf16.mxu0 0
        %3035 = vmatpush1.bf16.msra.mxu0 %v2993
        %3036 = vmatprep.subr.bf16.mxu0 0
        %3037 = vmatpush1.bf16.msra.mxu0 %v2992
        %3038 = vmatprep.subr.bf16.mxu0 0
        %3039 = vmatpush1.bf16.msra.mxu0 %v2991
        %3040 = vmatprep.subr.bf16.mxu0 0
        %3041 = vmatpush1.bf16.msra.mxu0 %v2990
        %3042 = vmatprep.subr.bf16.mxu0 0
        %3043 = vmatpush1.bf16.msra.mxu0 %v2989
        %3044 = vmatprep.subr.bf16.mxu0 0
        %3045 = vmatpush1.bf16.msra.mxu0 %v2988
        %3046 = vmatprep.subr.bf16.mxu0 0
        %3047 = vmatpush1.bf16.msra.mxu0 %v2987
        %3048 = vmatprep.subr.bf16.mxu0 0
        %3049 = vmatpush1.bf16.msra.mxu0 %v2986
        %3050 = vmatprep.subr.bf16.mxu0 0
        %3051 = vmatpush2.bf16.msra.mxu0 %v3001
        %3052 = vmatprep.subr.bf16.mxu0 0
        %3053 = vmatpush2.bf16.msra.mxu0 %v3000
        %3054 = vmatprep.subr.bf16.mxu0 0
        %3055 = vmatpush2.bf16.msra.mxu0 %v2999
        %3056 = vmatprep.subr.bf16.mxu0 0
        %3057 = vmatpush2.bf16.msra.mxu0 %v2998
        %3058 = vmatprep.subr.bf16.mxu0 0
        %3059 = vmatpush2.bf16.msra.mxu0 %v2997
        %3060 = vmatprep.subr.bf16.mxu0 0
        %3061 = vmatpush2.bf16.msra.mxu0 %v2996
        %3062 = vmatprep.subr.bf16.mxu0 0
        %3063 = vmatpush2.bf16.msra.mxu0 %v2995
        %3064 = vmatprep.subr.bf16.mxu0 0
        %3065 = vmatpush2.bf16.msra.mxu0 %v2994
        %3066 = vmatprep.mubr.bf16.mxu0 %v1601
        %3067 = vmatmul.mubr.bf16.gmra.mxu0 %v1509
        %v3068 = vpop.f32.mrf.mxu0
        %v3069 = vadd.f32 %v2764, %v3068
        %v3070 = vpop.f32.mrf.mxu0
        %v3071 = vpop.f32.mrf.mxu0
        %v3072 = vadd.f32 %v2767, %v3071
        %v3073 = vpop.f32.mrf.mxu0
        %3074 = vmatprep.mubr.bf16.mxu0 %v1613
        %3075 = vmatmul.mubr.bf16.gmra.mxu0 %v1510
        %v3076 = vpop.f32.mrf.mxu0
        %v3077 = vadd.f32 %v2772, %v3076
        %v3078 = vpop.f32.mrf.mxu0
        %v3079 = vpop.f32.mrf.mxu0
        %v3080 = vadd.f32 %v2775, %v3079
        %v3081 = vpop.f32.mrf.mxu0
        %3082 = vmatprep.mubr.bf16.mxu0 %v1625
        %3083 = vmatmul.mubr.bf16.gmra.mxu0 %v1511
        %v3084 = vpop.f32.mrf.mxu0
        %v3085 = vadd.f32 %v2780, %v3084
        %v3086 = vpop.f32.mrf.mxu0
        %v3087 = vpop.f32.mrf.mxu0
        %v3088 = vadd.f32 %v2783, %v3087
        %v3089 = vpop.f32.mrf.mxu0
        %3090 = vmatprep.mubr.bf16.mxu0 %v1637
        %3091 = vmatmul.mubr.bf16.gmra.mxu0 %v1512
        %v3092 = vpop.f32.mrf.mxu0
        %v3093 = vadd.f32 %v2788, %v3092
        %v3094 = vpop.f32.mrf.mxu0
        %v3095 = vpop.f32.mrf.mxu0
        %v3096 = vadd.f32 %v2791, %v3095
        %v3097 = vpop.f32.mrf.mxu0
        %3098 = vmatprep.mubr.bf16.mxu0 %v1649
        %3099 = vmatmul.mubr.bf16.gmra.mxu0 %v1513
        %v3100 = vpop.f32.mrf.mxu0
        %v3101 = vadd.f32 %v2796, %v3100
        %v3102 = vpop.f32.mrf.mxu0
        %v3103 = vpop.f32.mrf.mxu0
        %v3104 = vadd.f32 %v2799, %v3103
        %v3105 = vpop.f32.mrf.mxu0
        %3106 = vmatprep.mubr.bf16.mxu0 %v1661
        %3107 = vmatmul.mubr.bf16.gmra.mxu0 %v1514
        %v3108 = vpop.f32.mrf.mxu0
        %v3109 = vadd.f32 %v2804, %v3108
        %v3110 = vpop.f32.mrf.mxu0
        %v3111 = vpop.f32.mrf.mxu0
        %v3112 = vadd.f32 %v2807, %v3111
        %v3113 = vpop.f32.mrf.mxu0
        %3114 = vmatprep.mubr.bf16.mxu0 %v1673
        %3115 = vmatmul.mubr.bf16.gmra.mxu0 %v1515
        %v3116 = vpop.f32.mrf.mxu0
        %v3117 = vadd.f32 %v2812, %v3116
        %v3118 = vpop.f32.mrf.mxu0
        %v3119 = vpop.f32.mrf.mxu0
        %v3120 = vadd.f32 %v2815, %v3119
        %v3121 = vpop.f32.mrf.mxu0
        %3122 = vmatprep.mubr.bf16.mxu0 %v1685
        %3123 = vmatmul.mubr.bf16.gmra.mxu0 %v1516
        %v3124 = vpop.f32.mrf.mxu0
        %v3125 = vadd.f32 %v2820, %v3124
        %v3126 = vpop.f32.mrf.mxu0
        %v3127 = vpop.f32.mrf.mxu0
        %v3128 = vadd.f32 %v2823, %v3127
        %v3129 = vpop.f32.mrf.mxu0
        %3130 = vmatprep.mubr.bf16.mxu0 %v1697
        %3131 = vmatmul.mubr.bf16.gmra.mxu0 %v1517
        %v3132 = vpop.f32.mrf.mxu0
        %v3133 = vadd.f32 %v2828, %v3132
        %v3134 = vpop.f32.mrf.mxu0
        %v3135 = vpop.f32.mrf.mxu0
        %v3136 = vadd.f32 %v2831, %v3135
        %v3137 = vpop.f32.mrf.mxu0
        %3138 = vmatprep.mubr.bf16.mxu0 %v1709
        %3139 = vmatmul.mubr.bf16.gmra.mxu0 %v1518
        %v3140 = vpop.f32.mrf.mxu0
        %v3141 = vadd.f32 %v2836, %v3140
        %v3142 = vpop.f32.mrf.mxu0
        %v3143 = vpop.f32.mrf.mxu0
        %v3144 = vadd.f32 %v2839, %v3143
        %v3145 = vpop.f32.mrf.mxu0
        %3146 = vmatprep.mubr.bf16.mxu0 %v1721
        %3147 = vmatmul.mubr.bf16.gmra.mxu0 %v1519
        %v3148 = vpop.f32.mrf.mxu0
        %v3149 = vadd.f32 %v2844, %v3148
        %v3150 = vpop.f32.mrf.mxu0
        %v3151 = vpop.f32.mrf.mxu0
        %v3152 = vadd.f32 %v2847, %v3151
        %v3153 = vpop.f32.mrf.mxu0
        %3154 = vmatprep.mubr.bf16.mxu0 %v1733
        %3155 = vmatmul.mubr.bf16.gmra.mxu0 %v1520
        %v3156 = vpop.f32.mrf.mxu0
        %v3157 = vadd.f32 %v2852, %v3156
        %v3158 = vpop.f32.mrf.mxu0
        %v3159 = vpop.f32.mrf.mxu0
        %v3160 = vadd.f32 %v2855, %v3159
        %v3161 = vpop.f32.mrf.mxu0
        %3162 = vmatprep.mubr.bf16.mxu0 %v1745
        %3163 = vmatmul.mubr.bf16.gmra.mxu0 %v1521
        %v3164 = vpop.f32.mrf.mxu0
        %v3165 = vadd.f32 %v2860, %v3164
        %v3166 = vpop.f32.mrf.mxu0
        %v3167 = vpop.f32.mrf.mxu0
        %v3168 = vadd.f32 %v2863, %v3167
        %v3169 = vpop.f32.mrf.mxu0
        %3170 = vmatprep.mubr.bf16.mxu0 %v1757
        %3171 = vmatmul.mubr.bf16.gmra.mxu0 %v1522
        %v3172 = vpop.f32.mrf.mxu0
        %v3173 = vadd.f32 %v2868, %v3172
        %v3174 = vpop.f32.mrf.mxu0
        %v3175 = vpop.f32.mrf.mxu0
        %v3176 = vadd.f32 %v2871, %v3175
        %v3177 = vpop.f32.mrf.mxu0
        %3178 = vmatprep.mubr.bf16.mxu0 %v1769
        %3179 = vmatmul.mubr.bf16.gmra.mxu0 %v1523
        %v3180 = vpop.f32.mrf.mxu0
        %v3181 = vadd.f32 %v2876, %v3180
        %v3182 = vpop.f32.mrf.mxu0
        %v3183 = vpop.f32.mrf.mxu0
        %v3184 = vadd.f32 %v2879, %v3183
        %v3185 = vpop.f32.mrf.mxu0
        %3186 = vmatprep.mubr.bf16.mxu0 %v1781
        %3187 = vmatmul.mubr.bf16.gmra.mxu0 %v1524
        %v3188 = vpop.f32.mrf.mxu0
        %v3189 = vadd.f32 %v2884, %v3188
        %v3190 = vpop.f32.mrf.mxu0
        %v3191 = vpop.f32.mrf.mxu0
        %v3192 = vadd.f32 %v2887, %v3191
        %v3193 = vpop.f32.mrf.mxu0
        %3194 = vdwg.mxu0
        %3195 = vmatprep.subr.bf16.mxu0 0
        %3196 = vmatpush1.bf16.msra.mxu0 %v3009
        %3197 = vmatprep.subr.bf16.mxu0 0
        %3198 = vmatpush1.bf16.msra.mxu0 %v3008
        %3199 = vmatprep.subr.bf16.mxu0 0
        %3200 = vmatpush1.bf16.msra.mxu0 %v3007
        %3201 = vmatprep.subr.bf16.mxu0 0
        %3202 = vmatpush1.bf16.msra.mxu0 %v3006
        %3203 = vmatprep.subr.bf16.mxu0 0
        %3204 = vmatpush1.bf16.msra.mxu0 %v3005
        %3205 = vmatprep.subr.bf16.mxu0 0
        %3206 = vmatpush1.bf16.msra.mxu0 %v3004
        %3207 = vmatprep.subr.bf16.mxu0 0
        %3208 = vmatpush1.bf16.msra.mxu0 %v3003
        %3209 = vmatprep.subr.bf16.mxu0 0
        %3210 = vmatpush1.bf16.msra.mxu0 %v3002
        %3211 = vmatprep.subr.bf16.mxu0 0
        %3212 = vmatpush2.bf16.msra.mxu0 0
        %3213 = vmatprep.subr.bf16.mxu0 0
        %3214 = vmatpush2.bf16.msra.mxu0 0
        %3215 = vmatprep.subr.bf16.mxu0 0
        %3216 = vmatpush2.bf16.msra.mxu0 0
        %3217 = vmatprep.subr.bf16.mxu0 0
        %3218 = vmatpush2.bf16.msra.mxu0 0
        %3219 = vmatprep.subr.bf16.mxu0 0
        %3220 = vmatpush2.bf16.msra.mxu0 0
        %3221 = vmatprep.subr.bf16.mxu0 0
        %3222 = vmatpush2.bf16.msra.mxu0 0
        %3223 = vmatprep.subr.bf16.mxu0 0
        %3224 = vmatpush2.bf16.msra.mxu0 0
        %3225 = vmatprep.subr.bf16.mxu0 0
        %3226 = vmatpush2.bf16.msra.mxu0 0
        %3227 = vmatprep.mubr.bf16.mxu0 0
        %3228 = vmatmul.mubr.bf16.gmra.mxu0 %v1801
        %v3229 = vpop.f32.mrf.mxu0
        %v3230 = vadd.f32 %v3069, %v3229
        %v3231 = vpop.f32.mrf.mxu0
        %v3232 = vpop.f32.mrf.mxu0
        %v3233 = vadd.f32 %v3072, %v3232
        %v3234 = vpop.f32.mrf.mxu0
        %3235 = vmatprep.mubr.bf16.mxu0 0
        %3236 = vmatmul.mubr.bf16.gmra.mxu0 %v1804
        %v3237 = vpop.f32.mrf.mxu0
        %v3238 = vadd.f32 %v3077, %v3237
        %v3239 = vpop.f32.mrf.mxu0
        %v3240 = vpop.f32.mrf.mxu0
        %v3241 = vadd.f32 %v3080, %v3240
        %v3242 = vpop.f32.mrf.mxu0
        %3243 = vmatprep.mubr.bf16.mxu0 0
        %3244 = vmatmul.mubr.bf16.gmra.mxu0 %v1807
        %v3245 = vpop.f32.mrf.mxu0
        %v3246 = vadd.f32 %v3085, %v3245
        %v3247 = vpop.f32.mrf.mxu0
        %v3248 = vpop.f32.mrf.mxu0
        %v3249 = vadd.f32 %v3088, %v3248
        %v3250 = vpop.f32.mrf.mxu0
        %3251 = vmatprep.mubr.bf16.mxu0 0
        %3252 = vmatmul.mubr.bf16.gmra.mxu0 %v1810
        %v3253 = vpop.f32.mrf.mxu0
        %v3254 = vadd.f32 %v3093, %v3253
        %v3255 = vpop.f32.mrf.mxu0
        %v3256 = vpop.f32.mrf.mxu0
        %v3257 = vadd.f32 %v3096, %v3256
        %v3258 = vpop.f32.mrf.mxu0
        %3259 = vmatprep.mubr.bf16.mxu0 0
        %3260 = vmatmul.mubr.bf16.gmra.mxu0 %v1813
        %v3261 = vpop.f32.mrf.mxu0
        %v3262 = vadd.f32 %v3101, %v3261
        %v3263 = vpop.f32.mrf.mxu0
        %v3264 = vpop.f32.mrf.mxu0
        %v3265 = vadd.f32 %v3104, %v3264
        %v3266 = vpop.f32.mrf.mxu0
        %3267 = vmatprep.mubr.bf16.mxu0 0
        %3268 = vmatmul.mubr.bf16.gmra.mxu0 %v1816
        %v3269 = vpop.f32.mrf.mxu0
        %v3270 = vadd.f32 %v3109, %v3269
        %v3271 = vpop.f32.mrf.mxu0
        %v3272 = vpop.f32.mrf.mxu0
        %v3273 = vadd.f32 %v3112, %v3272
        %v3274 = vpop.f32.mrf.mxu0
        %3275 = vmatprep.mubr.bf16.mxu0 0
        %3276 = vmatmul.mubr.bf16.gmra.mxu0 %v1819
        %v3277 = vpop.f32.mrf.mxu0
        %v3278 = vadd.f32 %v3117, %v3277
        %v3279 = vpop.f32.mrf.mxu0
        %v3280 = vpop.f32.mrf.mxu0
        %v3281 = vadd.f32 %v3120, %v3280
        %v3282 = vpop.f32.mrf.mxu0
        %3283 = vmatprep.mubr.bf16.mxu0 0
        %3284 = vmatmul.mubr.bf16.gmra.mxu0 %v1822
        %v3285 = vpop.f32.mrf.mxu0
        %v3286 = vadd.f32 %v3125, %v3285
        %v3287 = vpop.f32.mrf.mxu0
        %v3288 = vpop.f32.mrf.mxu0
        %v3289 = vadd.f32 %v3128, %v3288
        %v3290 = vpop.f32.mrf.mxu0
        %3291 = vmatprep.mubr.bf16.mxu0 0
        %3292 = vmatmul.mubr.bf16.gmra.mxu0 %v1825
        %v3293 = vpop.f32.mrf.mxu0
        %v3294 = vadd.f32 %v3133, %v3293
        %v3295 = vpop.f32.mrf.mxu0
        %v3296 = vpop.f32.mrf.mxu0
        %v3297 = vadd.f32 %v3136, %v3296
        %v3298 = vpop.f32.mrf.mxu0
        %3299 = vmatprep.mubr.bf16.mxu0 0
        %3300 = vmatmul.mubr.bf16.gmra.mxu0 %v1828
        %v3301 = vpop.f32.mrf.mxu0
        %v3302 = vadd.f32 %v3141, %v3301
        %v3303 = vpop.f32.mrf.mxu0
        %v3304 = vpop.f32.mrf.mxu0
        %v3305 = vadd.f32 %v3144, %v3304
        %v3306 = vpop.f32.mrf.mxu0
        %3307 = vmatprep.mubr.bf16.mxu0 0
        %3308 = vmatmul.mubr.bf16.gmra.mxu0 %v1831
        %v3309 = vpop.f32.mrf.mxu0
        %v3310 = vadd.f32 %v3149, %v3309
        %v3311 = vpop.f32.mrf.mxu0
        %v3312 = vpop.f32.mrf.mxu0
        %v3313 = vadd.f32 %v3152, %v3312
        %v3314 = vpop.f32.mrf.mxu0
        %3315 = vmatprep.mubr.bf16.mxu0 0
        %3316 = vmatmul.mubr.bf16.gmra.mxu0 %v1834
        %v3317 = vpop.f32.mrf.mxu0
        %v3318 = vadd.f32 %v3157, %v3317
        %v3319 = vpop.f32.mrf.mxu0
        %v3320 = vpop.f32.mrf.mxu0
        %v3321 = vadd.f32 %v3160, %v3320
        %v3322 = vpop.f32.mrf.mxu0
        %3323 = vmatprep.mubr.bf16.mxu0 0
        %3324 = vmatmul.mubr.bf16.gmra.mxu0 %v1837
        %v3325 = vpop.f32.mrf.mxu0
        %v3326 = vadd.f32 %v3165, %v3325
        %v3327 = vpop.f32.mrf.mxu0
        %v3328 = vpop.f32.mrf.mxu0
        %v3329 = vadd.f32 %v3168, %v3328
        %v3330 = vpop.f32.mrf.mxu0
        %3331 = vmatprep.mubr.bf16.mxu0 0
        %3332 = vmatmul.mubr.bf16.gmra.mxu0 %v1840
        %v3333 = vpop.f32.mrf.mxu0
        %v3334 = vadd.f32 %v3173, %v3333
        %v3335 = vpop.f32.mrf.mxu0
        %v3336 = vpop.f32.mrf.mxu0
        %v3337 = vadd.f32 %v3176, %v3336
        %v3338 = vpop.f32.mrf.mxu0
        %3339 = vmatprep.mubr.bf16.mxu0 0
        %3340 = vmatmul.mubr.bf16.gmra.mxu0 %v1843
        %v3341 = vpop.f32.mrf.mxu0
        %v3342 = vadd.f32 %v3181, %v3341
        %v3343 = vpop.f32.mrf.mxu0
        %v3344 = vpop.f32.mrf.mxu0
        %v3345 = vadd.f32 %v3184, %v3344
        %v3346 = vpop.f32.mrf.mxu0
        %3347 = vmatprep.mubr.bf16.mxu0 0
        %3348 = vmatmul.mubr.bf16.gmra.mxu0 %v1846
        %v3349 = vpop.f32.mrf.mxu0
        %v3350 = vadd.f32 %v3189, %v3349
        %v3351 = vpop.f32.mrf.mxu0
        %v3352 = vpop.f32.mrf.mxu0
        %v3353 = vadd.f32 %v3192, %v3352
        %v3354 = vpop.f32.mrf.mxu0
        %3355 = vdwg.mxu0
        %s3356 = scalar_lea.vmem [#allocation2], 24
        %v3357 = vld [vmem:[%s3356] sm:$0xf]
        %v3358 = vld [vmem:[%s3356 + $0x4] sm:$0xf]
        %v3359 = vld [vmem:[%s3356 + $0x8] sm:$0x1]
        %v3360 = vld [vmem:[%s3356 + $0xc] sm:$0xf]
        %v3361 = vld [vmem:[%s3356 + $0x10] sm:$0xf]
        %v3362 = vld [vmem:[%s3356 + $0x14] sm:$0x1]
        %v3363 = vld [vmem:[%s3356 + $0x18] sm:$0xf]
        %v3364 = vld [vmem:[%s3356 + $0x1c] sm:$0xf]
        %v3365 = vld [vmem:[%s3356 + $0x20] sm:$0x1]
        %v3366 = vld [vmem:[%s3356 + $0x24] sm:$0xf]
        %v3367 = vld [vmem:[%s3356 + $0x28] sm:$0xf]
        %v3368 = vld [vmem:[%s3356 + $0x2c] sm:$0x1]
        %v3369 = vld [vmem:[%s3356 + $0x30] sm:$0xf]
        %v3370 = vld [vmem:[%s3356 + $0x34] sm:$0xf]
        %v3371 = vld [vmem:[%s3356 + $0x38] sm:$0x1]
        %v3372 = vld [vmem:[%s3356 + $0x3c] sm:$0xf]
        %v3373 = vld [vmem:[%s3356 + $0x40] sm:$0xf]
        %v3374 = vld [vmem:[%s3356 + $0x44] sm:$0x1]
        %v3375 = vld [vmem:[%s3356 + $0x48] sm:$0xf]
        %v3376 = vld [vmem:[%s3356 + $0x4c] sm:$0xf]
        %v3377 = vld [vmem:[%s3356 + $0x50] sm:$0x1]
        %v3378 = vld [vmem:[%s3356 + $0x54] sm:$0xf]
        %v3379 = vld [vmem:[%s3356 + $0x58] sm:$0xf]
        %v3380 = vld [vmem:[%s3356 + $0x5c] sm:$0x1]
        %v3381 = vld [vmem:[%s3356 + $0x60] sm:$0xf]
        %v3382 = vld [vmem:[%s3356 + $0x64] sm:$0xf]
        %v3383 = vld [vmem:[%s3356 + $0x68] sm:$0x1]
        %v3384 = vld [vmem:[%s3356 + $0x6c] sm:$0xf]
        %v3385 = vld [vmem:[%s3356 + $0x70] sm:$0xf]
        %v3386 = vld [vmem:[%s3356 + $0x74] sm:$0x1]
        %v3387 = vld [vmem:[%s3356 + $0x78] sm:$0xf]
        %v3388 = vld [vmem:[%s3356 + $0x7c] sm:$0xf]
        %v3389 = vld [vmem:[%s3356 + $0x80] sm:$0x1]
        %v3390 = vld [vmem:[%s3356 + $0x84] sm:$0xf]
        %v3391 = vld [vmem:[%s3356 + $0x88] sm:$0xf]
        %v3392 = vld [vmem:[%s3356 + $0x8c] sm:$0x1]
        %v3393 = vld [vmem:[%s3356 + $0x90] sm:$0xf]
        %v3394 = vld [vmem:[%s3356 + $0x94] sm:$0xf]
        %v3395 = vld [vmem:[%s3356 + $0x98] sm:$0x1]
        %v3396 = vld [vmem:[%s3356 + $0x9c] sm:$0xf]
        %v3397 = vld [vmem:[%s3356 + $0xa0] sm:$0xf]
        %v3398 = vld [vmem:[%s3356 + $0xa4] sm:$0x1]
        %v3399 = vld [vmem:[%s3356 + $0xa8] sm:$0xf]
        %v3400 = vld [vmem:[%s3356 + $0xac] sm:$0xf]
        %v3401 = vld [vmem:[%s3356 + $0xb0] sm:$0x1]
        %v3402 = vld [vmem:[%s3356 + $0xb4] sm:$0xf]
        %v3403 = vld [vmem:[%s3356 + $0xb8] sm:$0xf]
        %v3404 = vld [vmem:[%s3356 + $0xbc] sm:$0x1]
        %v3437 = vunpack.c.l.b16 %v3357
        %v3438 = vunpack.c.l.b16 %v3358
        %v3439 = vunpack.c.l.b16 %v3360
        %v3440 = vunpack.c.l.b16 %v3361
        %v3441 = vunpack.c.l.b16 %v3363
        %v3442 = vunpack.c.l.b16 %v3364
        %v3443 = vunpack.c.l.b16 %v3366
        %v3444 = vunpack.c.l.b16 %v3367
        %v3445 = vunpack.c.l.b16 %v3369
        %v3446 = vunpack.c.l.b16 %v3370
        %v3447 = vunpack.c.l.b16 %v3372
        %v3448 = vunpack.c.l.b16 %v3373
        %v3449 = vunpack.c.l.b16 %v3375
        %v3450 = vunpack.c.l.b16 %v3376
        %v3451 = vunpack.c.l.b16 %v3378
        %v3452 = vunpack.c.l.b16 %v3379
        %v3453 = vunpack.c.l.b16 %v3381
        %v3454 = vunpack.c.l.b16 %v3382
        %v3455 = vunpack.c.l.b16 %v3384
        %v3456 = vunpack.c.l.b16 %v3385
        %v3457 = vunpack.c.l.b16 %v3387
        %v3458 = vunpack.c.l.b16 %v3388
        %v3459 = vunpack.c.l.b16 %v3390
        %v3460 = vunpack.c.l.b16 %v3391
        %v3461 = vunpack.c.l.b16 %v3393
        %v3462 = vunpack.c.l.b16 %v3394
        %v3463 = vunpack.c.l.b16 %v3396
        %v3464 = vunpack.c.l.b16 %v3397
        %v3465 = vunpack.c.l.b16 %v3399
        %v3466 = vunpack.c.l.b16 %v3400
        %v3467 = vunpack.c.l.b16 %v3402
        %v3468 = vunpack.c.l.b16 %v3403
        %v3469 = vpack.c.b16 %v3438, %v3437
        %v3470 = vpack.c.b16 %v3440, %v3439
        %v3471 = vpack.c.b16 %v3442, %v3441
        %v3472 = vpack.c.b16 %v3444, %v3443
        %v3473 = vpack.c.b16 %v3446, %v3445
        %v3474 = vpack.c.b16 %v3448, %v3447
        %v3475 = vpack.c.b16 %v3450, %v3449
        %v3476 = vpack.c.b16 %v3452, %v3451
        %v3477 = vpack.c.b16 %v3454, %v3453
        %v3478 = vpack.c.b16 %v3456, %v3455
        %v3479 = vpack.c.b16 %v3458, %v3457
        %v3480 = vpack.c.b16 %v3460, %v3459
        %v3481 = vpack.c.b16 %v3462, %v3461
        %v3482 = vpack.c.b16 %v3464, %v3463
        %v3483 = vpack.c.b16 %v3466, %v3465
        %v3484 = vpack.c.b16 %v3468, %v3467
        %v3517 = vunpack.c.l.b16 %v3359
        %v3518 = vunpack.c.l.b16 %v3362
        %v3519 = vunpack.c.l.b16 %v3365
        %v3520 = vunpack.c.l.b16 %v3368
        %v3521 = vunpack.c.l.b16 %v3371
        %v3522 = vunpack.c.l.b16 %v3374
        %v3523 = vunpack.c.l.b16 %v3377
        %v3524 = vunpack.c.l.b16 %v3380
        %v3525 = vunpack.c.l.b16 %v3383
        %v3526 = vunpack.c.l.b16 %v3386
        %v3527 = vunpack.c.l.b16 %v3389
        %v3528 = vunpack.c.l.b16 %v3392
        %v3529 = vunpack.c.l.b16 %v3395
        %v3530 = vunpack.c.l.b16 %v3398
        %v3531 = vunpack.c.l.b16 %v3401
        %v3532 = vunpack.c.l.b16 %v3404
        %v3533 = vpack.c.b16 %v3517, %v3517
        %v3534 = vpack.c.b16 %v3518, %v3518
        %v3535 = vpack.c.b16 %v3519, %v3519
        %v3536 = vpack.c.b16 %v3520, %v3520
        %v3537 = vpack.c.b16 %v3521, %v3521
        %v3538 = vpack.c.b16 %v3522, %v3522
        %v3539 = vpack.c.b16 %v3523, %v3523
        %v3540 = vpack.c.b16 %v3524, %v3524
        %v3541 = vpack.c.b16 %v3525, %v3525
        %v3542 = vpack.c.b16 %v3526, %v3526
        %v3543 = vpack.c.b16 %v3527, %v3527
        %v3544 = vpack.c.b16 %v3528, %v3528
        %v3545 = vpack.c.b16 %v3529, %v3529
        %v3546 = vpack.c.b16 %v3530, %v3530
        %v3547 = vpack.c.b16 %v3531, %v3531
        %v3548 = vpack.c.b16 %v3532, %v3532
        %v3550 = vshrl.u32 %v3469, 16
        %v3552 = vshll.u32 %v3469, 16
        %v3554 = vrot.slane %v3552, 1
        %v3555 = vor.u32 %v3550, %v3554
        %v3557 = vshll.u32 %v3533, 16
        %v3559 = vrot.slane %v3557, 1
        %v3560 = vsel %vm1589, %v3555, %v3559
        %v3562 = vshrl.u32 %v3470, 16
        %v3564 = vshll.u32 %v3470, 16
        %v3566 = vrot.slane %v3564, 1
        %v3567 = vor.u32 %v3562, %v3566
        %v3569 = vshll.u32 %v3534, 16
        %v3571 = vrot.slane %v3569, 1
        %v3572 = vsel %vm1589, %v3567, %v3571
        %v3574 = vshrl.u32 %v3471, 16
        %v3576 = vshll.u32 %v3471, 16
        %v3578 = vrot.slane %v3576, 1
        %v3579 = vor.u32 %v3574, %v3578
        %v3581 = vshll.u32 %v3535, 16
        %v3583 = vrot.slane %v3581, 1
        %v3584 = vsel %vm1589, %v3579, %v3583
        %v3586 = vshrl.u32 %v3472, 16
        %v3588 = vshll.u32 %v3472, 16
        %v3590 = vrot.slane %v3588, 1
        %v3591 = vor.u32 %v3586, %v3590
        %v3593 = vshll.u32 %v3536, 16
        %v3595 = vrot.slane %v3593, 1
        %v3596 = vsel %vm1589, %v3591, %v3595
        %v3598 = vshrl.u32 %v3473, 16
        %v3600 = vshll.u32 %v3473, 16
        %v3602 = vrot.slane %v3600, 1
        %v3603 = vor.u32 %v3598, %v3602
        %v3605 = vshll.u32 %v3537, 16
        %v3607 = vrot.slane %v3605, 1
        %v3608 = vsel %vm1589, %v3603, %v3607
        %v3610 = vshrl.u32 %v3474, 16
        %v3612 = vshll.u32 %v3474, 16
        %v3614 = vrot.slane %v3612, 1
        %v3615 = vor.u32 %v3610, %v3614
        %v3617 = vshll.u32 %v3538, 16
        %v3619 = vrot.slane %v3617, 1
        %v3620 = vsel %vm1589, %v3615, %v3619
        %v3622 = vshrl.u32 %v3475, 16
        %v3624 = vshll.u32 %v3475, 16
        %v3626 = vrot.slane %v3624, 1
        %v3627 = vor.u32 %v3622, %v3626
        %v3629 = vshll.u32 %v3539, 16
        %v3631 = vrot.slane %v3629, 1
        %v3632 = vsel %vm1589, %v3627, %v3631
        %v3634 = vshrl.u32 %v3476, 16
        %v3636 = vshll.u32 %v3476, 16
        %v3638 = vrot.slane %v3636, 1
        %v3639 = vor.u32 %v3634, %v3638
        %v3641 = vshll.u32 %v3540, 16
        %v3643 = vrot.slane %v3641, 1
        %v3644 = vsel %vm1589, %v3639, %v3643
        %v3646 = vshrl.u32 %v3477, 16
        %v3648 = vshll.u32 %v3477, 16
        %v3650 = vrot.slane %v3648, 1
        %v3651 = vor.u32 %v3646, %v3650
        %v3653 = vshll.u32 %v3541, 16
        %v3655 = vrot.slane %v3653, 1
        %v3656 = vsel %vm1589, %v3651, %v3655
        %v3658 = vshrl.u32 %v3478, 16
        %v3660 = vshll.u32 %v3478, 16
        %v3662 = vrot.slane %v3660, 1
        %v3663 = vor.u32 %v3658, %v3662
        %v3665 = vshll.u32 %v3542, 16
        %v3667 = vrot.slane %v3665, 1
        %v3668 = vsel %vm1589, %v3663, %v3667
        %v3670 = vshrl.u32 %v3479, 16
        %v3672 = vshll.u32 %v3479, 16
        %v3674 = vrot.slane %v3672, 1
        %v3675 = vor.u32 %v3670, %v3674
        %v3677 = vshll.u32 %v3543, 16
        %v3679 = vrot.slane %v3677, 1
        %v3680 = vsel %vm1589, %v3675, %v3679
        %v3682 = vshrl.u32 %v3480, 16
        %v3684 = vshll.u32 %v3480, 16
        %v3686 = vrot.slane %v3684, 1
        %v3687 = vor.u32 %v3682, %v3686
        %v3689 = vshll.u32 %v3544, 16
        %v3691 = vrot.slane %v3689, 1
        %v3692 = vsel %vm1589, %v3687, %v3691
        %v3694 = vshrl.u32 %v3481, 16
        %v3696 = vshll.u32 %v3481, 16
        %v3698 = vrot.slane %v3696, 1
        %v3699 = vor.u32 %v3694, %v3698
        %v3701 = vshll.u32 %v3545, 16
        %v3703 = vrot.slane %v3701, 1
        %v3704 = vsel %vm1589, %v3699, %v3703
        %v3706 = vshrl.u32 %v3482, 16
        %v3708 = vshll.u32 %v3482, 16
        %v3710 = vrot.slane %v3708, 1
        %v3711 = vor.u32 %v3706, %v3710
        %v3713 = vshll.u32 %v3546, 16
        %v3715 = vrot.slane %v3713, 1
        %v3716 = vsel %vm1589, %v3711, %v3715
        %v3718 = vshrl.u32 %v3483, 16
        %v3720 = vshll.u32 %v3483, 16
        %v3722 = vrot.slane %v3720, 1
        %v3723 = vor.u32 %v3718, %v3722
        %v3725 = vshll.u32 %v3547, 16
        %v3727 = vrot.slane %v3725, 1
        %v3728 = vsel %vm1589, %v3723, %v3727
        %v3730 = vshrl.u32 %v3484, 16
        %v3732 = vshll.u32 %v3484, 16
        %v3734 = vrot.slane %v3732, 1
        %v3735 = vor.u32 %v3730, %v3734
        %v3737 = vshll.u32 %v3548, 16
        %v3739 = vrot.slane %v3737, 1
        %v3740 = vsel %vm1589, %v3735, %v3739
        %v3757 = vrot.slane %v3469, 1
        %v3758 = vrot.slane %v3533, 1
        %v3759 = vsel %vm1798, %v3757, %v3758
        %v3760 = vrot.slane %v3470, 1
        %v3761 = vrot.slane %v3534, 1
        %v3762 = vsel %vm1798, %v3760, %v3761
        %v3763 = vrot.slane %v3471, 1
        %v3764 = vrot.slane %v3535, 1
        %v3765 = vsel %vm1798, %v3763, %v3764
        %v3766 = vrot.slane %v3472, 1
        %v3767 = vrot.slane %v3536, 1
        %v3768 = vsel %vm1798, %v3766, %v3767
        %v3769 = vrot.slane %v3473, 1
        %v3770 = vrot.slane %v3537, 1
        %v3771 = vsel %vm1798, %v3769, %v3770
        %v3772 = vrot.slane %v3474, 1
        %v3773 = vrot.slane %v3538, 1
        %v3774 = vsel %vm1798, %v3772, %v3773
        %v3775 = vrot.slane %v3475, 1
        %v3776 = vrot.slane %v3539, 1
        %v3777 = vsel %vm1798, %v3775, %v3776
        %v3778 = vrot.slane %v3476, 1
        %v3779 = vrot.slane %v3540, 1
        %v3780 = vsel %vm1798, %v3778, %v3779
        %v3781 = vrot.slane %v3477, 1
        %v3782 = vrot.slane %v3541, 1
        %v3783 = vsel %vm1798, %v3781, %v3782
        %v3784 = vrot.slane %v3478, 1
        %v3785 = vrot.slane %v3542, 1
        %v3786 = vsel %vm1798, %v3784, %v3785
        %v3787 = vrot.slane %v3479, 1
        %v3788 = vrot.slane %v3543, 1
        %v3789 = vsel %vm1798, %v3787, %v3788
        %v3790 = vrot.slane %v3480, 1
        %v3791 = vrot.slane %v3544, 1
        %v3792 = vsel %vm1798, %v3790, %v3791
        %v3793 = vrot.slane %v3481, 1
        %v3794 = vrot.slane %v3545, 1
        %v3795 = vsel %vm1798, %v3793, %v3794
        %v3796 = vrot.slane %v3482, 1
        %v3797 = vrot.slane %v3546, 1
        %v3798 = vsel %vm1798, %v3796, %v3797
        %v3799 = vrot.slane %v3483, 1
        %v3800 = vrot.slane %v3547, 1
        %v3801 = vsel %vm1798, %v3799, %v3800
        %v3802 = vrot.slane %v3484, 1
        %v3803 = vrot.slane %v3548, 1
        %v3804 = vsel %vm1798, %v3802, %v3803
        %s3821 = scalar_lea.vmem [#allocation8], 384
        %v3822 = vld [vmem:[%s3821] sm:$0xf]
        %v3823 = vld [vmem:[%s3821 + $0x4] sm:$0xf]
        %v3824 = vld [vmem:[%s3821 + $0x8] sm:$0xf]
        %v3825 = vld [vmem:[%s3821 + $0xc] sm:$0xf]
        %v3826 = vld [vmem:[%s3821 + $0x10] sm:$0xf]
        %v3827 = vld [vmem:[%s3821 + $0x14] sm:$0xf]
        %v3828 = vld [vmem:[%s3821 + $0x18] sm:$0xf]
        %v3829 = vld [vmem:[%s3821 + $0x1c] sm:$0xf]
        %v3830 = vld [vmem:[%s3821 + $0x20] sm:$0xf]
        %v3831 = vld [vmem:[%s3821 + $0x24] sm:$0xf]
        %v3832 = vld [vmem:[%s3821 + $0x28] sm:$0xf]
        %v3833 = vld [vmem:[%s3821 + $0x2c] sm:$0xf]
        %v3834 = vld [vmem:[%s3821 + $0x30] sm:$0xf]
        %v3835 = vld [vmem:[%s3821 + $0x34] sm:$0xf]
        %v3836 = vld [vmem:[%s3821 + $0x38] sm:$0xf]
        %v3837 = vld [vmem:[%s3821 + $0x3c] sm:$0xf]
        %v3838 = vld [vmem:[%s3821 + $0x40] sm:$0xf]
        %v3839 = vld [vmem:[%s3821 + $0x44] sm:$0xf]
        %v3840 = vld [vmem:[%s3821 + $0x48] sm:$0xf]
        %v3841 = vld [vmem:[%s3821 + $0x4c] sm:$0xf]
        %v3842 = vld [vmem:[%s3821 + $0x50] sm:$0xf]
        %v3843 = vld [vmem:[%s3821 + $0x54] sm:$0xf]
        %v3844 = vld [vmem:[%s3821 + $0x58] sm:$0xf]
        %v3845 = vld [vmem:[%s3821 + $0x5c] sm:$0xf]
        %v3846 = vld [vmem:[%s3821 + $0x60] sm:$0xf]
        %v3847 = vld [vmem:[%s3821 + $0x64] sm:$0xf]
        %v3848 = vld [vmem:[%s3821 + $0x68] sm:$0xf]
        %v3849 = vld [vmem:[%s3821 + $0x6c] sm:$0xf]
        %v3850 = vld [vmem:[%s3821 + $0x70] sm:$0xf]
        %v3851 = vld [vmem:[%s3821 + $0x74] sm:$0xf]
        %v3852 = vld [vmem:[%s3821 + $0x78] sm:$0xf]
        %v3853 = vld [vmem:[%s3821 + $0x7c] sm:$0xf]
        %v3854 = vld [vmem:[%s3821 + $0x80] sm:$0xf]
        %v3855 = vld [vmem:[%s3821 + $0x84] sm:$0xf]
        %v3856 = vld [vmem:[%s3821 + $0x88] sm:$0xf]
        %v3857 = vld [vmem:[%s3821 + $0x8c] sm:$0xf]
        %v3858 = vld [vmem:[%s3821 + $0x90] sm:$0xf]
        %v3859 = vld [vmem:[%s3821 + $0x94] sm:$0xf]
        %v3860 = vld [vmem:[%s3821 + $0x98] sm:$0xf]
        %v3861 = vld [vmem:[%s3821 + $0x9c] sm:$0xf]
        %v3862 = vld [vmem:[%s3821 + $0xa0] sm:$0xf]
        %v3863 = vld [vmem:[%s3821 + $0xa4] sm:$0xf]
        %v3864 = vld [vmem:[%s3821 + $0xa8] sm:$0xf]
        %v3865 = vld [vmem:[%s3821 + $0xac] sm:$0xf]
        %v3866 = vld [vmem:[%s3821 + $0xb0] sm:$0xf]
        %v3867 = vld [vmem:[%s3821 + $0xb4] sm:$0xf]
        %v3868 = vld [vmem:[%s3821 + $0xb8] sm:$0xf]
        %v3869 = vld [vmem:[%s3821 + $0xbc] sm:$0xf]
        %v3918 = vunpack.c.l.b16 %v3822
        %v3919 = vunpack.c.l.b16 %v3823
        %v3920 = vunpack.c.l.b16 %v3824
        %v3921 = vunpack.c.l.b16 %v3825
        %v3922 = vunpack.c.l.b16 %v3826
        %v3923 = vunpack.c.l.b16 %v3827
        %v3924 = vunpack.c.l.b16 %v3828
        %v3925 = vunpack.c.l.b16 %v3829
        %v3926 = vunpack.c.l.b16 %v3830
        %v3927 = vunpack.c.l.b16 %v3831
        %v3928 = vunpack.c.l.b16 %v3832
        %v3929 = vunpack.c.l.b16 %v3833
        %v3930 = vunpack.c.l.b16 %v3834
        %v3931 = vunpack.c.l.b16 %v3835
        %v3932 = vunpack.c.l.b16 %v3836
        %v3933 = vunpack.c.l.b16 %v3837
        %v3934 = vunpack.c.l.b16 %v3838
        %v3935 = vunpack.c.l.b16 %v3839
        %v3936 = vunpack.c.l.b16 %v3840
        %v3937 = vunpack.c.l.b16 %v3841
        %v3938 = vunpack.c.l.b16 %v3842
        %v3939 = vunpack.c.l.b16 %v3843
        %v3940 = vunpack.c.l.b16 %v3844
        %v3941 = vunpack.c.l.b16 %v3845
        %v3942 = vunpack.c.l.b16 %v3846
        %v3943 = vunpack.c.l.b16 %v3847
        %v3944 = vunpack.c.l.b16 %v3848
        %v3945 = vunpack.c.l.b16 %v3849
        %v3946 = vunpack.c.l.b16 %v3850
        %v3947 = vunpack.c.l.b16 %v3851
        %v3948 = vunpack.c.l.b16 %v3852
        %v3949 = vunpack.c.l.b16 %v3853
        %v3950 = vunpack.c.l.b16 %v3854
        %v3951 = vunpack.c.l.b16 %v3855
        %v3952 = vunpack.c.l.b16 %v3856
        %v3953 = vunpack.c.l.b16 %v3857
        %v3954 = vunpack.c.l.b16 %v3858
        %v3955 = vunpack.c.l.b16 %v3859
        %v3956 = vunpack.c.l.b16 %v3860
        %v3957 = vunpack.c.l.b16 %v3861
        %v3958 = vunpack.c.l.b16 %v3862
        %v3959 = vunpack.c.l.b16 %v3863
        %v3960 = vunpack.c.l.b16 %v3864
        %v3961 = vunpack.c.l.b16 %v3865
        %v3962 = vunpack.c.l.b16 %v3866
        %v3963 = vunpack.c.l.b16 %v3867
        %v3964 = vunpack.c.l.b16 %v3868
        %v3965 = vunpack.c.l.b16 %v3869
        %v3966 = vpack.c.b16 %v3919, %v3918
        %v3967 = vpack.c.b16 %v3921, %v3920
        %v3968 = vpack.c.b16 %v3923, %v3922
        %v3969 = vpack.c.b16 %v3925, %v3924
        %v3970 = vpack.c.b16 %v3927, %v3926
        %v3971 = vpack.c.b16 %v3929, %v3928
        %v3972 = vpack.c.b16 %v3931, %v3930
        %v3973 = vpack.c.b16 %v3933, %v3932
        %v3974 = vpack.c.b16 %v3935, %v3934
        %v3975 = vpack.c.b16 %v3937, %v3936
        %v3976 = vpack.c.b16 %v3939, %v3938
        %v3977 = vpack.c.b16 %v3941, %v3940
        %v3978 = vpack.c.b16 %v3943, %v3942
        %v3979 = vpack.c.b16 %v3945, %v3944
        %v3980 = vpack.c.b16 %v3947, %v3946
        %v3981 = vpack.c.b16 %v3949, %v3948
        %v3982 = vpack.c.b16 %v3951, %v3950
        %v3983 = vpack.c.b16 %v3953, %v3952
        %v3984 = vpack.c.b16 %v3955, %v3954
        %v3985 = vpack.c.b16 %v3957, %v3956
        %v3986 = vpack.c.b16 %v3959, %v3958
        %v3987 = vpack.c.b16 %v3961, %v3960
        %v3988 = vpack.c.b16 %v3963, %v3962
        %v3989 = vpack.c.b16 %v3965, %v3964
        %4014 = vmatprep.subr.bf16.mxu0 0
        %4015 = vmatpush1.bf16.msra.mxu0 %v3973
        %4016 = vmatprep.subr.bf16.mxu0 0
        %4017 = vmatpush1.bf16.msra.mxu0 %v3972
        %4018 = vmatprep.subr.bf16.mxu0 0
        %4019 = vmatpush1.bf16.msra.mxu0 %v3971
        %4020 = vmatprep.subr.bf16.mxu0 0
        %4021 = vmatpush1.bf16.msra.mxu0 %v3970
        %4022 = vmatprep.subr.bf16.mxu0 0
        %4023 = vmatpush1.bf16.msra.mxu0 %v3969
        %4024 = vmatprep.subr.bf16.mxu0 0
        %4025 = vmatpush1.bf16.msra.mxu0 %v3968
        %4026 = vmatprep.subr.bf16.mxu0 0
        %4027 = vmatpush1.bf16.msra.mxu0 %v3967
        %4028 = vmatprep.subr.bf16.mxu0 0
        %4029 = vmatpush1.bf16.msra.mxu0 %v3966
        %4030 = vmatprep.subr.bf16.mxu0 0
        %4031 = vmatpush2.bf16.msra.mxu0 %v3981
        %4032 = vmatprep.subr.bf16.mxu0 0
        %4033 = vmatpush2.bf16.msra.mxu0 %v3980
        %4034 = vmatprep.subr.bf16.mxu0 0
        %4035 = vmatpush2.bf16.msra.mxu0 %v3979
        %4036 = vmatprep.subr.bf16.mxu0 0
        %4037 = vmatpush2.bf16.msra.mxu0 %v3978
        %4038 = vmatprep.subr.bf16.mxu0 0
        %4039 = vmatpush2.bf16.msra.mxu0 %v3977
        %4040 = vmatprep.subr.bf16.mxu0 0
        %4041 = vmatpush2.bf16.msra.mxu0 %v3976
        %4042 = vmatprep.subr.bf16.mxu0 0
        %4043 = vmatpush2.bf16.msra.mxu0 %v3975
        %4044 = vmatprep.subr.bf16.mxu0 0
        %4045 = vmatpush2.bf16.msra.mxu0 %v3974
        %4046 = vmatprep.mubr.bf16.mxu0 %v3560
        %4047 = vmatmul.mubr.bf16.gmra.mxu0 %v3469
        %v4048 = vpop.f32.mrf.mxu0
        %v4049 = vadd.f32 0.0, %v4048
        %v4050 = vpop.f32.mrf.mxu0
        %v4051 = vpop.f32.mrf.mxu0
        %v4052 = vadd.f32 0.0, %v4051
        %v4053 = vpop.f32.mrf.mxu0
        %4054 = vmatprep.mubr.bf16.mxu0 %v3572
        %4055 = vmatmul.mubr.bf16.gmra.mxu0 %v3470
        %v4056 = vpop.f32.mrf.mxu0
        %v4057 = vadd.f32 0.0, %v4056
        %v4058 = vpop.f32.mrf.mxu0
        %v4059 = vpop.f32.mrf.mxu0
        %v4060 = vadd.f32 0.0, %v4059
        %v4061 = vpop.f32.mrf.mxu0
        %4062 = vmatprep.mubr.bf16.mxu0 %v3584
        %4063 = vmatmul.mubr.bf16.gmra.mxu0 %v3471
        %v4064 = vpop.f32.mrf.mxu0
        %v4065 = vadd.f32 0.0, %v4064
        %v4066 = vpop.f32.mrf.mxu0
        %v4067 = vpop.f32.mrf.mxu0
        %v4068 = vadd.f32 0.0, %v4067
        %v4069 = vpop.f32.mrf.mxu0
        %4070 = vmatprep.mubr.bf16.mxu0 %v3596
        %4071 = vmatmul.mubr.bf16.gmra.mxu0 %v3472
        %v4072 = vpop.f32.mrf.mxu0
        %v4073 = vadd.f32 0.0, %v4072
        %v4074 = vpop.f32.mrf.mxu0
        %v4075 = vpop.f32.mrf.mxu0
        %v4076 = vadd.f32 0.0, %v4075
        %v4077 = vpop.f32.mrf.mxu0
        %4078 = vmatprep.mubr.bf16.mxu0 %v3608
        %4079 = vmatmul.mubr.bf16.gmra.mxu0 %v3473
        %v4080 = vpop.f32.mrf.mxu0
        %v4081 = vadd.f32 0.0, %v4080
        %v4082 = vpop.f32.mrf.mxu0
        %v4083 = vpop.f32.mrf.mxu0
        %v4084 = vadd.f32 0.0, %v4083
        %v4085 = vpop.f32.mrf.mxu0
        %4086 = vmatprep.mubr.bf16.mxu0 %v3620
        %4087 = vmatmul.mubr.bf16.gmra.mxu0 %v3474
        %v4088 = vpop.f32.mrf.mxu0
        %v4089 = vadd.f32 0.0, %v4088
        %v4090 = vpop.f32.mrf.mxu0
        %v4091 = vpop.f32.mrf.mxu0
        %v4092 = vadd.f32 0.0, %v4091
        %v4093 = vpop.f32.mrf.mxu0
        %4094 = vmatprep.mubr.bf16.mxu0 %v3632
        %4095 = vmatmul.mubr.bf16.gmra.mxu0 %v3475
        %v4096 = vpop.f32.mrf.mxu0
        %v4097 = vadd.f32 0.0, %v4096
        %v4098 = vpop.f32.mrf.mxu0
        %v4099 = vpop.f32.mrf.mxu0
        %v4100 = vadd.f32 0.0, %v4099
        %v4101 = vpop.f32.mrf.mxu0
        %4102 = vmatprep.mubr.bf16.mxu0 %v3644
        %4103 = vmatmul.mubr.bf16.gmra.mxu0 %v3476
        %v4104 = vpop.f32.mrf.mxu0
        %v4105 = vadd.f32 0.0, %v4104
        %v4106 = vpop.f32.mrf.mxu0
        %v4107 = vpop.f32.mrf.mxu0
        %v4108 = vadd.f32 0.0, %v4107
        %v4109 = vpop.f32.mrf.mxu0
        %4110 = vmatprep.mubr.bf16.mxu0 %v3656
        %4111 = vmatmul.mubr.bf16.gmra.mxu0 %v3477
        %v4112 = vpop.f32.mrf.mxu0
        %v4113 = vadd.f32 0.0, %v4112
        %v4114 = vpop.f32.mrf.mxu0
        %v4115 = vpop.f32.mrf.mxu0
        %v4116 = vadd.f32 0.0, %v4115
        %v4117 = vpop.f32.mrf.mxu0
        %4118 = vmatprep.mubr.bf16.mxu0 %v3668
        %4119 = vmatmul.mubr.bf16.gmra.mxu0 %v3478
        %v4120 = vpop.f32.mrf.mxu0
        %v4121 = vadd.f32 0.0, %v4120
        %v4122 = vpop.f32.mrf.mxu0
        %v4123 = vpop.f32.mrf.mxu0
        %v4124 = vadd.f32 0.0, %v4123
        %v4125 = vpop.f32.mrf.mxu0
        %4126 = vmatprep.mubr.bf16.mxu0 %v3680
        %4127 = vmatmul.mubr.bf16.gmra.mxu0 %v3479
        %v4128 = vpop.f32.mrf.mxu0
        %v4129 = vadd.f32 0.0, %v4128
        %v4130 = vpop.f32.mrf.mxu0
        %v4131 = vpop.f32.mrf.mxu0
        %v4132 = vadd.f32 0.0, %v4131
        %v4133 = vpop.f32.mrf.mxu0
        %4134 = vmatprep.mubr.bf16.mxu0 %v3692
        %4135 = vmatmul.mubr.bf16.gmra.mxu0 %v3480
        %v4136 = vpop.f32.mrf.mxu0
        %v4137 = vadd.f32 0.0, %v4136
        %v4138 = vpop.f32.mrf.mxu0
        %v4139 = vpop.f32.mrf.mxu0
        %v4140 = vadd.f32 0.0, %v4139
        %v4141 = vpop.f32.mrf.mxu0
        %4142 = vmatprep.mubr.bf16.mxu0 %v3704
        %4143 = vmatmul.mubr.bf16.gmra.mxu0 %v3481
        %v4144 = vpop.f32.mrf.mxu0
        %v4145 = vadd.f32 0.0, %v4144
        %v4146 = vpop.f32.mrf.mxu0
        %v4147 = vpop.f32.mrf.mxu0
        %v4148 = vadd.f32 0.0, %v4147
        %v4149 = vpop.f32.mrf.mxu0
        %4150 = vmatprep.mubr.bf16.mxu0 %v3716
        %4151 = vmatmul.mubr.bf16.gmra.mxu0 %v3482
        %v4152 = vpop.f32.mrf.mxu0
        %v4153 = vadd.f32 0.0, %v4152
        %v4154 = vpop.f32.mrf.mxu0
        %v4155 = vpop.f32.mrf.mxu0
        %v4156 = vadd.f32 0.0, %v4155
        %v4157 = vpop.f32.mrf.mxu0
        %4158 = vmatprep.mubr.bf16.mxu0 %v3728
        %4159 = vmatmul.mubr.bf16.gmra.mxu0 %v3483
        %v4160 = vpop.f32.mrf.mxu0
        %v4161 = vadd.f32 0.0, %v4160
        %v4162 = vpop.f32.mrf.mxu0
        %v4163 = vpop.f32.mrf.mxu0
        %v4164 = vadd.f32 0.0, %v4163
        %v4165 = vpop.f32.mrf.mxu0
        %4166 = vmatprep.mubr.bf16.mxu0 %v3740
        %4167 = vmatmul.mubr.bf16.gmra.mxu0 %v3484
        %v4168 = vpop.f32.mrf.mxu0
        %v4169 = vadd.f32 0.0, %v4168
        %v4170 = vpop.f32.mrf.mxu0
        %v4171 = vpop.f32.mrf.mxu0
        %v4172 = vadd.f32 0.0, %v4171
        %v4173 = vpop.f32.mrf.mxu0
        %4174 = vdwg.mxu0
        %4175 = vmatprep.subr.bf16.mxu0 0
        %4176 = vmatpush1.bf16.msra.mxu0 %v3989
        %4177 = vmatprep.subr.bf16.mxu0 0
        %4178 = vmatpush1.bf16.msra.mxu0 %v3988
        %4179 = vmatprep.subr.bf16.mxu0 0
        %4180 = vmatpush1.bf16.msra.mxu0 %v3987
        %4181 = vmatprep.subr.bf16.mxu0 0
        %4182 = vmatpush1.bf16.msra.mxu0 %v3986
        %4183 = vmatprep.subr.bf16.mxu0 0
        %4184 = vmatpush1.bf16.msra.mxu0 %v3985
        %4185 = vmatprep.subr.bf16.mxu0 0
        %4186 = vmatpush1.bf16.msra.mxu0 %v3984
        %4187 = vmatprep.subr.bf16.mxu0 0
        %4188 = vmatpush1.bf16.msra.mxu0 %v3983
        %4189 = vmatprep.subr.bf16.mxu0 0
        %4190 = vmatpush1.bf16.msra.mxu0 %v3982
        %4191 = vmatprep.subr.bf16.mxu0 0
        %4192 = vmatpush2.bf16.msra.mxu0 0
        %4193 = vmatprep.subr.bf16.mxu0 0
        %4194 = vmatpush2.bf16.msra.mxu0 0
        %4195 = vmatprep.subr.bf16.mxu0 0
        %4196 = vmatpush2.bf16.msra.mxu0 0
        %4197 = vmatprep.subr.bf16.mxu0 0
        %4198 = vmatpush2.bf16.msra.mxu0 0
        %4199 = vmatprep.subr.bf16.mxu0 0
        %4200 = vmatpush2.bf16.msra.mxu0 0
        %4201 = vmatprep.subr.bf16.mxu0 0
        %4202 = vmatpush2.bf16.msra.mxu0 0
        %4203 = vmatprep.subr.bf16.mxu0 0
        %4204 = vmatpush2.bf16.msra.mxu0 0
        %4205 = vmatprep.subr.bf16.mxu0 0
        %4206 = vmatpush2.bf16.msra.mxu0 0
        %4207 = vmatprep.mubr.bf16.mxu0 0
        %4208 = vmatmul.mubr.bf16.gmra.mxu0 %v3759
        %v4209 = vpop.f32.mrf.mxu0
        %v4210 = vadd.f32 %v4049, %v4209
        %v4211 = vpop.f32.mrf.mxu0
        %v4212 = vpop.f32.mrf.mxu0
        %v4213 = vadd.f32 %v4052, %v4212
        %v4214 = vpop.f32.mrf.mxu0
        %4215 = vmatprep.mubr.bf16.mxu0 0
        %4216 = vmatmul.mubr.bf16.gmra.mxu0 %v3762
        %v4217 = vpop.f32.mrf.mxu0
        %v4218 = vadd.f32 %v4057, %v4217
        %v4219 = vpop.f32.mrf.mxu0
        %v4220 = vpop.f32.mrf.mxu0
        %v4221 = vadd.f32 %v4060, %v4220
        %v4222 = vpop.f32.mrf.mxu0
        %4223 = vmatprep.mubr.bf16.mxu0 0
        %4224 = vmatmul.mubr.bf16.gmra.mxu0 %v3765
        %v4225 = vpop.f32.mrf.mxu0
        %v4226 = vadd.f32 %v4065, %v4225
        %v4227 = vpop.f32.mrf.mxu0
        %v4228 = vpop.f32.mrf.mxu0
        %v4229 = vadd.f32 %v4068, %v4228
        %v4230 = vpop.f32.mrf.mxu0
        %4231 = vmatprep.mubr.bf16.mxu0 0
        %4232 = vmatmul.mubr.bf16.gmra.mxu0 %v3768
        %v4233 = vpop.f32.mrf.mxu0
        %v4234 = vadd.f32 %v4073, %v4233
        %v4235 = vpop.f32.mrf.mxu0
        %v4236 = vpop.f32.mrf.mxu0
        %v4237 = vadd.f32 %v4076, %v4236
        %v4238 = vpop.f32.mrf.mxu0
        %4239 = vmatprep.mubr.bf16.mxu0 0
        %4240 = vmatmul.mubr.bf16.gmra.mxu0 %v3771
        %v4241 = vpop.f32.mrf.mxu0
        %v4242 = vadd.f32 %v4081, %v4241
        %v4243 = vpop.f32.mrf.mxu0
        %v4244 = vpop.f32.mrf.mxu0
        %v4245 = vadd.f32 %v4084, %v4244
        %v4246 = vpop.f32.mrf.mxu0
        %4247 = vmatprep.mubr.bf16.mxu0 0
        %4248 = vmatmul.mubr.bf16.gmra.mxu0 %v3774
        %v4249 = vpop.f32.mrf.mxu0
        %v4250 = vadd.f32 %v4089, %v4249
        %v4251 = vpop.f32.mrf.mxu0
        %v4252 = vpop.f32.mrf.mxu0
        %v4253 = vadd.f32 %v4092, %v4252
        %v4254 = vpop.f32.mrf.mxu0
        %4255 = vmatprep.mubr.bf16.mxu0 0
        %4256 = vmatmul.mubr.bf16.gmra.mxu0 %v3777
        %v4257 = vpop.f32.mrf.mxu0
        %v4258 = vadd.f32 %v4097, %v4257
        %v4259 = vpop.f32.mrf.mxu0
        %v4260 = vpop.f32.mrf.mxu0
        %v4261 = vadd.f32 %v4100, %v4260
        %v4262 = vpop.f32.mrf.mxu0
        %4263 = vmatprep.mubr.bf16.mxu0 0
        %4264 = vmatmul.mubr.bf16.gmra.mxu0 %v3780
        %v4265 = vpop.f32.mrf.mxu0
        %v4266 = vadd.f32 %v4105, %v4265
        %v4267 = vpop.f32.mrf.mxu0
        %v4268 = vpop.f32.mrf.mxu0
        %v4269 = vadd.f32 %v4108, %v4268
        %v4270 = vpop.f32.mrf.mxu0
        %4271 = vmatprep.mubr.bf16.mxu0 0
        %4272 = vmatmul.mubr.bf16.gmra.mxu0 %v3783
        %v4273 = vpop.f32.mrf.mxu0
        %v4274 = vadd.f32 %v4113, %v4273
        %v4275 = vpop.f32.mrf.mxu0
        %v4276 = vpop.f32.mrf.mxu0
        %v4277 = vadd.f32 %v4116, %v4276
        %v4278 = vpop.f32.mrf.mxu0
        %4279 = vmatprep.mubr.bf16.mxu0 0
        %4280 = vmatmul.mubr.bf16.gmra.mxu0 %v3786
        %v4281 = vpop.f32.mrf.mxu0
        %v4282 = vadd.f32 %v4121, %v4281
        %v4283 = vpop.f32.mrf.mxu0
        %v4284 = vpop.f32.mrf.mxu0
        %v4285 = vadd.f32 %v4124, %v4284
        %v4286 = vpop.f32.mrf.mxu0
        %4287 = vmatprep.mubr.bf16.mxu0 0
        %4288 = vmatmul.mubr.bf16.gmra.mxu0 %v3789
        %v4289 = vpop.f32.mrf.mxu0
        %v4290 = vadd.f32 %v4129, %v4289
        %v4291 = vpop.f32.mrf.mxu0
        %v4292 = vpop.f32.mrf.mxu0
        %v4293 = vadd.f32 %v4132, %v4292
        %v4294 = vpop.f32.mrf.mxu0
        %4295 = vmatprep.mubr.bf16.mxu0 0
        %4296 = vmatmul.mubr.bf16.gmra.mxu0 %v3792
        %v4297 = vpop.f32.mrf.mxu0
        %v4298 = vadd.f32 %v4137, %v4297
        %v4299 = vpop.f32.mrf.mxu0
        %v4300 = vpop.f32.mrf.mxu0
        %v4301 = vadd.f32 %v4140, %v4300
        %v4302 = vpop.f32.mrf.mxu0
        %4303 = vmatprep.mubr.bf16.mxu0 0
        %4304 = vmatmul.mubr.bf16.gmra.mxu0 %v3795
        %v4305 = vpop.f32.mrf.mxu0
        %v4306 = vadd.f32 %v4145, %v4305
        %v4307 = vpop.f32.mrf.mxu0
        %v4308 = vpop.f32.mrf.mxu0
        %v4309 = vadd.f32 %v4148, %v4308
        %v4310 = vpop.f32.mrf.mxu0
        %4311 = vmatprep.mubr.bf16.mxu0 0
        %4312 = vmatmul.mubr.bf16.gmra.mxu0 %v3798
        %v4313 = vpop.f32.mrf.mxu0
        %v4314 = vadd.f32 %v4153, %v4313
        %v4315 = vpop.f32.mrf.mxu0
        %v4316 = vpop.f32.mrf.mxu0
        %v4317 = vadd.f32 %v4156, %v4316
        %v4318 = vpop.f32.mrf.mxu0
        %4319 = vmatprep.mubr.bf16.mxu0 0
        %4320 = vmatmul.mubr.bf16.gmra.mxu0 %v3801
        %v4321 = vpop.f32.mrf.mxu0
        %v4322 = vadd.f32 %v4161, %v4321
        %v4323 = vpop.f32.mrf.mxu0
        %v4324 = vpop.f32.mrf.mxu0
        %v4325 = vadd.f32 %v4164, %v4324
        %v4326 = vpop.f32.mrf.mxu0
        %4327 = vmatprep.mubr.bf16.mxu0 0
        %4328 = vmatmul.mubr.bf16.gmra.mxu0 %v3804
        %v4329 = vpop.f32.mrf.mxu0
        %v4330 = vadd.f32 %v4169, %v4329
        %v4331 = vpop.f32.mrf.mxu0
        %v4332 = vpop.f32.mrf.mxu0
        %v4333 = vadd.f32 %v4172, %v4332
        %v4334 = vpop.f32.mrf.mxu0
        %4335 = vdwg.mxu0
        %v4336 = vadd.f32 %v3230, %v4210
        %v4337 = vadd.f32 %v3233, %v4213
        %v4338 = vadd.f32 %v3238, %v4218
        %v4339 = vadd.f32 %v3241, %v4221
        %v4340 = vadd.f32 %v3246, %v4226
        %v4341 = vadd.f32 %v3249, %v4229
        %v4342 = vadd.f32 %v3254, %v4234
        %v4343 = vadd.f32 %v3257, %v4237
        %v4344 = vadd.f32 %v3262, %v4242
        %v4345 = vadd.f32 %v3265, %v4245
        %v4346 = vadd.f32 %v3270, %v4250
        %v4347 = vadd.f32 %v3273, %v4253
        %v4348 = vadd.f32 %v3278, %v4258
        %v4349 = vadd.f32 %v3281, %v4261
        %v4350 = vadd.f32 %v3286, %v4266
        %v4351 = vadd.f32 %v3289, %v4269
        %v4352 = vadd.f32 %v3294, %v4274
        %v4353 = vadd.f32 %v3297, %v4277
        %v4354 = vadd.f32 %v3302, %v4282
        %v4355 = vadd.f32 %v3305, %v4285
        %v4356 = vadd.f32 %v3310, %v4290
        %v4357 = vadd.f32 %v3313, %v4293
        %v4358 = vadd.f32 %v3318, %v4298
        %v4359 = vadd.f32 %v3321, %v4301
        %v4360 = vadd.f32 %v3326, %v4306
        %v4361 = vadd.f32 %v3329, %v4309
        %v4362 = vadd.f32 %v3334, %v4314
        %v4363 = vadd.f32 %v3337, %v4317
        %v4364 = vadd.f32 %v3342, %v4322
        %v4365 = vadd.f32 %v3345, %v4325
        %v4366 = vadd.f32 %v3350, %v4330
        %v4367 = vadd.f32 %v3353, %v4333
        %v4368 = vld [vmem:[%s4] sm:$0x1]
        %v4370 = vlaneseq
        %v4371 = vshrl.u32 %v4370, 7
        %v4372 = vsub.s32 0, %v4371
        %v4373 = vrot.slane %v4368, %v4372
        %v4375 = vadd.f32 %v4336, %v4373
        %v4376 = vadd.f32 %v4337, %v4373
        %v4377 = vadd.f32 %v4338, %v4373
        %v4378 = vadd.f32 %v4339, %v4373
        %v4379 = vadd.f32 %v4340, %v4373
        %v4380 = vadd.f32 %v4341, %v4373
        %v4381 = vadd.f32 %v4342, %v4373
        %v4382 = vadd.f32 %v4343, %v4373
        %v4383 = vadd.f32 %v4344, %v4373
        %v4384 = vadd.f32 %v4345, %v4373
        %v4385 = vadd.f32 %v4346, %v4373
        %v4386 = vadd.f32 %v4347, %v4373
        %v4387 = vadd.f32 %v4348, %v4373
        %v4388 = vadd.f32 %v4349, %v4373
        %v4389 = vadd.f32 %v4350, %v4373
        %v4390 = vadd.f32 %v4351, %v4373
        %v4391 = vadd.f32 %v4352, %v4373
        %v4392 = vadd.f32 %v4353, %v4373
        %v4393 = vadd.f32 %v4354, %v4373
        %v4394 = vadd.f32 %v4355, %v4373
        %v4395 = vadd.f32 %v4356, %v4373
        %v4396 = vadd.f32 %v4357, %v4373
        %v4397 = vadd.f32 %v4358, %v4373
        %v4398 = vadd.f32 %v4359, %v4373
        %v4399 = vadd.f32 %v4360, %v4373
        %v4400 = vadd.f32 %v4361, %v4373
        %v4401 = vadd.f32 %v4362, %v4373
        %v4402 = vadd.f32 %v4363, %v4373
        %v4403 = vadd.f32 %v4364, %v4373
        %v4404 = vadd.f32 %v4365, %v4373
        %v4405 = vadd.f32 %v4366, %v4373
        %v4406 = vadd.f32 %v4367, %v4373
        %v4407 = vmax.f32 %v4375, 0.0
        %v4408 = vmax.f32 %v4376, 0.0
        %v4409 = vmax.f32 %v4377, 0.0
        %v4410 = vmax.f32 %v4378, 0.0
        %v4411 = vmax.f32 %v4379, 0.0
        %v4412 = vmax.f32 %v4380, 0.0
        %v4413 = vmax.f32 %v4381, 0.0
        %v4414 = vmax.f32 %v4382, 0.0
        %v4415 = vmax.f32 %v4383, 0.0
        %v4416 = vmax.f32 %v4384, 0.0
        %v4417 = vmax.f32 %v4385, 0.0
        %v4418 = vmax.f32 %v4386, 0.0
        %v4419 = vmax.f32 %v4387, 0.0
        %v4420 = vmax.f32 %v4388, 0.0
        %v4421 = vmax.f32 %v4389, 0.0
        %v4422 = vmax.f32 %v4390, 0.0
        %v4423 = vmax.f32 %v4391, 0.0
        %v4424 = vmax.f32 %v4392, 0.0
        %v4425 = vmax.f32 %v4393, 0.0
        %v4426 = vmax.f32 %v4394, 0.0
        %v4427 = vmax.f32 %v4395, 0.0
        %v4428 = vmax.f32 %v4396, 0.0
        %v4429 = vmax.f32 %v4397, 0.0
        %v4430 = vmax.f32 %v4398, 0.0
        %v4431 = vmax.f32 %v4399, 0.0
        %v4432 = vmax.f32 %v4400, 0.0
        %v4433 = vmax.f32 %v4401, 0.0
        %v4434 = vmax.f32 %v4402, 0.0
        %v4435 = vmax.f32 %v4403, 0.0
        %v4436 = vmax.f32 %v4404, 0.0
        %v4437 = vmax.f32 %v4405, 0.0
        %v4438 = vmax.f32 %v4406, 0.0
        %v4439 = vpack.c.bf16 %v4408, %v4407
        %v4440 = vpack.c.bf16 %v4410, %v4409
        %v4441 = vpack.c.bf16 %v4412, %v4411
        %v4442 = vpack.c.bf16 %v4414, %v4413
        %v4443 = vpack.c.bf16 %v4416, %v4415
        %v4444 = vpack.c.bf16 %v4418, %v4417
        %v4445 = vpack.c.bf16 %v4420, %v4419
        %v4446 = vpack.c.bf16 %v4422, %v4421
        %v4447 = vpack.c.bf16 %v4424, %v4423
        %v4448 = vpack.c.bf16 %v4426, %v4425
        %v4449 = vpack.c.bf16 %v4428, %v4427
        %v4450 = vpack.c.bf16 %v4430, %v4429
        %v4451 = vpack.c.bf16 %v4432, %v4431
        %v4452 = vpack.c.bf16 %v4434, %v4433
        %v4453 = vpack.c.bf16 %v4436, %v4435
        %v4454 = vpack.c.bf16 %v4438, %v4437
        %v4455 = vld [vmem:[#allocation9] sm:$0xf]
        %v4456 = vld [vmem:[#allocation9 + $0x4] sm:$0xf]
        %v4457 = vld [vmem:[#allocation9 + $0x8] sm:$0xf]
        %v4458 = vld [vmem:[#allocation9 + $0xc] sm:$0xf]
        %v4459 = vld [vmem:[#allocation9 + $0x10] sm:$0xf]
        %v4460 = vld [vmem:[#allocation9 + $0x14] sm:$0xf]
        %v4461 = vld [vmem:[#allocation9 + $0x18] sm:$0xf]
        %v4462 = vld [vmem:[#allocation9 + $0x1c] sm:$0xf]
        %v4463 = vld [vmem:[#allocation9 + $0x20] sm:$0xf]
        %v4464 = vld [vmem:[#allocation9 + $0x24] sm:$0xf]
        %v4465 = vld [vmem:[#allocation9 + $0x28] sm:$0xf]
        %v4466 = vld [vmem:[#allocation9 + $0x2c] sm:$0xf]
        %v4467 = vld [vmem:[#allocation9 + $0x30] sm:$0xf]
        %v4468 = vld [vmem:[#allocation9 + $0x34] sm:$0xf]
        %v4469 = vld [vmem:[#allocation9 + $0x38] sm:$0xf]
        %v4470 = vld [vmem:[#allocation9 + $0x3c] sm:$0xf]
        %v4471 = vld [vmem:[%s6] sm:$0x1]
        %v4473 = vlaneseq
        %v4474 = vshrl.u32 %v4473, 7
        %v4475 = vsub.s32 0, %v4474
        %v4476 = vrot.slane %v4471, %v4475
        %v4494 = vunpack.c.l.b16 %v4455
        %v4495 = vunpack.c.l.b16 %v4456
        %v4496 = vunpack.c.l.b16 %v4457
        %v4497 = vunpack.c.l.b16 %v4458
        %v4498 = vunpack.c.l.b16 %v4459
        %v4499 = vunpack.c.l.b16 %v4460
        %v4500 = vunpack.c.l.b16 %v4461
        %v4501 = vunpack.c.l.b16 %v4462
        %v4502 = vunpack.c.l.b16 %v4463
        %v4503 = vunpack.c.l.b16 %v4464
        %v4504 = vunpack.c.l.b16 %v4465
        %v4505 = vunpack.c.l.b16 %v4466
        %v4506 = vunpack.c.l.b16 %v4467
        %v4507 = vunpack.c.l.b16 %v4468
        %v4508 = vunpack.c.l.b16 %v4469
        %v4509 = vunpack.c.l.b16 %v4470
        %v4510 = vpack.c.b16 %v4495, %v4494
        %v4511 = vpack.c.b16 %v4497, %v4496
        %v4512 = vpack.c.b16 %v4499, %v4498
        %v4513 = vpack.c.b16 %v4501, %v4500
        %v4514 = vpack.c.b16 %v4503, %v4502
        %v4515 = vpack.c.b16 %v4505, %v4504
        %v4516 = vpack.c.b16 %v4507, %v4506
        %v4517 = vpack.c.b16 %v4509, %v4508
        %4526 = vmatprep.subr.bf16.mxu0 0
        %4527 = vmatpush1.bf16.msra.mxu0 %v4517
        %4528 = vmatprep.subr.bf16.mxu0 0
        %4529 = vmatpush1.bf16.msra.mxu0 %v4516
        %4530 = vmatprep.subr.bf16.mxu0 0
        %4531 = vmatpush1.bf16.msra.mxu0 %v4515
        %4532 = vmatprep.subr.bf16.mxu0 0
        %4533 = vmatpush1.bf16.msra.mxu0 %v4514
        %4534 = vmatprep.subr.bf16.mxu0 0
        %4535 = vmatpush1.bf16.msra.mxu0 %v4513
        %4536 = vmatprep.subr.bf16.mxu0 0
        %4537 = vmatpush1.bf16.msra.mxu0 %v4512
        %4538 = vmatprep.subr.bf16.mxu0 0
        %4539 = vmatpush1.bf16.msra.mxu0 %v4511
        %4540 = vmatprep.subr.bf16.mxu0 0
        %4541 = vmatpush1.bf16.msra.mxu0 %v4510
        %4542 = vmatprep.subr.bf16.mxu0 0
        %4543 = vmatpush2.bf16.msra.mxu0 0
        %4544 = vmatprep.subr.bf16.mxu0 0
        %4545 = vmatpush2.bf16.msra.mxu0 0
        %4546 = vmatprep.subr.bf16.mxu0 0
        %4547 = vmatpush2.bf16.msra.mxu0 0
        %4548 = vmatprep.subr.bf16.mxu0 0
        %4549 = vmatpush2.bf16.msra.mxu0 0
        %4550 = vmatprep.subr.bf16.mxu0 0
        %4551 = vmatpush2.bf16.msra.mxu0 0
        %4552 = vmatprep.subr.bf16.mxu0 0
        %4553 = vmatpush2.bf16.msra.mxu0 0
        %4554 = vmatprep.subr.bf16.mxu0 0
        %4555 = vmatpush2.bf16.msra.mxu0 0
        %4556 = vmatprep.subr.bf16.mxu0 0
        %4557 = vmatpush2.bf16.msra.mxu0 0
        %4558 = vmatprep.mubr.bf16.mxu0 0
        %4559 = vmatmul.mubr.bf16.gmra.mxu0 %v4439
        %v4560 = vpop.f32.mrf.mxu0
        %v4561 = vadd.f32 %v4476, %v4560
        %v4562 = vpop.f32.mrf.mxu0
        %v4563 = vpop.f32.mrf.mxu0
        %v4564 = vadd.f32 %v4476, %v4563
        %v4565 = vpop.f32.mrf.mxu0
        %4566 = vmatprep.mubr.bf16.mxu0 0
        %4567 = vmatmul.mubr.bf16.gmra.mxu0 %v4440
        %v4568 = vpop.f32.mrf.mxu0
        %v4569 = vadd.f32 %v4476, %v4568
        %v4570 = vpop.f32.mrf.mxu0
        %v4571 = vpop.f32.mrf.mxu0
        %v4572 = vadd.f32 %v4476, %v4571
        %v4573 = vpop.f32.mrf.mxu0
        %4574 = vmatprep.mubr.bf16.mxu0 0
        %4575 = vmatmul.mubr.bf16.gmra.mxu0 %v4441
        %v4576 = vpop.f32.mrf.mxu0
        %v4577 = vadd.f32 %v4476, %v4576
        %v4578 = vpop.f32.mrf.mxu0
        %v4579 = vpop.f32.mrf.mxu0
        %v4580 = vadd.f32 %v4476, %v4579
        %v4581 = vpop.f32.mrf.mxu0
        %4582 = vmatprep.mubr.bf16.mxu0 0
        %4583 = vmatmul.mubr.bf16.gmra.mxu0 %v4442
        %v4584 = vpop.f32.mrf.mxu0
        %v4585 = vadd.f32 %v4476, %v4584
        %v4586 = vpop.f32.mrf.mxu0
        %v4587 = vpop.f32.mrf.mxu0
        %v4588 = vadd.f32 %v4476, %v4587
        %v4589 = vpop.f32.mrf.mxu0
        %4590 = vmatprep.mubr.bf16.mxu0 0
        %4591 = vmatmul.mubr.bf16.gmra.mxu0 %v4443
        %v4592 = vpop.f32.mrf.mxu0
        %v4593 = vadd.f32 %v4476, %v4592
        %v4594 = vpop.f32.mrf.mxu0
        %v4595 = vpop.f32.mrf.mxu0
        %v4596 = vadd.f32 %v4476, %v4595
        %v4597 = vpop.f32.mrf.mxu0
        %4598 = vmatprep.mubr.bf16.mxu0 0
        %4599 = vmatmul.mubr.bf16.gmra.mxu0 %v4444
        %v4600 = vpop.f32.mrf.mxu0
        %v4601 = vadd.f32 %v4476, %v4600
        %v4602 = vpop.f32.mrf.mxu0
        %v4603 = vpop.f32.mrf.mxu0
        %v4604 = vadd.f32 %v4476, %v4603
        %v4605 = vpop.f32.mrf.mxu0
        %4606 = vmatprep.mubr.bf16.mxu0 0
        %4607 = vmatmul.mubr.bf16.gmra.mxu0 %v4445
        %v4608 = vpop.f32.mrf.mxu0
        %v4609 = vadd.f32 %v4476, %v4608
        %v4610 = vpop.f32.mrf.mxu0
        %v4611 = vpop.f32.mrf.mxu0
        %v4612 = vadd.f32 %v4476, %v4611
        %v4613 = vpop.f32.mrf.mxu0
        %4614 = vmatprep.mubr.bf16.mxu0 0
        %4615 = vmatmul.mubr.bf16.gmra.mxu0 %v4446
        %v4616 = vpop.f32.mrf.mxu0
        %v4617 = vadd.f32 %v4476, %v4616
        %v4618 = vpop.f32.mrf.mxu0
        %v4619 = vpop.f32.mrf.mxu0
        %v4620 = vadd.f32 %v4476, %v4619
        %v4621 = vpop.f32.mrf.mxu0
        %4622 = vmatprep.mubr.bf16.mxu0 0
        %4623 = vmatmul.mubr.bf16.gmra.mxu0 %v4447
        %v4624 = vpop.f32.mrf.mxu0
        %v4625 = vadd.f32 %v4476, %v4624
        %v4626 = vpop.f32.mrf.mxu0
        %v4627 = vpop.f32.mrf.mxu0
        %v4628 = vadd.f32 %v4476, %v4627
        %v4629 = vpop.f32.mrf.mxu0
        %4630 = vmatprep.mubr.bf16.mxu0 0
        %4631 = vmatmul.mubr.bf16.gmra.mxu0 %v4448
        %v4632 = vpop.f32.mrf.mxu0
        %v4633 = vadd.f32 %v4476, %v4632
        %v4634 = vpop.f32.mrf.mxu0
        %v4635 = vpop.f32.mrf.mxu0
        %v4636 = vadd.f32 %v4476, %v4635
        %v4637 = vpop.f32.mrf.mxu0
        %4638 = vmatprep.mubr.bf16.mxu0 0
        %4639 = vmatmul.mubr.bf16.gmra.mxu0 %v4449
        %v4640 = vpop.f32.mrf.mxu0
        %v4641 = vadd.f32 %v4476, %v4640
        %v4642 = vpop.f32.mrf.mxu0
        %v4643 = vpop.f32.mrf.mxu0
        %v4644 = vadd.f32 %v4476, %v4643
        %v4645 = vpop.f32.mrf.mxu0
        %4646 = vmatprep.mubr.bf16.mxu0 0
        %4647 = vmatmul.mubr.bf16.gmra.mxu0 %v4450
        %v4648 = vpop.f32.mrf.mxu0
        %v4649 = vadd.f32 %v4476, %v4648
        %v4650 = vpop.f32.mrf.mxu0
        %v4651 = vpop.f32.mrf.mxu0
        %v4652 = vadd.f32 %v4476, %v4651
        %v4653 = vpop.f32.mrf.mxu0
        %4654 = vmatprep.mubr.bf16.mxu0 0
        %4655 = vmatmul.mubr.bf16.gmra.mxu0 %v4451
        %v4656 = vpop.f32.mrf.mxu0
        %v4657 = vadd.f32 %v4476, %v4656
        %v4658 = vpop.f32.mrf.mxu0
        %v4659 = vpop.f32.mrf.mxu0
        %v4660 = vadd.f32 %v4476, %v4659
        %v4661 = vpop.f32.mrf.mxu0
        %4662 = vmatprep.mubr.bf16.mxu0 0
        %4663 = vmatmul.mubr.bf16.gmra.mxu0 %v4452
        %v4664 = vpop.f32.mrf.mxu0
        %v4665 = vadd.f32 %v4476, %v4664
        %v4666 = vpop.f32.mrf.mxu0
        %v4667 = vpop.f32.mrf.mxu0
        %v4668 = vadd.f32 %v4476, %v4667
        %v4669 = vpop.f32.mrf.mxu0
        %4670 = vmatprep.mubr.bf16.mxu0 0
        %4671 = vmatmul.mubr.bf16.gmra.mxu0 %v4453
        %v4672 = vpop.f32.mrf.mxu0
        %v4673 = vadd.f32 %v4476, %v4672
        %v4674 = vpop.f32.mrf.mxu0
        %v4675 = vpop.f32.mrf.mxu0
        %v4676 = vadd.f32 %v4476, %v4675
        %v4677 = vpop.f32.mrf.mxu0
        %4678 = vmatprep.mubr.bf16.mxu0 0
        %4679 = vmatmul.mubr.bf16.gmra.mxu0 %v4454
        %v4680 = vpop.f32.mrf.mxu0
        %v4681 = vadd.f32 %v4476, %v4680
        %v4682 = vpop.f32.mrf.mxu0
        %v4683 = vpop.f32.mrf.mxu0
        %v4684 = vadd.f32 %v4476, %v4683
        %v4685 = vpop.f32.mrf.mxu0
        %4686 = vdwg.mxu0
        %v4687 = vld [vmem:[#allocation11] sm:$0xf]
        %v4688 = vld [vmem:[#allocation11 + $0x4] sm:$0xf]
        %v4689 = vld [vmem:[#allocation11 + $0x8] sm:$0xf]
        %v4690 = vld [vmem:[#allocation11 + $0xc] sm:$0xf]
        %v4691 = vld [vmem:[#allocation11 + $0x10] sm:$0xf]
        %v4692 = vld [vmem:[#allocation11 + $0x14] sm:$0xf]
        %v4693 = vld [vmem:[#allocation11 + $0x18] sm:$0xf]
        %v4694 = vld [vmem:[#allocation11 + $0x1c] sm:$0xf]
        %v4695 = vld [vmem:[#allocation11 + $0x20] sm:$0xf]
        %v4696 = vld [vmem:[#allocation11 + $0x24] sm:$0xf]
        %v4697 = vld [vmem:[#allocation11 + $0x28] sm:$0xf]
        %v4698 = vld [vmem:[#allocation11 + $0x2c] sm:$0xf]
        %v4699 = vld [vmem:[#allocation11 + $0x30] sm:$0xf]
        %v4700 = vld [vmem:[#allocation11 + $0x34] sm:$0xf]
        %v4701 = vld [vmem:[#allocation11 + $0x38] sm:$0xf]
        %v4702 = vld [vmem:[#allocation11 + $0x3c] sm:$0xf]
        %v4703 = vld [vmem:[%s8] sm:$0x1]
        %v4705 = vlaneseq
        %v4706 = vshrl.u32 %v4705, 7
        %v4707 = vsub.s32 0, %v4706
        %v4708 = vrot.slane %v4703, %v4707
        %v4726 = vunpack.c.l.b16 %v4687
        %v4727 = vunpack.c.l.b16 %v4688
        %v4728 = vunpack.c.l.b16 %v4689
        %v4729 = vunpack.c.l.b16 %v4690
        %v4730 = vunpack.c.l.b16 %v4691
        %v4731 = vunpack.c.l.b16 %v4692
        %v4732 = vunpack.c.l.b16 %v4693
        %v4733 = vunpack.c.l.b16 %v4694
        %v4734 = vunpack.c.l.b16 %v4695
        %v4735 = vunpack.c.l.b16 %v4696
        %v4736 = vunpack.c.l.b16 %v4697
        %v4737 = vunpack.c.l.b16 %v4698
        %v4738 = vunpack.c.l.b16 %v4699
        %v4739 = vunpack.c.l.b16 %v4700
        %v4740 = vunpack.c.l.b16 %v4701
        %v4741 = vunpack.c.l.b16 %v4702
        %v4742 = vpack.c.b16 %v4727, %v4726
        %v4743 = vpack.c.b16 %v4729, %v4728
        %v4744 = vpack.c.b16 %v4731, %v4730
        %v4745 = vpack.c.b16 %v4733, %v4732
        %v4746 = vpack.c.b16 %v4735, %v4734
        %v4747 = vpack.c.b16 %v4737, %v4736
        %v4748 = vpack.c.b16 %v4739, %v4738
        %v4749 = vpack.c.b16 %v4741, %v4740
        %4758 = vmatprep.subr.bf16.mxu0 0
        %4759 = vmatpush1.bf16.msra.mxu0 %v4749
        %4760 = vmatprep.subr.bf16.mxu0 0
        %4761 = vmatpush1.bf16.msra.mxu0 %v4748
        %4762 = vmatprep.subr.bf16.mxu0 0
        %4763 = vmatpush1.bf16.msra.mxu0 %v4747
        %4764 = vmatprep.subr.bf16.mxu0 0
        %4765 = vmatpush1.bf16.msra.mxu0 %v4746
        %4766 = vmatprep.subr.bf16.mxu0 0
        %4767 = vmatpush1.bf16.msra.mxu0 %v4745
        %4768 = vmatprep.subr.bf16.mxu0 0
        %4769 = vmatpush1.bf16.msra.mxu0 %v4744
        %4770 = vmatprep.subr.bf16.mxu0 0
        %4771 = vmatpush1.bf16.msra.mxu0 %v4743
        %4772 = vmatprep.subr.bf16.mxu0 0
        %4773 = vmatpush1.bf16.msra.mxu0 %v4742
        %4774 = vmatprep.subr.bf16.mxu0 0
        %4775 = vmatpush2.bf16.msra.mxu0 0
        %4776 = vmatprep.subr.bf16.mxu0 0
        %4777 = vmatpush2.bf16.msra.mxu0 0
        %4778 = vmatprep.subr.bf16.mxu0 0
        %4779 = vmatpush2.bf16.msra.mxu0 0
        %4780 = vmatprep.subr.bf16.mxu0 0
        %4781 = vmatpush2.bf16.msra.mxu0 0
        %4782 = vmatprep.subr.bf16.mxu0 0
        %4783 = vmatpush2.bf16.msra.mxu0 0
        %4784 = vmatprep.subr.bf16.mxu0 0
        %4785 = vmatpush2.bf16.msra.mxu0 0
        %4786 = vmatprep.subr.bf16.mxu0 0
        %4787 = vmatpush2.bf16.msra.mxu0 0
        %4788 = vmatprep.subr.bf16.mxu0 0
        %4789 = vmatpush2.bf16.msra.mxu0 0
        %4790 = vmatprep.mubr.bf16.mxu0 0
        %4791 = vmatmul.mubr.bf16.gmra.mxu0 %v587
        %v4792 = vpop.f32.mrf.mxu0
        %v4793 = vadd.f32 %v4708, %v4792
        %v4794 = vpop.f32.mrf.mxu0
        %v4795 = vpop.f32.mrf.mxu0
        %v4796 = vadd.f32 %v4708, %v4795
        %v4797 = vpop.f32.mrf.mxu0
        %4798 = vmatprep.mubr.bf16.mxu0 0
        %4799 = vmatmul.mubr.bf16.gmra.mxu0 %v588
        %v4800 = vpop.f32.mrf.mxu0
        %v4801 = vadd.f32 %v4708, %v4800
        %v4802 = vpop.f32.mrf.mxu0
        %v4803 = vpop.f32.mrf.mxu0
        %v4804 = vadd.f32 %v4708, %v4803
        %v4805 = vpop.f32.mrf.mxu0
        %4806 = vmatprep.mubr.bf16.mxu0 0
        %4807 = vmatmul.mubr.bf16.gmra.mxu0 %v589
        %v4808 = vpop.f32.mrf.mxu0
        %v4809 = vadd.f32 %v4708, %v4808
        %v4810 = vpop.f32.mrf.mxu0
        %v4811 = vpop.f32.mrf.mxu0
        %v4812 = vadd.f32 %v4708, %v4811
        %v4813 = vpop.f32.mrf.mxu0
        %4814 = vmatprep.mubr.bf16.mxu0 0
        %4815 = vmatmul.mubr.bf16.gmra.mxu0 %v590
        %v4816 = vpop.f32.mrf.mxu0
        %v4817 = vadd.f32 %v4708, %v4816
        %v4818 = vpop.f32.mrf.mxu0
        %v4819 = vpop.f32.mrf.mxu0
        %v4820 = vadd.f32 %v4708, %v4819
        %v4821 = vpop.f32.mrf.mxu0
        %4822 = vmatprep.mubr.bf16.mxu0 0
        %4823 = vmatmul.mubr.bf16.gmra.mxu0 %v591
        %v4824 = vpop.f32.mrf.mxu0
        %v4825 = vadd.f32 %v4708, %v4824
        %v4826 = vpop.f32.mrf.mxu0
        %v4827 = vpop.f32.mrf.mxu0
        %v4828 = vadd.f32 %v4708, %v4827
        %v4829 = vpop.f32.mrf.mxu0
        %4830 = vmatprep.mubr.bf16.mxu0 0
        %4831 = vmatmul.mubr.bf16.gmra.mxu0 %v592
        %v4832 = vpop.f32.mrf.mxu0
        %v4833 = vadd.f32 %v4708, %v4832
        %v4834 = vpop.f32.mrf.mxu0
        %v4835 = vpop.f32.mrf.mxu0
        %v4836 = vadd.f32 %v4708, %v4835
        %v4837 = vpop.f32.mrf.mxu0
        %4838 = vmatprep.mubr.bf16.mxu0 0
        %4839 = vmatmul.mubr.bf16.gmra.mxu0 %v593
        %v4840 = vpop.f32.mrf.mxu0
        %v4841 = vadd.f32 %v4708, %v4840
        %v4842 = vpop.f32.mrf.mxu0
        %v4843 = vpop.f32.mrf.mxu0
        %v4844 = vadd.f32 %v4708, %v4843
        %v4845 = vpop.f32.mrf.mxu0
        %4846 = vmatprep.mubr.bf16.mxu0 0
        %4847 = vmatmul.mubr.bf16.gmra.mxu0 %v594
        %v4848 = vpop.f32.mrf.mxu0
        %v4849 = vadd.f32 %v4708, %v4848
        %v4850 = vpop.f32.mrf.mxu0
        %v4851 = vpop.f32.mrf.mxu0
        %v4852 = vadd.f32 %v4708, %v4851
        %v4853 = vpop.f32.mrf.mxu0
        %4854 = vmatprep.mubr.bf16.mxu0 0
        %4855 = vmatmul.mubr.bf16.gmra.mxu0 %v595
        %v4856 = vpop.f32.mrf.mxu0
        %v4857 = vadd.f32 %v4708, %v4856
        %v4858 = vpop.f32.mrf.mxu0
        %v4859 = vpop.f32.mrf.mxu0
        %v4860 = vadd.f32 %v4708, %v4859
        %v4861 = vpop.f32.mrf.mxu0
        %4862 = vmatprep.mubr.bf16.mxu0 0
        %4863 = vmatmul.mubr.bf16.gmra.mxu0 %v596
        %v4864 = vpop.f32.mrf.mxu0
        %v4865 = vadd.f32 %v4708, %v4864
        %v4866 = vpop.f32.mrf.mxu0
        %v4867 = vpop.f32.mrf.mxu0
        %v4868 = vadd.f32 %v4708, %v4867
        %v4869 = vpop.f32.mrf.mxu0
        %4870 = vmatprep.mubr.bf16.mxu0 0
        %4871 = vmatmul.mubr.bf16.gmra.mxu0 %v597
        %v4872 = vpop.f32.mrf.mxu0
        %v4873 = vadd.f32 %v4708, %v4872
        %v4874 = vpop.f32.mrf.mxu0
        %v4875 = vpop.f32.mrf.mxu0
        %v4876 = vadd.f32 %v4708, %v4875
        %v4877 = vpop.f32.mrf.mxu0
        %4878 = vmatprep.mubr.bf16.mxu0 0
        %4879 = vmatmul.mubr.bf16.gmra.mxu0 %v598
        %v4880 = vpop.f32.mrf.mxu0
        %v4881 = vadd.f32 %v4708, %v4880
        %v4882 = vpop.f32.mrf.mxu0
        %v4883 = vpop.f32.mrf.mxu0
        %v4884 = vadd.f32 %v4708, %v4883
        %v4885 = vpop.f32.mrf.mxu0
        %4886 = vmatprep.mubr.bf16.mxu0 0
        %4887 = vmatmul.mubr.bf16.gmra.mxu0 %v599
        %v4888 = vpop.f32.mrf.mxu0
        %v4889 = vadd.f32 %v4708, %v4888
        %v4890 = vpop.f32.mrf.mxu0
        %v4891 = vpop.f32.mrf.mxu0
        %v4892 = vadd.f32 %v4708, %v4891
        %v4893 = vpop.f32.mrf.mxu0
        %4894 = vmatprep.mubr.bf16.mxu0 0
        %4895 = vmatmul.mubr.bf16.gmra.mxu0 %v600
        %v4896 = vpop.f32.mrf.mxu0
        %v4897 = vadd.f32 %v4708, %v4896
        %v4898 = vpop.f32.mrf.mxu0
        %v4899 = vpop.f32.mrf.mxu0
        %v4900 = vadd.f32 %v4708, %v4899
        %v4901 = vpop.f32.mrf.mxu0
        %4902 = vmatprep.mubr.bf16.mxu0 0
        %4903 = vmatmul.mubr.bf16.gmra.mxu0 %v601
        %v4904 = vpop.f32.mrf.mxu0
        %v4905 = vadd.f32 %v4708, %v4904
        %v4906 = vpop.f32.mrf.mxu0
        %v4907 = vpop.f32.mrf.mxu0
        %v4908 = vadd.f32 %v4708, %v4907
        %v4909 = vpop.f32.mrf.mxu0
        %4910 = vmatprep.mubr.bf16.mxu0 0
        %4911 = vmatmul.mubr.bf16.gmra.mxu0 %v602
        %v4912 = vpop.f32.mrf.mxu0
        %v4913 = vadd.f32 %v4708, %v4912
        %v4914 = vpop.f32.mrf.mxu0
        %v4915 = vpop.f32.mrf.mxu0
        %v4916 = vadd.f32 %v4708, %v4915
        %v4917 = vpop.f32.mrf.mxu0
        %4918 = vdwg.mxu0
        %v4919 = vadd.f32 %v4561, %v4793
        %v4920 = vadd.f32 %v4564, %v4796
        %v4921 = vadd.f32 %v4569, %v4801
        %v4922 = vadd.f32 %v4572, %v4804
        %v4923 = vadd.f32 %v4577, %v4809
        %v4924 = vadd.f32 %v4580, %v4812
        %v4925 = vadd.f32 %v4585, %v4817
        %v4926 = vadd.f32 %v4588, %v4820
        %v4927 = vadd.f32 %v4593, %v4825
        %v4928 = vadd.f32 %v4596, %v4828
        %v4929 = vadd.f32 %v4601, %v4833
        %v4930 = vadd.f32 %v4604, %v4836
        %v4931 = vadd.f32 %v4609, %v4841
        %v4932 = vadd.f32 %v4612, %v4844
        %v4933 = vadd.f32 %v4617, %v4849
        %v4934 = vadd.f32 %v4620, %v4852
        %v4935 = vadd.f32 %v4625, %v4857
        %v4936 = vadd.f32 %v4628, %v4860
        %v4937 = vadd.f32 %v4633, %v4865
        %v4938 = vadd.f32 %v4636, %v4868
        %v4939 = vadd.f32 %v4641, %v4873
        %v4940 = vadd.f32 %v4644, %v4876
        %v4941 = vadd.f32 %v4649, %v4881
        %v4942 = vadd.f32 %v4652, %v4884
        %v4943 = vadd.f32 %v4657, %v4889
        %v4944 = vadd.f32 %v4660, %v4892
        %v4945 = vadd.f32 %v4665, %v4897
        %v4946 = vadd.f32 %v4668, %v4900
        %v4947 = vadd.f32 %v4673, %v4905
        %v4948 = vadd.f32 %v4676, %v4908
        %v4949 = vadd.f32 %v4681, %v4913
        %v4950 = vadd.f32 %v4684, %v4916
        %v4951 = vmax.f32 %v4919, 0.0
        %v4952 = vmax.f32 %v4920, 0.0
        %v4953 = vmax.f32 %v4921, 0.0
        %v4954 = vmax.f32 %v4922, 0.0
        %v4955 = vmax.f32 %v4923, 0.0
        %v4956 = vmax.f32 %v4924, 0.0
        %v4957 = vmax.f32 %v4925, 0.0
        %v4958 = vmax.f32 %v4926, 0.0
        %v4959 = vmax.f32 %v4927, 0.0
        %v4960 = vmax.f32 %v4928, 0.0
        %v4961 = vmax.f32 %v4929, 0.0
        %v4962 = vmax.f32 %v4930, 0.0
        %v4963 = vmax.f32 %v4931, 0.0
        %v4964 = vmax.f32 %v4932, 0.0
        %v4965 = vmax.f32 %v4933, 0.0
        %v4966 = vmax.f32 %v4934, 0.0
        %v4967 = vmax.f32 %v4935, 0.0
        %v4968 = vmax.f32 %v4936, 0.0
        %v4969 = vmax.f32 %v4937, 0.0
        %v4970 = vmax.f32 %v4938, 0.0
        %v4971 = vmax.f32 %v4939, 0.0
        %v4972 = vmax.f32 %v4940, 0.0
        %v4973 = vmax.f32 %v4941, 0.0
        %v4974 = vmax.f32 %v4942, 0.0
        %v4975 = vmax.f32 %v4943, 0.0
        %v4976 = vmax.f32 %v4944, 0.0
        %v4977 = vmax.f32 %v4945, 0.0
        %v4978 = vmax.f32 %v4946, 0.0
        %v4979 = vmax.f32 %v4947, 0.0
        %v4980 = vmax.f32 %v4948, 0.0
        %v4981 = vmax.f32 %v4949, 0.0
        %v4982 = vmax.f32 %v4950, 0.0
        %v4983 = vpack.c.bf16 %v4952, %v4951
        %v4984 = vpack.c.bf16 %v4954, %v4953
        %v4985 = vpack.c.bf16 %v4956, %v4955
        %v4986 = vpack.c.bf16 %v4958, %v4957
        %v4987 = vpack.c.bf16 %v4960, %v4959
        %v4988 = vpack.c.bf16 %v4962, %v4961
        %v4989 = vpack.c.bf16 %v4964, %v4963
        %v4990 = vpack.c.bf16 %v4966, %v4965
        %v4991 = vpack.c.bf16 %v4968, %v4967
        %v4992 = vpack.c.bf16 %v4970, %v4969
        %v4993 = vpack.c.bf16 %v4972, %v4971
        %v4994 = vpack.c.bf16 %v4974, %v4973
        %v4995 = vpack.c.bf16 %v4976, %v4975
        %v4996 = vpack.c.bf16 %v4978, %v4977
        %v4997 = vpack.c.bf16 %v4980, %v4979
        %v4998 = vpack.c.bf16 %v4982, %v4981
        %v5015 = vunpack.c.l.b16 %v4983
        %v5016 = vunpack.c.h.b16 %v4983
        %v5017 = vunpack.c.l.b16 %v4984
        %v5018 = vunpack.c.h.b16 %v4984
        %v5019 = vunpack.c.l.b16 %v4985
        %v5020 = vunpack.c.h.b16 %v4985
        %v5021 = vunpack.c.l.b16 %v4986
        %v5022 = vunpack.c.h.b16 %v4986
        %v5023 = vunpack.c.l.b16 %v4987
        %v5024 = vunpack.c.h.b16 %v4987
        %v5025 = vunpack.c.l.b16 %v4988
        %v5026 = vunpack.c.h.b16 %v4988
        %v5027 = vunpack.c.l.b16 %v4989
        %v5028 = vunpack.c.h.b16 %v4989
        %v5029 = vunpack.c.l.b16 %v4990
        %v5030 = vunpack.c.h.b16 %v4990
        %v5031 = vunpack.c.l.b16 %v4991
        %v5032 = vunpack.c.h.b16 %v4991
        %v5033 = vunpack.c.l.b16 %v4992
        %v5034 = vunpack.c.h.b16 %v4992
        %v5035 = vunpack.c.l.b16 %v4993
        %v5036 = vunpack.c.h.b16 %v4993
        %v5037 = vunpack.c.l.b16 %v4994
        %v5038 = vunpack.c.h.b16 %v4994
        %v5039 = vunpack.c.l.b16 %v4995
        %v5040 = vunpack.c.h.b16 %v4995
        %v5041 = vunpack.c.l.b16 %v4996
        %v5042 = vunpack.c.h.b16 %v4996
        %v5043 = vunpack.c.l.b16 %v4997
        %v5044 = vunpack.c.h.b16 %v4997
        %v5045 = vunpack.c.l.b16 %v4998
        %v5046 = vunpack.c.h.b16 %v4998
        %v5047 = vpack.c.b16 %v5015, %v5015
        %v5048 = vpack.c.b16 %v5016, %v5016
        %v5049 = vpack.c.b16 %v5017, %v5017
        %v5050 = vpack.c.b16 %v5018, %v5018
        %v5051 = vpack.c.b16 %v5019, %v5019
        %v5052 = vpack.c.b16 %v5020, %v5020
        %v5053 = vpack.c.b16 %v5021, %v5021
        %v5054 = vpack.c.b16 %v5022, %v5022
        %v5055 = vpack.c.b16 %v5023, %v5023
        %v5056 = vpack.c.b16 %v5024, %v5024
        %v5057 = vpack.c.b16 %v5025, %v5025
        %v5058 = vpack.c.b16 %v5026, %v5026
        %v5059 = vpack.c.b16 %v5027, %v5027
        %v5060 = vpack.c.b16 %v5028, %v5028
        %v5061 = vpack.c.b16 %v5029, %v5029
        %v5062 = vpack.c.b16 %v5030, %v5030
        %v5063 = vpack.c.b16 %v5031, %v5031
        %v5064 = vpack.c.b16 %v5032, %v5032
        %v5065 = vpack.c.b16 %v5033, %v5033
        %v5066 = vpack.c.b16 %v5034, %v5034
        %v5067 = vpack.c.b16 %v5035, %v5035
        %v5068 = vpack.c.b16 %v5036, %v5036
        %v5069 = vpack.c.b16 %v5037, %v5037
        %v5070 = vpack.c.b16 %v5038, %v5038
        %v5071 = vpack.c.b16 %v5039, %v5039
        %v5072 = vpack.c.b16 %v5040, %v5040
        %v5073 = vpack.c.b16 %v5041, %v5041
        %v5074 = vpack.c.b16 %v5042, %v5042
        %v5075 = vpack.c.b16 %v5043, %v5043
        %v5076 = vpack.c.b16 %v5044, %v5044
        %v5077 = vpack.c.b16 %v5045, %v5045
        %v5078 = vpack.c.b16 %v5046, %v5046
        %5111 = vst [vmem:[%s408] sm:$0xf] %v5047
        %5112 = vst [vmem:[%s408 + $0x4] sm:$0xf] %v5048
        %5113 = vst [vmem:[%s408 + $0x8] sm:$0xf] %v5049
        %5114 = vst [vmem:[%s408 + $0xc] sm:$0xf] %v5050
        %5115 = vst [vmem:[%s408 + $0x10] sm:$0xf] %v5051
        %5116 = vst [vmem:[%s408 + $0x14] sm:$0xf] %v5052
        %5117 = vst [vmem:[%s408 + $0x18] sm:$0xf] %v5053
        %5118 = vst [vmem:[%s408 + $0x1c] sm:$0xf] %v5054
        %5119 = vst [vmem:[%s408 + $0x20] sm:$0xf] %v5055
        %5120 = vst [vmem:[%s408 + $0x24] sm:$0xf] %v5056
        %5121 = vst [vmem:[%s408 + $0x28] sm:$0xf] %v5057
        %5122 = vst [vmem:[%s408 + $0x2c] sm:$0xf] %v5058
        %5123 = vst [vmem:[%s408 + $0x30] sm:$0xf] %v5059
        %5124 = vst [vmem:[%s408 + $0x34] sm:$0xf] %v5060
        %5125 = vst [vmem:[%s408 + $0x38] sm:$0xf] %v5061
        %5126 = vst [vmem:[%s408 + $0x3c] sm:$0xf] %v5062
        %5127 = vst [vmem:[%s408 + $0x40] sm:$0xf] %v5063
        %5128 = vst [vmem:[%s408 + $0x44] sm:$0xf] %v5064
        %5129 = vst [vmem:[%s408 + $0x48] sm:$0xf] %v5065
        %5130 = vst [vmem:[%s408 + $0x4c] sm:$0xf] %v5066
        %5131 = vst [vmem:[%s408 + $0x50] sm:$0xf] %v5067
        %5132 = vst [vmem:[%s408 + $0x54] sm:$0xf] %v5068
        %5133 = vst [vmem:[%s408 + $0x58] sm:$0xf] %v5069
        %5134 = vst [vmem:[%s408 + $0x5c] sm:$0xf] %v5070
        %5135 = vst [vmem:[%s408 + $0x60] sm:$0xf] %v5071
        %5136 = vst [vmem:[%s408 + $0x64] sm:$0xf] %v5072
        %5137 = vst [vmem:[%s408 + $0x68] sm:$0xf] %v5073
        %5138 = vst [vmem:[%s408 + $0x6c] sm:$0xf] %v5074
        %5139 = vst [vmem:[%s408 + $0x70] sm:$0xf] %v5075
        %5140 = vst [vmem:[%s408 + $0x74] sm:$0xf] %v5076
        %5141 = vst [vmem:[%s408 + $0x78] sm:$0xf] %v5077
        %5142 = vst [vmem:[%s408 + $0x7c] sm:$0xf] %v5078
        %s5143 = sand.u32 %s230, 1
        %s5144 = scalar_lea.sflag [#allocation5], %s5143
        %s5145 = sand.u32 %s230, 1
        %s5146 = smul.addr %s5145, 128
        %s5147 = scalar_lea.vmem [#allocation12], %s5146
        // Predicated region
        $region81: #{tpu_custom_call.1} parent=55 // pred_check
          %p5148 = pneg %p240
        $region82: #{tpu_custom_call.1} parent=55 // pred_check_branch
          %5150 = sbr.rel (%p5148) target = $region84
        $region83: #{tpu_custom_call.1} parent=55 // pred_region
          %s5152 = ssub.s32 2048, 2048
          %5153 = vsyncadd %s5144, %s5152
          %s5154 = smul.addr %s28, 32
          %s5155 = smul.addr %s5154, 64
          %s5156 = scalar_lea.hbm %s9, %s5155
          %s5157 = sshll.u32 %s5147, 4
          %s5158 = int_to_ptr.vmem [resolvable:$true] %s5157
          %5163 = dma.vmem_to_hbm [thread:$0]  %s5158, 2048, %s5156, %s5144, 64, 64, 4
        $region84: #{tpu_custom_call.1} parent=55 // pred_fallthru
          _
      $region56: #{tpu_custom_call.1} parent=5 // pred_fallthru
        _
      %p5164 = scmp.le.s32.totalorder 2, %s23
      // Predicated region
      $region85: #{tpu_custom_call.1} parent=5 // pred_check
        %p5165 = pneg %p5164
      $region86: #{tpu_custom_call.1} parent=5 // pred_check_branch
        %5167 = sbr.rel (%p5165) target = $region88
      $region87: #{tpu_custom_call.1} parent=5 // pred_region
        %s5168 = ssub.s32 %s23, 2
        // Predicated region
        $region89: #{tpu_custom_call.1} parent=87 // pred_check
          %p5169 = pneg %p246
        $region90: #{tpu_custom_call.1} parent=87 // pred_check_branch
          %5171 = sbr.rel (%p5169) target = $region92
        $region91: #{tpu_custom_call.1} parent=87 // pred_region
          %s5172 = sand.u32 %s231, 1
          %s5173 = scalar_lea.sflag [#allocation5], %s5172
          %s5174 = sand.u32 %s231, 1
          %s5175 = smul.addr %s5174, 128
          %s5176 = scalar_lea.vmem [#allocation12], %s5175
          %5177 = dma.done %s5173, 2048
        $region92: #{tpu_custom_call.1} parent=87 // pred_fallthru
          _
      $region88: #{tpu_custom_call.1} parent=5 // pred_fallthru
        _
    $region6: #{tpu_custom_call.1} parent=1 // loop_footer
      %s27 = sadd.s32 1, %s23
    $region7: #{tpu_custom_call.1} parent=1 // loop_footer_branch
      %22 = sbr.rel target = $region3
    $region8: #{tpu_custom_call.1} parent=1 // loop_exit
      _
    %5178 = vsyncpa [#allocation4], 1
    %s5179 = scalar_lea.sflag [#allocation4], 1
    %5180 = vsyncpa %s5179, 1
    %5181 = vsyncpa [#allocation7], 1
    %5182 = vsyncpa [#allocation10], 1
    %5183 = vsyncpa [#allocation5], 1
    %s5184 = scalar_lea.sflag [#allocation5], 1
    %5185 = vsyncpa %s5184, 1

</llo_original>
